<compile_context>
chip_gen: v7x
topology: tpu7x:2x2x1
jax: 0.10.0
libtpu: 0.0.40
codegen_flags: <defaults>
</compile_context>

<pallas_src>
import functools

import jax
import jax.numpy as jnp
from jax import lax
from jax.experimental import pallas as pl
from jax.experimental.pallas import tpu as pltpu


def _layernorm(x, gamma, beta, eps=1e-5):
    # x: (tq, k) f32; gamma, beta: (1, k) f32
    mean = jnp.mean(x, axis=-1, keepdims=True)
    var = jnp.mean((x - mean) ** 2, axis=-1, keepdims=True)
    inv = lax.rsqrt(var + eps)
    return (x - mean) * inv * gamma + beta


def transformer_block_kernel(
    x_ref,      # (1, t, k)   f32   full sequence (resident per batch element)
    wq_ref,     # (k, h*k)    bf16  (softmax scale k**-0.5 pre-folded)
    wkT_ref,    # (h*k, k)    bf16  (wk pre-transposed)
    wv_ref,     # (k, h*k)    bf16
    wu_ref,     # (h*k, k)    bf16
    bu_ref,     # (1, k)      f32
    g1_ref,     # (1, k)      f32   norm1 weight
    be1_ref,    # (1, k)      f32   norm1 bias
    w1_ref,     # (k, 4k)     bf16
    b1_ref,     # (1, 4k)     f32
    w2_ref,     # (4k, k)     bf16
    b2_ref,     # (1, k)      f32
    g2_ref,     # (1, k)      f32   norm2 weight
    be2_ref,    # (1, k)      f32   norm2 bias
    o_ref,      # (1, tq, k)  f32
    kT_scr,     # (h*k, t)    bf16 scratch: K^T, heads stacked along rows
    v_scr,      # (t, h*k)    bf16 scratch: V,   heads stacked along lanes
    *,
    heads: int,
):
    qi = pl.program_id(1)
    t = x_ref.shape[1]
    k = x_ref.shape[2]
    h = heads
    hk = h * k
    tq = o_ref.shape[1]
    n_chunks = t // tq

    # ---- K^T / V for the whole sequence: once per batch element --------------
    # Chunked over tq-row blocks so transient f32 results are bounded at
    # (tq, hk) / (hk, tq).  K is written directly in transposed (hk, t) layout
    # so no inner-loop K transposes are needed.
    @pl.when(qi == 0)
    def _():
        wkT = wkT_ref[...]
        wv = wv_ref[...]
        for r in range(n_chunks):
            r0 = r * tq
            rows_bf = x_ref[0, r0:r0 + tq, :].astype(jnp.bfloat16)     # (tq, k)
            v_scr[r0:r0 + tq, :] = jnp.dot(
                rows_bf, wv, preferred_element_type=jnp.float32
            ).astype(jnp.bfloat16)
            kT_scr[:, r0:r0 + tq] = lax.dot_general(
                wkT, rows_bf, (((1,), (1,)), ((), ())),
                preferred_element_type=jnp.float32,
            ).astype(jnp.bfloat16)                                     # (hk, tq)

    # ---- this query tile (sliced from the resident full-seq block) -----------
    q_start = pl.multiple_of(qi * tq, 8)
    x_tile = x_ref[0, pl.ds(q_start, tq), :]                           # (tq, k) f32

    # Hoisted small params (loaded once per grid step).
    bu = bu_ref[...]
    g1 = g1_ref[...]
    be1 = be1_ref[...]
    b1 = b1_ref[...]
    b2 = b2_ref[...]
    g2 = g2_ref[...]
    be2 = be2_ref[...]

    # Q projection for this tile; softmax scale already folded into wq.
    q_bf = jnp.dot(
        x_tile.astype(jnp.bfloat16), wq_ref[...],
        preferred_element_type=jnp.float32,
    ).astype(jnp.bfloat16)                                             # (tq, h*k)

    # Per-head attention.  Heads are contiguous row (K^T) / lane (Q, V, wu)
    # slices; each head's output is folded straight into the output projection
    # so there is no concat scratch and no re-read of it.
    attended = jnp.zeros((tq, k), jnp.float32)
    for hh in range(h):
        lo = hh * k
        qh = q_bf[:, lo:lo + k]                                        # (tq, k) bf16
        kTh = kT_scr[lo:lo + k, :]                                     # (k,  t) bf16
        vh = v_scr[:, lo:lo + k]                                       # (t,  k) bf16

        s = jnp.dot(qh, kTh, preferred_element_type=jnp.float32)       # (tq, t) f32
        s = s - jnp.max(s, axis=-1, keepdims=True)
        p = jnp.exp(s)
        p = p * pl.reciprocal(jnp.sum(p, axis=-1, keepdims=True), approx=True)

        head_out = jnp.dot(
            p.astype(jnp.bfloat16), vh, preferred_element_type=jnp.float32
        )                                                              # (tq, k) f32
        attended = attended + jnp.dot(
            head_out.astype(jnp.bfloat16), wu_ref[lo:lo + k, :],
            preferred_element_type=jnp.float32,
        )
    attended = attended + bu

    # residual + norm1 (f32)
    x1 = _layernorm(attended + x_tile, g1, be1)

    # MLP (bf16 MXU operands, f32 accumulation, f32 ReLU)
    hdn = jnp.dot(
        x1.astype(jnp.bfloat16), w1_ref[...], preferred_element_type=jnp.float32
    ) + b1
    hdn = jnp.maximum(hdn, 0.0)
    ff = jnp.dot(
        hdn.astype(jnp.bfloat16), w2_ref[...], preferred_element_type=jnp.float32
    ) + b2

    # residual + norm2 (dropout_forward is identity at drop_rate=0)
    o_ref[0] = _layernorm(ff + x1, g2, be2).astype(o_ref.dtype)


def _default_tq(t):
    if t <= 512:
        return t
    # Largest multiple-of-8 divisor of t that is <= 512 (avoids tq = t blow-ups).
    for cand in range(512, 7, -8):
        if t % cand == 0:
            return cand
    # TODO(synk): pad t to a tileable length for awkward sequence lengths.
    return t


def _vmem_limit_bytes():
    # ~75% of physical per-core VMEM: ~48 MiB on v7x (64 MiB), ~96 MiB on
    # v5e/v6e (128 MiB).  Headroom for Mosaic internal scratch / double buffers.
    try:
        cap = int(pltpu.get_tpu_info().vmem_capacity_bytes)
    except Exception:
        cap = 64 * 1024 * 1024
    return (cap * 3) // 4


def prepare_params(params, k):
    """One-time weight prep: fold softmax scale into wq, pre-transpose wk, cast to bf16."""
    scale = k ** (-0.5)
    return {
        "wq": (params["wq"] * scale).astype(jnp.bfloat16),   # (k, hk)
        "wkT": params["wk"].T.astype(jnp.bfloat16),           # (hk, k)
        "wv": params["wv"].astype(jnp.bfloat16),              # (k, hk)
        "wu": params["wu"].astype(jnp.bfloat16),              # (hk, k)
        "bu": params["bu"],
        "g1": params["g1"], "be1": params["be1"],
        "w1": params["w1"].astype(jnp.bfloat16),
        "b1": params["b1"],
        "w2": params["w2"].astype(jnp.bfloat16),
        "b2": params["b2"],
        "g2": params["g2"], "be2": params["be2"],
    }


def transformer_block(x, prep, heads, *, tq=None):
    b, t, k = x.shape
    hk = heads * k

    if tq is None:
        tq = _default_tq(t)
    assert t % tq == 0, "tq must divide t"
    assert tq == t or tq % 8 == 0, "tq must be a multiple of 8 (or equal t)"
    nq = t // tq

    def const(shape):
        # Constant-index operands: fetched once, single-buffered (halves weight VMEM).
        return pl.BlockSpec(shape, lambda i, qi: tuple(0 for _ in shape),
                            pipeline_mode=pl.Buffered(1))

    kernel = functools.partial(transformer_block_kernel, heads=heads)

    return pl.pallas_call(
        kernel,
        out_shape=jax.ShapeDtypeStruct((b, t, k), x.dtype),
        grid_spec=pltpu.PrefetchScalarGridSpec(
            num_scalar_prefetch=0,
            grid=(b, nq),
            in_specs=[
                pl.BlockSpec((1, t, k), lambda i, qi: (i, 0, 0)),  # x (full seq, resident)
                const((k, hk)),        # wq (scaled)
                const((hk, k)),        # wk^T
                const((k, hk)),        # wv
                const((hk, k)),        # wu
                const((1, k)),         # bu
                const((1, k)),         # norm1 gamma
                const((1, k)),         # norm1 beta
                const((k, 4 * k)),     # mlp w1
                const((1, 4 * k)),     # mlp b1
                const((4 * k, k)),     # mlp w2
                const((1, k)),         # mlp b2
                const((1, k)),         # norm2 gamma
                const((1, k)),         # norm2 beta
            ],
            out_specs=pl.BlockSpec((1, tq, k), lambda i, qi: (i, qi, 0)),
            scratch_shapes=[
                pltpu.VMEM((hk, t), jnp.bfloat16),   # K^T, resident per batch element
                pltpu.VMEM((t, hk), jnp.bfloat16),   # V,   resident per batch element
            ],
        ),
        compiler_params=pltpu.CompilerParams(
            dimension_semantics=("parallel", "arbitrary"),
            vmem_limit_bytes=_vmem_limit_bytes(),
        ),
    )(
        x,
        prep["wq"], prep["wkT"], prep["wv"], prep["wu"], prep["bu"],
        prep["g1"], prep["be1"],
        prep["w1"], prep["b1"], prep["w2"], prep["b2"],
        prep["g2"], prep["be2"],
    )


def init_params(key, k, heads):
    hk = heads * k
    keys = jax.random.split(key, 8)
    s = 0.05
    return {
        # pre-transposed Linear weights so matmul is x @ W
        "wq": jax.random.normal(keys[0], (k, hk), jnp.float32) * s,
        "wk": jax.random.normal(keys[1], (k, hk), jnp.float32) * s,
        "wv": jax.random.normal(keys[2], (k, hk), jnp.float32) * s,
        "wu": jax.random.normal(keys[3], (hk, k), jnp.float32) * s,
        "bu": jax.random.normal(keys[4], (1, k), jnp.float32) * s,
        "g1": jnp.ones((1, k), jnp.float32),
        "be1": jnp.zeros((1, k), jnp.float32),
        "w1": jax.random.normal(keys[5], (k, 4 * k), jnp.float32) * s,
        "b1": jax.random.normal(keys[6], (1, 4 * k), jnp.float32) * s,
        "w2": jax.random.normal(keys[7], (4 * k, k), jnp.float32) * s,
        "b2": jnp.zeros((1, k), jnp.float32),
        "g2": jnp.ones((1, k), jnp.float32),
        "be2": jnp.zeros((1, k), jnp.float32),
    }


def _reference(x, p, heads):
    """Pure-JAX f32 reference mirroring the PyTorch forward."""
    b, t, k = x.shape
    h = heads
    scale = k ** (-0.25)
    q = (x @ p["wq"]).reshape(b, t, h, k).transpose(0, 2, 1, 3) * scale
    kk = (x @ p["wk"]).reshape(b, t, h, k).transpose(0, 2, 1, 3) * scale
    v = (x @ p["wv"]).reshape(b, t, h, k).transpose(0, 2, 1, 3)
    dot = jnp.einsum("bhtk,bhsk->bhts", q, kk)
    dot = jax.nn.softmax(dot, axis=-1)
    out = jnp.einsum("bhts,bhsk->bhtk", dot, v)
    out = out.transpose(0, 2, 1, 3).reshape(b, t, h * k)
    attended = out @ p["wu"] + p["bu"]

    def ln(y, g, bb):
        m = jnp.mean(y, -1, keepdims=True)
        var = jnp.mean((y - m) ** 2, -1, keepdims=True)
        return (y - m) / jnp.sqrt(var + 1e-5) * g + bb

    x1 = ln(attended + x, p["g1"], p["be1"])
    ff = jnp.maximum(x1 @ p["w1"] + p["b1"], 0.0) @ p["w2"] + p["b2"]
    return ln(ff + x1, p["g2"], p["be2"])


if __name__ == "__main__":
    key = jax.random.PRNGKey(0)
    kx, kp, kx2 = jax.random.split(key, 3)

    # Small shapes consistent with the module: (batch, seq, features), 8 heads.
    b, t, k, heads = 2, 8, 32, 8
    x = jax.random.normal(kx, (b, t, k), jnp.float32)
    params = init_params(kp, k, heads)
    prep = prepare_params(params, k)

    out = jax.block_until_ready(transformer_block(x, prep, heads))
    ref = _reference(x, params, heads)
    assert out.shape == (b, t, k)
    err = float(jnp.max(jnp.abs(out - ref)))
    # bf16 MXU operands + approx reciprocal vs. pure-f32 reference.
    assert jnp.allclose(out, ref, atol=5e-2, rtol=5e-2), f"mismatch vs reference: {err}"

    # Second config exercises the query-tile grid axis (nq > 1), the chunked
    # K/V projection, and the dynamic in-kernel q-tile slice.
    t2 = 16
    x2 = jax.random.normal(kx2, (b, t2, k), jnp.float32)
    out2 = jax.block_until_ready(transformer_block(x2, prep, heads, tq=8))
    ref2 = _reference(x2, params, heads)
    err2 = float(jnp.max(jnp.abs(out2 - ref2)))
    assert jnp.allclose(out2, ref2, atol=5e-2, rtol=5e-2), f"tiled mismatch: {err2}"

    print("KERNEL_OK")
</pallas_src>

<mosaic_0001>
module attributes {stable_mosaic.version = 11 : i64} {
  func.func @transformer_block_kernel(%arg0: i32, %arg1: i32, %arg2: memref<1x8x32xf32, #tpu.memory_space<vmem>>, %arg3: memref<32x256xbf16, #tpu.memory_space<vmem>>, %arg4: memref<256x32xbf16, #tpu.memory_space<vmem>>, %arg5: memref<32x256xbf16, #tpu.memory_space<vmem>>, %arg6: memref<256x32xbf16, #tpu.memory_space<vmem>>, %arg7: memref<1x32xf32, #tpu.memory_space<vmem>>, %arg8: memref<1x32xf32, #tpu.memory_space<vmem>>, %arg9: memref<1x32xf32, #tpu.memory_space<vmem>>, %arg10: memref<32x128xbf16, #tpu.memory_space<vmem>>, %arg11: memref<1x128xf32, #tpu.memory_space<vmem>>, %arg12: memref<128x32xbf16, #tpu.memory_space<vmem>>, %arg13: memref<1x32xf32, #tpu.memory_space<vmem>>, %arg14: memref<1x32xf32, #tpu.memory_space<vmem>>, %arg15: memref<1x32xf32, #tpu.memory_space<vmem>>, %arg16: memref<1x8x32xf32, #tpu.memory_space<vmem>>, %arg17: memref<256x8xbf16, #tpu.memory_space<vmem>>, %arg18: memref<8x256xbf16, #tpu.memory_space<vmem>>) attributes {dimension_semantics = [#tpu.dimension_semantics<parallel>, #tpu.dimension_semantics<arbitrary>], iteration_bounds = array<i64: 2, 1>, scalar_prefetch = 0 : i64, scratch_operands = 2 : i64, tpu.core_type = #tpu.core_type<tc>, window_params = [{transform_indices = @transform_0, window_bounds = array<i64: 1, 8, 32>}, {pipeline_mode = #tpu.pipeline_mode<synchronous>, transform_indices = @transform_1, window_bounds = array<i64: 32, 256>}, {pipeline_mode = #tpu.pipeline_mode<synchronous>, transform_indices = @transform_2, window_bounds = array<i64: 256, 32>}, {pipeline_mode = #tpu.pipeline_mode<synchronous>, transform_indices = @transform_3, window_bounds = array<i64: 32, 256>}, {pipeline_mode = #tpu.pipeline_mode<synchronous>, transform_indices = @transform_4, window_bounds = array<i64: 256, 32>}, {pipeline_mode = #tpu.pipeline_mode<synchronous>, transform_indices = @transform_5, window_bounds = array<i64: 1, 32>}, {pipeline_mode = #tpu.pipeline_mode<synchronous>, transform_indices = @transform_6, window_bounds = array<i64: 1, 32>}, {pipeline_mode = #tpu.pipeline_mode<synchronous>, transform_indices = @transform_7, window_bounds = array<i64: 1, 32>}, {pipeline_mode = #tpu.pipeline_mode<synchronous>, transform_indices = @transform_8, window_bounds = array<i64: 32, 128>}, {pipeline_mode = #tpu.pipeline_mode<synchronous>, transform_indices = @transform_9, window_bounds = array<i64: 1, 128>}, {pipeline_mode = #tpu.pipeline_mode<synchronous>, transform_indices = @transform_10, window_bounds = array<i64: 128, 32>}, {pipeline_mode = #tpu.pipeline_mode<synchronous>, transform_indices = @transform_11, window_bounds = array<i64: 1, 32>}, {pipeline_mode = #tpu.pipeline_mode<synchronous>, transform_indices = @transform_12, window_bounds = array<i64: 1, 32>}, {pipeline_mode = #tpu.pipeline_mode<synchronous>, transform_indices = @transform_13, window_bounds = array<i64: 1, 32>}, {transform_indices = @transform_14, window_bounds = array<i64: 1, 8, 32>}]} {
    %c0_i32 = arith.constant 0 : i32
    %0 = arith.cmpi eq, %arg1, %c0_i32 : i32
    %1 = arith.extui %0 : i1 to i32
    %c0_i32_0 = arith.constant 0 : i32
    %2 = arith.cmpi ne, %1, %c0_i32_0 : i32
    scf.if %2 {
      %c0_120 = arith.constant 0 : index
      %c0_121 = arith.constant 0 : index
      %243 = vector.load %arg4[%c0_120, %c0_121] : memref<256x32xbf16, #tpu.memory_space<vmem>>, vector<256x32xbf16>
      %c0_122 = arith.constant 0 : index
      %c0_123 = arith.constant 0 : index
      %244 = vector.load %arg5[%c0_122, %c0_123] : memref<32x256xbf16, #tpu.memory_space<vmem>>, vector<32x256xbf16>
      %c0_124 = arith.constant 0 : index
      %c0_125 = arith.constant 0 : index
      %c0_126 = arith.constant 0 : index
      %245 = vector.load %arg2[%c0_124, %c0_125, %c0_126] : memref<1x8x32xf32, #tpu.memory_space<vmem>>, vector<1x8x32xf32>
      %246 = vector.shape_cast %245 : vector<1x8x32xf32> to vector<8x32xf32>
      %247 = arith.truncf %246 : vector<8x32xf32> to vector<8x32xbf16>
      %cst_127 = arith.constant dense<0.000000e+00> : vector<8x256xf32>
      %248 = tpu.matmul %247, %244, %cst_127 {dimension_numbers = #tpu.dot_dimension_numbers<[1], [0], [0], [1], [0, 0, 1, 1], [], []>} : vector<8x32xbf16>, vector<32x256xbf16>, vector<8x256xf32> -> vector<8x256xf32>
      %249 = arith.truncf %248 : vector<8x256xf32> to vector<8x256xbf16>
      %c0_128 = arith.constant 0 : index
      %c0_129 = arith.constant 0 : index
      %250 = vector.load %arg18[%c0_128, %c0_129] : memref<8x256xbf16, #tpu.memory_space<vmem>>, vector<8x256xbf16>
      tpu.vector_store %arg18[%c0_128, %c0_129], %249 {strides = array<i32>} : memref<8x256xbf16, #tpu.memory_space<vmem>>, vector<8x256xbf16>,
      %cst_130 = arith.constant dense<0.000000e+00> : vector<256x8xf32>
      %251 = tpu.matmul %243, %247, %cst_130 {dimension_numbers = #tpu.dot_dimension_numbers<[1], [1], [0], [0], [0, 0, 1, 0], [], []>} : vector<256x32xbf16>, vector<8x32xbf16>, vector<256x8xf32> -> vector<256x8xf32>
      %252 = arith.truncf %251 : vector<256x8xf32> to vector<256x8xbf16>
      %c0_131 = arith.constant 0 : index
      %c0_132 = arith.constant 0 : index
      %253 = vector.load %arg17[%c0_131, %c0_132] : memref<256x8xbf16, #tpu.memory_space<vmem>>, vector<256x8xbf16>
      tpu.vector_store %arg17[%c0_131, %c0_132], %252 {strides = array<i32>} : memref<256x8xbf16, #tpu.memory_space<vmem>>, vector<256x8xbf16>,
    } else {
    }
    %c8_i32 = arith.constant 8 : i32
    %3 = arith.muli %arg1, %c8_i32 : i32
    %4 = tpu.assume_multiple %3, 8 : i32
    %c0 = arith.constant 0 : index
    %5 = arith.index_cast %4 : i32 to index
    %c0_1 = arith.constant 0 : index
    %6 = vector.load %arg2[%c0, %5, %c0_1] : memref<1x8x32xf32, #tpu.memory_space<vmem>>, vector<1x8x32xf32>
    %7 = vector.shape_cast %6 : vector<1x8x32xf32> to vector<8x32xf32>
    %c0_2 = arith.constant 0 : index
    %c0_3 = arith.constant 0 : index
    %8 = vector.load %arg7[%c0_2, %c0_3] : memref<1x32xf32, #tpu.memory_space<vmem>>, vector<1x32xf32>
    %c0_4 = arith.constant 0 : index
    %c0_5 = arith.constant 0 : index
    %9 = vector.load %arg8[%c0_4, %c0_5] : memref<1x32xf32, #tpu.memory_space<vmem>>, vector<1x32xf32>
    %c0_6 = arith.constant 0 : index
    %c0_7 = arith.constant 0 : index
    %10 = vector.load %arg9[%c0_6, %c0_7] : memref<1x32xf32, #tpu.memory_space<vmem>>, vector<1x32xf32>
    %c0_8 = arith.constant 0 : index
    %c0_9 = arith.constant 0 : index
    %11 = vector.load %arg11[%c0_8, %c0_9] : memref<1x128xf32, #tpu.memory_space<vmem>>, vector<1x128xf32>
    %c0_10 = arith.constant 0 : index
    %c0_11 = arith.constant 0 : index
    %12 = vector.load %arg13[%c0_10, %c0_11] : memref<1x32xf32, #tpu.memory_space<vmem>>, vector<1x32xf32>
    %c0_12 = arith.constant 0 : index
    %c0_13 = arith.constant 0 : index
    %13 = vector.load %arg14[%c0_12, %c0_13] : memref<1x32xf32, #tpu.memory_space<vmem>>, vector<1x32xf32>
    %c0_14 = arith.constant 0 : index
    %c0_15 = arith.constant 0 : index
    %14 = vector.load %arg15[%c0_14, %c0_15] : memref<1x32xf32, #tpu.memory_space<vmem>>, vector<1x32xf32>
    %15 = arith.truncf %7 : vector<8x32xf32> to vector<8x32xbf16>
    %c0_16 = arith.constant 0 : index
    %c0_17 = arith.constant 0 : index
    %16 = vector.load %arg3[%c0_16, %c0_17] : memref<32x256xbf16, #tpu.memory_space<vmem>>, vector<32x256xbf16>
    %cst = arith.constant dense<0.000000e+00> : vector<8x256xf32>
    %17 = tpu.matmul %15, %16, %cst {dimension_numbers = #tpu.dot_dimension_numbers<[1], [0], [0], [1], [0, 0, 1, 1], [], []>} : vector<8x32xbf16>, vector<32x256xbf16>, vector<8x256xf32> -> vector<8x256xf32>
    %18 = arith.truncf %17 : vector<8x256xf32> to vector<8x256xbf16>
    %cst_18 = arith.constant 0.000000e+00 : f32
    %19 = vector.broadcast %cst_18 : f32 to vector<8x32xf32>
    %20 = vector.extract_strided_slice %18 {offsets = [0, 0], sizes = [8, 32], strides = [1, 1]} : vector<8x256xbf16> to vector<8x32xbf16>
    %c0_19 = arith.constant 0 : index
    %c0_20 = arith.constant 0 : index
    %21 = vector.load %arg17[%c0_19, %c0_20] : memref<256x8xbf16, #tpu.memory_space<vmem>>, vector<32x8xbf16>
    %c0_21 = arith.constant 0 : index
    %c0_22 = arith.constant 0 : index
    %22 = vector.load %arg18[%c0_21, %c0_22] : memref<8x256xbf16, #tpu.memory_space<vmem>>, vector<8x32xbf16>
    %cst_23 = arith.constant dense<0.000000e+00> : vector<8x8xf32>
    %23 = tpu.matmul %20, %21, %cst_23 {dimension_numbers = #tpu.dot_dimension_numbers<[1], [0], [0], [1], [0, 0, 1, 1], [], []>} : vector<8x32xbf16>, vector<32x8xbf16>, vector<8x8xf32> -> vector<8x8xf32>
    %cst_24 = arith.constant dense<0xFF800000> : vector<8xf32>
    %24 = vector.multi_reduction <maximumf>, %23, %cst_24 [1] : vector<8x8xf32> to vector<8xf32>
    %25 = vector.shape_cast %24 : vector<8xf32> to vector<8x1xf32>
    %26 = vector.broadcast %25 : vector<8x1xf32> to vector<8x8xf32>
    %27 = arith.subf %23, %26 : vector<8x8xf32>
    %28 = math.exp %27 : vector<8x8xf32>
    %cst_25 = arith.constant dense<0.000000e+00> : vector<8xf32>
    %29 = vector.multi_reduction <add>, %28, %cst_25 [1] : vector<8x8xf32> to vector<8xf32>
    %30 = vector.shape_cast %29 : vector<8xf32> to vector<8x1xf32>
    %31 = tpu.reciprocal %30 {approx = true} : vector<8x1xf32> -> vector<8x1xf32>
    %32 = vector.broadcast %31 : vector<8x1xf32> to vector<8x8xf32>
    %33 = arith.mulf %28, %32 : vector<8x8xf32>
    %34 = arith.truncf %33 : vector<8x8xf32> to vector<8x8xbf16>
    %cst_26 = arith.constant dense<0.000000e+00> : vector<8x32xf32>
    %35 = tpu.matmul %34, %22, %cst_26 {dimension_numbers = #tpu.dot_dimension_numbers<[1], [0], [0], [1], [0, 0, 1, 1], [], []>} : vector<8x8xbf16>, vector<8x32xbf16>, vector<8x32xf32> -> vector<8x32xf32>
    %36 = arith.truncf %35 : vector<8x32xf32> to vector<8x32xbf16>
    %c0_27 = arith.constant 0 : index
    %c0_28 = arith.constant 0 : index
    %37 = vector.load %arg6[%c0_27, %c0_28] : memref<256x32xbf16, #tpu.memory_space<vmem>>, vector<32x32xbf16>
    %cst_29 = arith.constant dense<0.000000e+00> : vector<8x32xf32>
    %38 = tpu.matmul %36, %37, %cst_29 {dimension_numbers = #tpu.dot_dimension_numbers<[1], [0], [0], [1], [0, 0, 1, 1], [], []>} : vector<8x32xbf16>, vector<32x32xbf16>, vector<8x32xf32> -> vector<8x32xf32>
    %39 = arith.addf %19, %38 : vector<8x32xf32>
    %40 = vector.extract_strided_slice %18 {offsets = [0, 32], sizes = [8, 32], strides = [1, 1]} : vector<8x256xbf16> to vector<8x32xbf16>
    %c32 = arith.constant 32 : index
    %c0_30 = arith.constant 0 : index
    %41 = vector.load %arg17[%c32, %c0_30] : memref<256x8xbf16, #tpu.memory_space<vmem>>, vector<32x8xbf16>
    %c0_31 = arith.constant 0 : index
    %c32_32 = arith.constant 32 : index
    %42 = vector.load %arg18[%c0_31, %c32_32] : memref<8x256xbf16, #tpu.memory_space<vmem>>, vector<8x32xbf16>
    %cst_33 = arith.constant dense<0.000000e+00> : vector<8x8xf32>
    %43 = tpu.matmul %40, %41, %cst_33 {dimension_numbers = #tpu.dot_dimension_numbers<[1], [0], [0], [1], [0, 0, 1, 1], [], []>} : vector<8x32xbf16>, vector<32x8xbf16>, vector<8x8xf32> -> vector<8x8xf32>
    %cst_34 = arith.constant dense<0xFF800000> : vector<8xf32>
    %44 = vector.multi_reduction <maximumf>, %43, %cst_34 [1] : vector<8x8xf32> to vector<8xf32>
    %45 = vector.shape_cast %44 : vector<8xf32> to vector<8x1xf32>
    %46 = vector.broadcast %45 : vector<8x1xf32> to vector<8x8xf32>
    %47 = arith.subf %43, %46 : vector<8x8xf32>
    %48 = math.exp %47 : vector<8x8xf32>
    %cst_35 = arith.constant dense<0.000000e+00> : vector<8xf32>
    %49 = vector.multi_reduction <add>, %48, %cst_35 [1] : vector<8x8xf32> to vector<8xf32>
    %50 = vector.shape_cast %49 : vector<8xf32> to vector<8x1xf32>
    %51 = tpu.reciprocal %50 {approx = true} : vector<8x1xf32> -> vector<8x1xf32>
    %52 = vector.broadcast %51 : vector<8x1xf32> to vector<8x8xf32>
    %53 = arith.mulf %48, %52 : vector<8x8xf32>
    %54 = arith.truncf %53 : vector<8x8xf32> to vector<8x8xbf16>
    %cst_36 = arith.constant dense<0.000000e+00> : vector<8x32xf32>
    %55 = tpu.matmul %54, %42, %cst_36 {dimension_numbers = #tpu.dot_dimension_numbers<[1], [0], [0], [1], [0, 0, 1, 1], [], []>} : vector<8x8xbf16>, vector<8x32xbf16>, vector<8x32xf32> -> vector<8x32xf32>
    %56 = arith.truncf %55 : vector<8x32xf32> to vector<8x32xbf16>
    %c32_37 = arith.constant 32 : index
    %c0_38 = arith.constant 0 : index
    %57 = vector.load %arg6[%c32_37, %c0_38] : memref<256x32xbf16, #tpu.memory_space<vmem>>, vector<32x32xbf16>
    %cst_39 = arith.constant dense<0.000000e+00> : vector<8x32xf32>
    %58 = tpu.matmul %56, %57, %cst_39 {dimension_numbers = #tpu.dot_dimension_numbers<[1], [0], [0], [1], [0, 0, 1, 1], [], []>} : vector<8x32xbf16>, vector<32x32xbf16>, vector<8x32xf32> -> vector<8x32xf32>
    %59 = arith.addf %39, %58 : vector<8x32xf32>
    %60 = vector.extract_strided_slice %18 {offsets = [0, 64], sizes = [8, 32], strides = [1, 1]} : vector<8x256xbf16> to vector<8x32xbf16>
    %c64 = arith.constant 64 : index
    %c0_40 = arith.constant 0 : index
    %61 = vector.load %arg17[%c64, %c0_40] : memref<256x8xbf16, #tpu.memory_space<vmem>>, vector<32x8xbf16>
    %c0_41 = arith.constant 0 : index
    %c64_42 = arith.constant 64 : index
    %62 = vector.load %arg18[%c0_41, %c64_42] : memref<8x256xbf16, #tpu.memory_space<vmem>>, vector<8x32xbf16>
    %cst_43 = arith.constant dense<0.000000e+00> : vector<8x8xf32>
    %63 = tpu.matmul %60, %61, %cst_43 {dimension_numbers = #tpu.dot_dimension_numbers<[1], [0], [0], [1], [0, 0, 1, 1], [], []>} : vector<8x32xbf16>, vector<32x8xbf16>, vector<8x8xf32> -> vector<8x8xf32>
    %cst_44 = arith.constant dense<0xFF800000> : vector<8xf32>
    %64 = vector.multi_reduction <maximumf>, %63, %cst_44 [1] : vector<8x8xf32> to vector<8xf32>
    %65 = vector.shape_cast %64 : vector<8xf32> to vector<8x1xf32>
    %66 = vector.broadcast %65 : vector<8x1xf32> to vector<8x8xf32>
    %67 = arith.subf %63, %66 : vector<8x8xf32>
    %68 = math.exp %67 : vector<8x8xf32>
    %cst_45 = arith.constant dense<0.000000e+00> : vector<8xf32>
    %69 = vector.multi_reduction <add>, %68, %cst_45 [1] : vector<8x8xf32> to vector<8xf32>
    %70 = vector.shape_cast %69 : vector<8xf32> to vector<8x1xf32>
    %71 = tpu.reciprocal %70 {approx = true} : vector<8x1xf32> -> vector<8x1xf32>
    %72 = vector.broadcast %71 : vector<8x1xf32> to vector<8x8xf32>
    %73 = arith.mulf %68, %72 : vector<8x8xf32>
    %74 = arith.truncf %73 : vector<8x8xf32> to vector<8x8xbf16>
    %cst_46 = arith.constant dense<0.000000e+00> : vector<8x32xf32>
    %75 = tpu.matmul %74, %62, %cst_46 {dimension_numbers = #tpu.dot_dimension_numbers<[1], [0], [0], [1], [0, 0, 1, 1], [], []>} : vector<8x8xbf16>, vector<8x32xbf16>, vector<8x32xf32> -> vector<8x32xf32>
    %76 = arith.truncf %75 : vector<8x32xf32> to vector<8x32xbf16>
    %c64_47 = arith.constant 64 : index
    %c0_48 = arith.constant 0 : index
    %77 = vector.load %arg6[%c64_47, %c0_48] : memref<256x32xbf16, #tpu.memory_space<vmem>>, vector<32x32xbf16>
    %cst_49 = arith.constant dense<0.000000e+00> : vector<8x32xf32>
    %78 = tpu.matmul %76, %77, %cst_49 {dimension_numbers = #tpu.dot_dimension_numbers<[1], [0], [0], [1], [0, 0, 1, 1], [], []>} : vector<8x32xbf16>, vector<32x32xbf16>, vector<8x32xf32> -> vector<8x32xf32>
    %79 = arith.addf %59, %78 : vector<8x32xf32>
    %80 = vector.extract_strided_slice %18 {offsets = [0, 96], sizes = [8, 32], strides = [1, 1]} : vector<8x256xbf16> to vector<8x32xbf16>
    %c96 = arith.constant 96 : index
    %c0_50 = arith.constant 0 : index
    %81 = vector.load %arg17[%c96, %c0_50] : memref<256x8xbf16, #tpu.memory_space<vmem>>, vector<32x8xbf16>
    %c0_51 = arith.constant 0 : index
    %c96_52 = arith.constant 96 : index
    %82 = vector.load %arg18[%c0_51, %c96_52] : memref<8x256xbf16, #tpu.memory_space<vmem>>, vector<8x32xbf16>
    %cst_53 = arith.constant dense<0.000000e+00> : vector<8x8xf32>
    %83 = tpu.matmul %80, %81, %cst_53 {dimension_numbers = #tpu.dot_dimension_numbers<[1], [0], [0], [1], [0, 0, 1, 1], [], []>} : vector<8x32xbf16>, vector<32x8xbf16>, vector<8x8xf32> -> vector<8x8xf32>
    %cst_54 = arith.constant dense<0xFF800000> : vector<8xf32>
    %84 = vector.multi_reduction <maximumf>, %83, %cst_54 [1] : vector<8x8xf32> to vector<8xf32>
    %85 = vector.shape_cast %84 : vector<8xf32> to vector<8x1xf32>
    %86 = vector.broadcast %85 : vector<8x1xf32> to vector<8x8xf32>
    %87 = arith.subf %83, %86 : vector<8x8xf32>
    %88 = math.exp %87 : vector<8x8xf32>
    %cst_55 = arith.constant dense<0.000000e+00> : vector<8xf32>
    %89 = vector.multi_reduction <add>, %88, %cst_55 [1] : vector<8x8xf32> to vector<8xf32>
    %90 = vector.shape_cast %89 : vector<8xf32> to vector<8x1xf32>
    %91 = tpu.reciprocal %90 {approx = true} : vector<8x1xf32> -> vector<8x1xf32>
    %92 = vector.broadcast %91 : vector<8x1xf32> to vector<8x8xf32>
    %93 = arith.mulf %88, %92 : vector<8x8xf32>
    %94 = arith.truncf %93 : vector<8x8xf32> to vector<8x8xbf16>
    %cst_56 = arith.constant dense<0.000000e+00> : vector<8x32xf32>
    %95 = tpu.matmul %94, %82, %cst_56 {dimension_numbers = #tpu.dot_dimension_numbers<[1], [0], [0], [1], [0, 0, 1, 1], [], []>} : vector<8x8xbf16>, vector<8x32xbf16>, vector<8x32xf32> -> vector<8x32xf32>
    %96 = arith.truncf %95 : vector<8x32xf32> to vector<8x32xbf16>
    %c96_57 = arith.constant 96 : index
    %c0_58 = arith.constant 0 : index
    %97 = vector.load %arg6[%c96_57, %c0_58] : memref<256x32xbf16, #tpu.memory_space<vmem>>, vector<32x32xbf16>
    %cst_59 = arith.constant dense<0.000000e+00> : vector<8x32xf32>
    %98 = tpu.matmul %96, %97, %cst_59 {dimension_numbers = #tpu.dot_dimension_numbers<[1], [0], [0], [1], [0, 0, 1, 1], [], []>} : vector<8x32xbf16>, vector<32x32xbf16>, vector<8x32xf32> -> vector<8x32xf32>
    %99 = arith.addf %79, %98 : vector<8x32xf32>
    %100 = vector.extract_strided_slice %18 {offsets = [0, 128], sizes = [8, 32], strides = [1, 1]} : vector<8x256xbf16> to vector<8x32xbf16>
    %c128 = arith.constant 128 : index
    %c0_60 = arith.constant 0 : index
    %101 = vector.load %arg17[%c128, %c0_60] : memref<256x8xbf16, #tpu.memory_space<vmem>>, vector<32x8xbf16>
    %c0_61 = arith.constant 0 : index
    %c128_62 = arith.constant 128 : index
    %102 = vector.load %arg18[%c0_61, %c128_62] : memref<8x256xbf16, #tpu.memory_space<vmem>>, vector<8x32xbf16>
    %cst_63 = arith.constant dense<0.000000e+00> : vector<8x8xf32>
    %103 = tpu.matmul %100, %101, %cst_63 {dimension_numbers = #tpu.dot_dimension_numbers<[1], [0], [0], [1], [0, 0, 1, 1], [], []>} : vector<8x32xbf16>, vector<32x8xbf16>, vector<8x8xf32> -> vector<8x8xf32>
    %cst_64 = arith.constant dense<0xFF800000> : vector<8xf32>
    %104 = vector.multi_reduction <maximumf>, %103, %cst_64 [1] : vector<8x8xf32> to vector<8xf32>
    %105 = vector.shape_cast %104 : vector<8xf32> to vector<8x1xf32>
    %106 = vector.broadcast %105 : vector<8x1xf32> to vector<8x8xf32>
    %107 = arith.subf %103, %106 : vector<8x8xf32>
    %108 = math.exp %107 : vector<8x8xf32>
    %cst_65 = arith.constant dense<0.000000e+00> : vector<8xf32>
    %109 = vector.multi_reduction <add>, %108, %cst_65 [1] : vector<8x8xf32> to vector<8xf32>
    %110 = vector.shape_cast %109 : vector<8xf32> to vector<8x1xf32>
    %111 = tpu.reciprocal %110 {approx = true} : vector<8x1xf32> -> vector<8x1xf32>
    %112 = vector.broadcast %111 : vector<8x1xf32> to vector<8x8xf32>
    %113 = arith.mulf %108, %112 : vector<8x8xf32>
    %114 = arith.truncf %113 : vector<8x8xf32> to vector<8x8xbf16>
    %cst_66 = arith.constant dense<0.000000e+00> : vector<8x32xf32>
    %115 = tpu.matmul %114, %102, %cst_66 {dimension_numbers = #tpu.dot_dimension_numbers<[1], [0], [0], [1], [0, 0, 1, 1], [], []>} : vector<8x8xbf16>, vector<8x32xbf16>, vector<8x32xf32> -> vector<8x32xf32>
    %116 = arith.truncf %115 : vector<8x32xf32> to vector<8x32xbf16>
    %c128_67 = arith.constant 128 : index
    %c0_68 = arith.constant 0 : index
    %117 = vector.load %arg6[%c128_67, %c0_68] : memref<256x32xbf16, #tpu.memory_space<vmem>>, vector<32x32xbf16>
    %cst_69 = arith.constant dense<0.000000e+00> : vector<8x32xf32>
    %118 = tpu.matmul %116, %117, %cst_69 {dimension_numbers = #tpu.dot_dimension_numbers<[1], [0], [0], [1], [0, 0, 1, 1], [], []>} : vector<8x32xbf16>, vector<32x32xbf16>, vector<8x32xf32> -> vector<8x32xf32>
    %119 = arith.addf %99, %118 : vector<8x32xf32>
    %120 = vector.extract_strided_slice %18 {offsets = [0, 160], sizes = [8, 32], strides = [1, 1]} : vector<8x256xbf16> to vector<8x32xbf16>
    %c160 = arith.constant 160 : index
    %c0_70 = arith.constant 0 : index
    %121 = vector.load %arg17[%c160, %c0_70] : memref<256x8xbf16, #tpu.memory_space<vmem>>, vector<32x8xbf16>
    %c0_71 = arith.constant 0 : index
    %c160_72 = arith.constant 160 : index
    %122 = vector.load %arg18[%c0_71, %c160_72] : memref<8x256xbf16, #tpu.memory_space<vmem>>, vector<8x32xbf16>
    %cst_73 = arith.constant dense<0.000000e+00> : vector<8x8xf32>
    %123 = tpu.matmul %120, %121, %cst_73 {dimension_numbers = #tpu.dot_dimension_numbers<[1], [0], [0], [1], [0, 0, 1, 1], [], []>} : vector<8x32xbf16>, vector<32x8xbf16>, vector<8x8xf32> -> vector<8x8xf32>
    %cst_74 = arith.constant dense<0xFF800000> : vector<8xf32>
    %124 = vector.multi_reduction <maximumf>, %123, %cst_74 [1] : vector<8x8xf32> to vector<8xf32>
    %125 = vector.shape_cast %124 : vector<8xf32> to vector<8x1xf32>
    %126 = vector.broadcast %125 : vector<8x1xf32> to vector<8x8xf32>
    %127 = arith.subf %123, %126 : vector<8x8xf32>
    %128 = math.exp %127 : vector<8x8xf32>
    %cst_75 = arith.constant dense<0.000000e+00> : vector<8xf32>
    %129 = vector.multi_reduction <add>, %128, %cst_75 [1] : vector<8x8xf32> to vector<8xf32>
    %130 = vector.shape_cast %129 : vector<8xf32> to vector<8x1xf32>
    %131 = tpu.reciprocal %130 {approx = true} : vector<8x1xf32> -> vector<8x1xf32>
    %132 = vector.broadcast %131 : vector<8x1xf32> to vector<8x8xf32>
    %133 = arith.mulf %128, %132 : vector<8x8xf32>
    %134 = arith.truncf %133 : vector<8x8xf32> to vector<8x8xbf16>
    %cst_76 = arith.constant dense<0.000000e+00> : vector<8x32xf32>
    %135 = tpu.matmul %134, %122, %cst_76 {dimension_numbers = #tpu.dot_dimension_numbers<[1], [0], [0], [1], [0, 0, 1, 1], [], []>} : vector<8x8xbf16>, vector<8x32xbf16>, vector<8x32xf32> -> vector<8x32xf32>
    %136 = arith.truncf %135 : vector<8x32xf32> to vector<8x32xbf16>
    %c160_77 = arith.constant 160 : index
    %c0_78 = arith.constant 0 : index
    %137 = vector.load %arg6[%c160_77, %c0_78] : memref<256x32xbf16, #tpu.memory_space<vmem>>, vector<32x32xbf16>
    %cst_79 = arith.constant dense<0.000000e+00> : vector<8x32xf32>
    %138 = tpu.matmul %136, %137, %cst_79 {dimension_numbers = #tpu.dot_dimension_numbers<[1], [0], [0], [1], [0, 0, 1, 1], [], []>} : vector<8x32xbf16>, vector<32x32xbf16>, vector<8x32xf32> -> vector<8x32xf32>
    %139 = arith.addf %119, %138 : vector<8x32xf32>
    %140 = vector.extract_strided_slice %18 {offsets = [0, 192], sizes = [8, 32], strides = [1, 1]} : vector<8x256xbf16> to vector<8x32xbf16>
    %c192 = arith.constant 192 : index
    %c0_80 = arith.constant 0 : index
    %141 = vector.load %arg17[%c192, %c0_80] : memref<256x8xbf16, #tpu.memory_space<vmem>>, vector<32x8xbf16>
    %c0_81 = arith.constant 0 : index
    %c192_82 = arith.constant 192 : index
    %142 = vector.load %arg18[%c0_81, %c192_82] : memref<8x256xbf16, #tpu.memory_space<vmem>>, vector<8x32xbf16>
    %cst_83 = arith.constant dense<0.000000e+00> : vector<8x8xf32>
    %143 = tpu.matmul %140, %141, %cst_83 {dimension_numbers = #tpu.dot_dimension_numbers<[1], [0], [0], [1], [0, 0, 1, 1], [], []>} : vector<8x32xbf16>, vector<32x8xbf16>, vector<8x8xf32> -> vector<8x8xf32>
    %cst_84 = arith.constant dense<0xFF800000> : vector<8xf32>
    %144 = vector.multi_reduction <maximumf>, %143, %cst_84 [1] : vector<8x8xf32> to vector<8xf32>
    %145 = vector.shape_cast %144 : vector<8xf32> to vector<8x1xf32>
    %146 = vector.broadcast %145 : vector<8x1xf32> to vector<8x8xf32>
    %147 = arith.subf %143, %146 : vector<8x8xf32>
    %148 = math.exp %147 : vector<8x8xf32>
    %cst_85 = arith.constant dense<0.000000e+00> : vector<8xf32>
    %149 = vector.multi_reduction <add>, %148, %cst_85 [1] : vector<8x8xf32> to vector<8xf32>
    %150 = vector.shape_cast %149 : vector<8xf32> to vector<8x1xf32>
    %151 = tpu.reciprocal %150 {approx = true} : vector<8x1xf32> -> vector<8x1xf32>
    %152 = vector.broadcast %151 : vector<8x1xf32> to vector<8x8xf32>
    %153 = arith.mulf %148, %152 : vector<8x8xf32>
    %154 = arith.truncf %153 : vector<8x8xf32> to vector<8x8xbf16>
    %cst_86 = arith.constant dense<0.000000e+00> : vector<8x32xf32>
    %155 = tpu.matmul %154, %142, %cst_86 {dimension_numbers = #tpu.dot_dimension_numbers<[1], [0], [0], [1], [0, 0, 1, 1], [], []>} : vector<8x8xbf16>, vector<8x32xbf16>, vector<8x32xf32> -> vector<8x32xf32>
    %156 = arith.truncf %155 : vector<8x32xf32> to vector<8x32xbf16>
    %c192_87 = arith.constant 192 : index
    %c0_88 = arith.constant 0 : index
    %157 = vector.load %arg6[%c192_87, %c0_88] : memref<256x32xbf16, #tpu.memory_space<vmem>>, vector<32x32xbf16>
    %cst_89 = arith.constant dense<0.000000e+00> : vector<8x32xf32>
    %158 = tpu.matmul %156, %157, %cst_89 {dimension_numbers = #tpu.dot_dimension_numbers<[1], [0], [0], [1], [0, 0, 1, 1], [], []>} : vector<8x32xbf16>, vector<32x32xbf16>, vector<8x32xf32> -> vector<8x32xf32>
    %159 = arith.addf %139, %158 : vector<8x32xf32>
    %160 = vector.extract_strided_slice %18 {offsets = [0, 224], sizes = [8, 32], strides = [1, 1]} : vector<8x256xbf16> to vector<8x32xbf16>
    %c224 = arith.constant 224 : index
    %c0_90 = arith.constant 0 : index
    %161 = vector.load %arg17[%c224, %c0_90] : memref<256x8xbf16, #tpu.memory_space<vmem>>, vector<32x8xbf16>
    %c0_91 = arith.constant 0 : index
    %c224_92 = arith.constant 224 : index
    %162 = vector.load %arg18[%c0_91, %c224_92] : memref<8x256xbf16, #tpu.memory_space<vmem>>, vector<8x32xbf16>
    %cst_93 = arith.constant dense<0.000000e+00> : vector<8x8xf32>
    %163 = tpu.matmul %160, %161, %cst_93 {dimension_numbers = #tpu.dot_dimension_numbers<[1], [0], [0], [1], [0, 0, 1, 1], [], []>} : vector<8x32xbf16>, vector<32x8xbf16>, vector<8x8xf32> -> vector<8x8xf32>
    %cst_94 = arith.constant dense<0xFF800000> : vector<8xf32>
    %164 = vector.multi_reduction <maximumf>, %163, %cst_94 [1] : vector<8x8xf32> to vector<8xf32>
    %165 = vector.shape_cast %164 : vector<8xf32> to vector<8x1xf32>
    %166 = vector.broadcast %165 : vector<8x1xf32> to vector<8x8xf32>
    %167 = arith.subf %163, %166 : vector<8x8xf32>
    %168 = math.exp %167 : vector<8x8xf32>
    %cst_95 = arith.constant dense<0.000000e+00> : vector<8xf32>
    %169 = vector.multi_reduction <add>, %168, %cst_95 [1] : vector<8x8xf32> to vector<8xf32>
    %170 = vector.shape_cast %169 : vector<8xf32> to vector<8x1xf32>
    %171 = tpu.reciprocal %170 {approx = true} : vector<8x1xf32> -> vector<8x1xf32>
    %172 = vector.broadcast %171 : vector<8x1xf32> to vector<8x8xf32>
    %173 = arith.mulf %168, %172 : vector<8x8xf32>
    %174 = arith.truncf %173 : vector<8x8xf32> to vector<8x8xbf16>
    %cst_96 = arith.constant dense<0.000000e+00> : vector<8x32xf32>
    %175 = tpu.matmul %174, %162, %cst_96 {dimension_numbers = #tpu.dot_dimension_numbers<[1], [0], [0], [1], [0, 0, 1, 1], [], []>} : vector<8x8xbf16>, vector<8x32xbf16>, vector<8x32xf32> -> vector<8x32xf32>
    %176 = arith.truncf %175 : vector<8x32xf32> to vector<8x32xbf16>
    %c224_97 = arith.constant 224 : index
    %c0_98 = arith.constant 0 : index
    %177 = vector.load %arg6[%c224_97, %c0_98] : memref<256x32xbf16, #tpu.memory_space<vmem>>, vector<32x32xbf16>
    %cst_99 = arith.constant dense<0.000000e+00> : vector<8x32xf32>
    %178 = tpu.matmul %176, %177, %cst_99 {dimension_numbers = #tpu.dot_dimension_numbers<[1], [0], [0], [1], [0, 0, 1, 1], [], []>} : vector<8x32xbf16>, vector<32x32xbf16>, vector<8x32xf32> -> vector<8x32xf32>
    %179 = arith.addf %159, %178 : vector<8x32xf32>
    %180 = vector.broadcast %8 : vector<1x32xf32> to vector<8x32xf32>
    %181 = arith.addf %179, %180 : vector<8x32xf32>
    %182 = arith.addf %181, %7 : vector<8x32xf32>
    %cst_100 = arith.constant dense<0.000000e+00> : vector<8xf32>
    %183 = vector.multi_reduction <add>, %182, %cst_100 [1] : vector<8x32xf32> to vector<8xf32>
    %184 = vector.shape_cast %183 : vector<8xf32> to vector<8x1xf32>
    %cst_101 = arith.constant 3.200000e+01 : f32
    %185 = vector.broadcast %cst_101 : f32 to vector<8x1xf32>
    %186 = arith.divf %184, %185 : vector<8x1xf32>
    %187 = vector.broadcast %186 : vector<8x1xf32> to vector<8x32xf32>
    %188 = arith.subf %182, %187 : vector<8x32xf32>
    %189 = arith.mulf %188, %188 : vector<8x32xf32>
    %cst_102 = arith.constant dense<0.000000e+00> : vector<8xf32>
    %190 = vector.multi_reduction <add>, %189, %cst_102 [1] : vector<8x32xf32> to vector<8xf32>
    %191 = vector.shape_cast %190 : vector<8xf32> to vector<8x1xf32>
    %cst_103 = arith.constant 3.200000e+01 : f32
    %192 = vector.broadcast %cst_103 : f32 to vector<8x1xf32>
    %193 = arith.divf %191, %192 : vector<8x1xf32>
    %cst_104 = arith.constant 9.99999974E-6 : f32
    %194 = vector.broadcast %cst_104 : f32 to vector<8x1xf32>
    %195 = arith.addf %193, %194 : vector<8x1xf32>
    %196 = math.rsqrt %195 : vector<8x1xf32>
    %197 = vector.broadcast %186 : vector<8x1xf32> to vector<8x32xf32>
    %198 = arith.subf %182, %197 : vector<8x32xf32>
    %199 = vector.broadcast %196 : vector<8x1xf32> to vector<8x32xf32>
    %200 = arith.mulf %198, %199 : vector<8x32xf32>
    %201 = vector.broadcast %9 : vector<1x32xf32> to vector<8x32xf32>
    %202 = arith.mulf %200, %201 : vector<8x32xf32>
    %203 = vector.broadcast %10 : vector<1x32xf32> to vector<8x32xf32>
    %204 = arith.addf %202, %203 : vector<8x32xf32>
    %205 = arith.truncf %204 : vector<8x32xf32> to vector<8x32xbf16>
    %c0_105 = arith.constant 0 : index
    %c0_106 = arith.constant 0 : index
    %206 = vector.load %arg10[%c0_105, %c0_106] : memref<32x128xbf16, #tpu.memory_space<vmem>>, vector<32x128xbf16>
    %cst_107 = arith.constant dense<0.000000e+00> : vector<8x128xf32>
    %207 = tpu.matmul %205, %206, %cst_107 {dimension_numbers = #tpu.dot_dimension_numbers<[1], [0], [0], [1], [0, 0, 1, 1], [], []>} : vector<8x32xbf16>, vector<32x128xbf16>, vector<8x128xf32> -> vector<8x128xf32>
    %208 = vector.broadcast %11 : vector<1x128xf32> to vector<8x128xf32>
    %209 = arith.addf %207, %208 : vector<8x128xf32>
    %cst_108 = arith.constant 0.000000e+00 : f32
    %210 = vector.broadcast %cst_108 : f32 to vector<8x128xf32>
    %211 = arith.maximumf %209, %210 : vector<8x128xf32>
    %212 = arith.truncf %211 : vector<8x128xf32> to vector<8x128xbf16>
    %c0_109 = arith.constant 0 : index
    %c0_110 = arith.constant 0 : index
    %213 = vector.load %arg12[%c0_109, %c0_110] : memref<128x32xbf16, #tpu.memory_space<vmem>>, vector<128x32xbf16>
    %cst_111 = arith.constant dense<0.000000e+00> : vector<8x32xf32>
    %214 = tpu.matmul %212, %213, %cst_111 {dimension_numbers = #tpu.dot_dimension_numbers<[1], [0], [0], [1], [0, 0, 1, 1], [], []>} : vector<8x128xbf16>, vector<128x32xbf16>, vector<8x32xf32> -> vector<8x32xf32>
    %215 = vector.broadcast %12 : vector<1x32xf32> to vector<8x32xf32>
    %216 = arith.addf %214, %215 : vector<8x32xf32>
    %217 = arith.addf %216, %204 : vector<8x32xf32>
    %cst_112 = arith.constant dense<0.000000e+00> : vector<8xf32>
    %218 = vector.multi_reduction <add>, %217, %cst_112 [1] : vector<8x32xf32> to vector<8xf32>
    %219 = vector.shape_cast %218 : vector<8xf32> to vector<8x1xf32>
    %cst_113 = arith.constant 3.200000e+01 : f32
    %220 = vector.broadcast %cst_113 : f32 to vector<8x1xf32>
    %221 = arith.divf %219, %220 : vector<8x1xf32>
    %222 = vector.broadcast %221 : vector<8x1xf32> to vector<8x32xf32>
    %223 = arith.subf %217, %222 : vector<8x32xf32>
    %224 = arith.mulf %223, %223 : vector<8x32xf32>
    %cst_114 = arith.constant dense<0.000000e+00> : vector<8xf32>
    %225 = vector.multi_reduction <add>, %224, %cst_114 [1] : vector<8x32xf32> to vector<8xf32>
    %226 = vector.shape_cast %225 : vector<8xf32> to vector<8x1xf32>
    %cst_115 = arith.constant 3.200000e+01 : f32
    %227 = vector.broadcast %cst_115 : f32 to vector<8x1xf32>
    %228 = arith.divf %226, %227 : vector<8x1xf32>
    %cst_116 = arith.constant 9.99999974E-6 : f32
    %229 = vector.broadcast %cst_116 : f32 to vector<8x1xf32>
    %230 = arith.addf %228, %229 : vector<8x1xf32>
    %231 = math.rsqrt %230 : vector<8x1xf32>
    %232 = vector.broadcast %221 : vector<8x1xf32> to vector<8x32xf32>
    %233 = arith.subf %217, %232 : vector<8x32xf32>
    %234 = vector.broadcast %231 : vector<8x1xf32> to vector<8x32xf32>
    %235 = arith.mulf %233, %234 : vector<8x32xf32>
    %236 = vector.broadcast %13 : vector<1x32xf32> to vector<8x32xf32>
    %237 = arith.mulf %235, %236 : vector<8x32xf32>
    %238 = vector.broadcast %14 : vector<1x32xf32> to vector<8x32xf32>
    %239 = arith.addf %237, %238 : vector<8x32xf32>
    %c0_117 = arith.constant 0 : index
    %c0_118 = arith.constant 0 : index
    %c0_119 = arith.constant 0 : index
    %240 = vector.load %arg16[%c0_117, %c0_118, %c0_119] : memref<1x8x32xf32, #tpu.memory_space<vmem>>, vector<1x8x32xf32>
    %241 = vector.shape_cast %240 : vector<1x8x32xf32> to vector<8x32xf32>
    %242 = vector.shape_cast %239 : vector<8x32xf32> to vector<1x8x32xf32>
    tpu.vector_store %arg16[%c0_117, %c0_118, %c0_119], %242 {strides = array<i32>} : memref<1x8x32xf32, #tpu.memory_space<vmem>>, vector<1x8x32xf32>,
    return
  }
  func.func @transform_0(%arg0: i32, %arg1: i32) -> (i32, i32, i32) {
    %c0_i32 = arith.constant 0 : i32
    %c0_i32_0 = arith.constant 0 : i32
    %c0_i32_1 = arith.constant 0 : i32
    return %arg0, %c0_i32, %c0_i32_0 : i32, i32, i32
  }
  func.func @transform_1(%arg0: i32, %arg1: i32) -> (i32, i32) {
    %c0_i32 = arith.constant 0 : i32
    %c0_i32_0 = arith.constant 0 : i32
    %c0_i32_1 = arith.constant 0 : i32
    return %c0_i32, %c0_i32_0 : i32, i32
  }
  func.func @transform_2(%arg0: i32, %arg1: i32) -> (i32, i32) {
    %c0_i32 = arith.constant 0 : i32
    %c0_i32_0 = arith.constant 0 : i32
    %c0_i32_1 = arith.constant 0 : i32
    return %c0_i32, %c0_i32_0 : i32, i32
  }
  func.func @transform_3(%arg0: i32, %arg1: i32) -> (i32, i32) {
    %c0_i32 = arith.constant 0 : i32
    %c0_i32_0 = arith.constant 0 : i32
    %c0_i32_1 = arith.constant 0 : i32
    return %c0_i32, %c0_i32_0 : i32, i32
  }
  func.func @transform_4(%arg0: i32, %arg1: i32) -> (i32, i32) {
    %c0_i32 = arith.constant 0 : i32
    %c0_i32_0 = arith.constant 0 : i32
    %c0_i32_1 = arith.constant 0 : i32
    return %c0_i32, %c0_i32_0 : i32, i32
  }
  func.func @transform_5(%arg0: i32, %arg1: i32) -> (i32, i32) {
    %c0_i32 = arith.constant 0 : i32
    %c0_i32_0 = arith.constant 0 : i32
    %c0_i32_1 = arith.constant 0 : i32
    return %c0_i32, %c0_i32_0 : i32, i32
  }
  func.func @transform_6(%arg0: i32, %arg1: i32) -> (i32, i32) {
    %c0_i32 = arith.constant 0 : i32
    %c0_i32_0 = arith.constant 0 : i32
    %c0_i32_1 = arith.constant 0 : i32
    return %c0_i32, %c0_i32_0 : i32, i32
  }
  func.func @transform_7(%arg0: i32, %arg1: i32) -> (i32, i32) {
    %c0_i32 = arith.constant 0 : i32
    %c0_i32_0 = arith.constant 0 : i32
    %c0_i32_1 = arith.constant 0 : i32
    return %c0_i32, %c0_i32_0 : i32, i32
  }
  func.func @transform_8(%arg0: i32, %arg1: i32) -> (i32, i32) {
    %c0_i32 = arith.constant 0 : i32
    %c0_i32_0 = arith.constant 0 : i32
    %c0_i32_1 = arith.constant 0 : i32
    return %c0_i32, %c0_i32_0 : i32, i32
  }
  func.func @transform_9(%arg0: i32, %arg1: i32) -> (i32, i32) {
    %c0_i32 = arith.constant 0 : i32
    %c0_i32_0 = arith.constant 0 : i32
    %c0_i32_1 = arith.constant 0 : i32
    return %c0_i32, %c0_i32_0 : i32, i32
  }
  func.func @transform_10(%arg0: i32, %arg1: i32) -> (i32, i32) {
    %c0_i32 = arith.constant 0 : i32
    %c0_i32_0 = arith.constant 0 : i32
    %c0_i32_1 = arith.constant 0 : i32
    return %c0_i32, %c0_i32_0 : i32, i32
  }
  func.func @transform_11(%arg0: i32, %arg1: i32) -> (i32, i32) {
    %c0_i32 = arith.constant 0 : i32
    %c0_i32_0 = arith.constant 0 : i32
    %c0_i32_1 = arith.constant 0 : i32
    return %c0_i32, %c0_i32_0 : i32, i32
  }
  func.func @transform_12(%arg0: i32, %arg1: i32) -> (i32, i32) {
    %c0_i32 = arith.constant 0 : i32
    %c0_i32_0 = arith.constant 0 : i32
    %c0_i32_1 = arith.constant 0 : i32
    return %c0_i32, %c0_i32_0 : i32, i32
  }
  func.func @transform_13(%arg0: i32, %arg1: i32) -> (i32, i32) {
    %c0_i32 = arith.constant 0 : i32
    %c0_i32_0 = arith.constant 0 : i32
    %c0_i32_1 = arith.constant 0 : i32
    return %c0_i32, %c0_i32_0 : i32, i32
  }
  func.func @transform_14(%arg0: i32, %arg1: i32) -> (i32, i32, i32) {
    %c0_i32 = arith.constant 0 : i32
    %c0_i32_0 = arith.constant 0 : i32
    return %arg0, %arg1, %c0_i32 : i32, i32, i32
  }
}

</mosaic_0001>

<llo_original>
// kernel: tpu_custom_call.1
$region0: #{tpu_custom_call.1}
  #allocation0 [shape = 'u32[]', space=smem, size = 0x4, offset = 0x4, fixed_abs, tag = 'smem constant byte address 0x4 - core index']
  #allocation1 [shape = 'u32[144,128]{1,0:T(1,128)}', space=vmem, size = 0x12000, scoped, tag = 'internal scratch']
  #allocation2 [shape = 'bf16[256,8]{1,0:T(16,128)(2,1)}', space=vmem, size = 0x10000, scoped, tag = 'scratch operand']
  #allocation3 [shape = 'bf16[8,256]{1,0:T(8,128)(2,1)}', space=vmem, size = 0x1000, scoped, tag = 'scratch operand']
  %s0 = inlined_call_operand.vmem [shape: f32[2,8,32], index: 0, kind: input, shape index: {}]
  %s1 = inlined_call_operand.vmem [shape: bf16[32,256], index: 1, kind: input, shape index: {}]
  %s2 = inlined_call_operand.vmem [shape: bf16[256,32], index: 2, kind: input, shape index: {}]
  %s3 = inlined_call_operand.vmem [shape: bf16[32,256], index: 3, kind: input, shape index: {}]
  %s4 = inlined_call_operand.vmem [shape: bf16[256,32], index: 4, kind: input, shape index: {}]
  %s5 = inlined_call_operand.vmem [shape: f32[1,32], index: 5, kind: input, shape index: {}]
  %s6 = inlined_call_operand.vmem [shape: f32[1,32], index: 6, kind: input, shape index: {}]
  %s7 = inlined_call_operand.vmem [shape: f32[1,32], index: 7, kind: input, shape index: {}]
  %s8 = inlined_call_operand.vmem [shape: bf16[32,128], index: 8, kind: input, shape index: {}]
  %s9 = inlined_call_operand.vmem [shape: f32[1,128], index: 9, kind: input, shape index: {}]
  %s10 = inlined_call_operand.vmem [shape: bf16[128,32], index: 10, kind: input, shape index: {}]
  %s11 = inlined_call_operand.vmem [shape: f32[1,32], index: 11, kind: input, shape index: {}]
  %s12 = inlined_call_operand.vmem [shape: f32[1,32], index: 12, kind: input, shape index: {}]
  %s13 = inlined_call_operand.vmem [shape: f32[1,32], index: 13, kind: input, shape index: {}]
  %s14 = inlined_call_operand.hbm [shape: f32[2,8,32], index: 14, kind: output, shape index: {}]
  %s15 = sld [smem:[#allocation0]]
  $region93: #{tpu_custom_call.1} parent=0
    _
  %s17 = ssub.s32 1, %s15
  %s18 = scalar_select 0, %s17, %s15
  $region1: #{tpu_custom_call.1} parent=0
    #allocation4 [shape = 'u8[8192]{0}', space=vmem, size = 0x2000, scoped, tag = 'output window, operand 0']
    #allocation5 [shape = 's32[2]{0}', space=sflag, size = 0x8, scoped, tag = 'scoped memory for tpu_custom_call.1']
    %19 = vsyncpa [#allocation5], 0
    %s20 = scalar_lea.sflag [#allocation5], 1
    %21 = vsyncpa %s20, 0
    loop: start=0, step=1, limit=4
    $region2: #{tpu_custom_call.1} parent=1 // loop_pre_header
      _
    $region3: #{tpu_custom_call.1} parent=1 // loop_header
      %s23 = sphi 0, %s27
      %p24 = scmp.ge.s32.totalorder %s23, 4
      %s30 = sphi 0, %s42
      %s31 = sphi 0, %s38
      %s32 = sphi 0, %s30
      %s33 = sphi 0, %s31
      %s34 = sphi 0, %s32
      %s35 = sphi 0, %s33
      %s45 = sphi 0, %s47
      %s48 = sphi 0, %s45
      %s49 = sphi 0, %s48
      %s65 = sphi 0, %s49
      %s69 = sphi 0, %s69
      %s71 = sphi 0, %s69
      %s72 = sphi 0, %s71
      %s86 = sphi 0, %s72
      %s90 = sphi 0, %s90
      %s92 = sphi 0, %s90
      %s93 = sphi 0, %s92
      %s107 = sphi 0, %s93
      %s111 = sphi 0, %s111
      %s113 = sphi 0, %s111
      %s114 = sphi 0, %s113
      %s128 = sphi 0, %s114
      %s132 = sphi 0, %s132
      %s134 = sphi 0, %s132
      %s135 = sphi 0, %s134
      %s149 = sphi 0, %s135
      %s153 = sphi 0, %s153
      %s155 = sphi 0, %s153
      %s156 = sphi 0, %s155
      %s170 = sphi 0, %s156
      %s174 = sphi 0, %s174
      %s176 = sphi 0, %s174
      %s177 = sphi 0, %s176
      %s191 = sphi 0, %s177
      %s195 = sphi 0, %s195
      %s197 = sphi 0, %s195
      %s198 = sphi 0, %s197
      %s212 = sphi 0, %s198
      %s216 = sphi 0, %s216
      %s218 = sphi 0, %s216
      %s219 = sphi 0, %s218
      %s233 = sphi 0, %s219
      %s237 = sphi 0, %s237
      %s239 = sphi 0, %s237
      %s240 = sphi 0, %s239
      %s254 = sphi 0, %s240
      %s258 = sphi 0, %s258
      %s260 = sphi 0, %s258
      %s261 = sphi 0, %s260
      %s275 = sphi 0, %s261
      %s279 = sphi 0, %s279
      %s281 = sphi 0, %s279
      %s282 = sphi 0, %s281
      %s296 = sphi 0, %s282
      %s300 = sphi 0, %s300
      %s302 = sphi 0, %s300
      %s303 = sphi 0, %s302
      %s317 = sphi 0, %s303
      %s321 = sphi 0, %s321
      %s323 = sphi 0, %s321
      %s324 = sphi 0, %s323
      %s338 = sphi 0, %s324
      %s346 = sphi 0, %s348
      %s349 = sphi 0, %s346
      %s350 = sphi 0, %s349
      %s366 = sphi 0, %s350
    $region4: #{tpu_custom_call.1} parent=1 // loop_header_branch
      %26 = sbr.rel (%p24) target = $region8
    $region5: #{tpu_custom_call.1} parent=1 // loop_body
      %s28 = ssub.s32 %s23, 1
      %s29 = ssub.s32 %s23, 2
      %s36 = sadd.s32 1, %s31
      %p37 = scmp.ge.s32.totalorder %s36, 1
      %s38 = scalar_select %p37, 0, %s36
      %s39 = sadd.s32 1, %s30
      %s40 = scalar_select %p37, %s39, %s30
      %p41 = scmp.ge.s32.totalorder %s40, 2
      %s42 = scalar_select %p41, 0, %s40
      %s43 = ssub.s32 %s30, %s42
      %p44 = scmp.eq.s32.totalorder %s43, 0
      %s46 = sadd.s32 %s45, 1
      %s47 = scalar_select %p44, %s45, %s46
      %p50 = pneg %p44
      %p51 = scmp.eq.s32.totalorder %s23, 1
      %p52 = por %p50, %p51
      %p53 = scmp.ne.s32.totalorder %s45, %s48
      %p54 = scmp.eq.s32.totalorder %s23, 0
      %p55 = por %p53, %p54
      %p56 = scmp.ne.s32.totalorder %s45, %s48
      %p57 = scmp.eq.s32.totalorder %s28, 1
      %p58 = por %p56, %p57
      %p59 = scmp.ne.s32.totalorder %s48, %s49
      %p60 = scmp.eq.s32.totalorder %s28, 0
      %p61 = por %p59, %p60
      %p62 = scmp.ne.s32.totalorder %s48, %s49
      %p63 = scmp.eq.s32.totalorder %s29, 1
      %p64 = por %p62, %p63
      %p66 = scmp.ne.s32.totalorder %s49, %s65
      %p67 = scmp.eq.s32.totalorder %s29, 0
      %p68 = por %p66, %p67
      %s70 = sadd.s32 %s69, 1
      %p73 = scmp.eq.s32.totalorder %s23, 1
      %p74 = scmp.ne.s32.totalorder %s69, %s71
      %p75 = scmp.eq.s32.totalorder %s23, 0
      %p76 = por %p74, %p75
      %p77 = scmp.ne.s32.totalorder %s69, %s71
      %p78 = scmp.eq.s32.totalorder %s28, 1
      %p79 = por %p77, %p78
      %p80 = scmp.ne.s32.totalorder %s71, %s72
      %p81 = scmp.eq.s32.totalorder %s28, 0
      %p82 = por %p80, %p81
      %p83 = scmp.ne.s32.totalorder %s71, %s72
      %p84 = scmp.eq.s32.totalorder %s29, 1
      %p85 = por %p83, %p84
      %p87 = scmp.ne.s32.totalorder %s72, %s86
      %p88 = scmp.eq.s32.totalorder %s29, 0
      %p89 = por %p87, %p88
      %s91 = sadd.s32 %s90, 1
      %p94 = scmp.eq.s32.totalorder %s23, 1
      %p95 = scmp.ne.s32.totalorder %s90, %s92
      %p96 = scmp.eq.s32.totalorder %s23, 0
      %p97 = por %p95, %p96
      %p98 = scmp.ne.s32.totalorder %s90, %s92
      %p99 = scmp.eq.s32.totalorder %s28, 1
      %p100 = por %p98, %p99
      %p101 = scmp.ne.s32.totalorder %s92, %s93
      %p102 = scmp.eq.s32.totalorder %s28, 0
      %p103 = por %p101, %p102
      %p104 = scmp.ne.s32.totalorder %s92, %s93
      %p105 = scmp.eq.s32.totalorder %s29, 1
      %p106 = por %p104, %p105
      %p108 = scmp.ne.s32.totalorder %s93, %s107
      %p109 = scmp.eq.s32.totalorder %s29, 0
      %p110 = por %p108, %p109
      %s112 = sadd.s32 %s111, 1
      %p115 = scmp.eq.s32.totalorder %s23, 1
      %p116 = scmp.ne.s32.totalorder %s111, %s113
      %p117 = scmp.eq.s32.totalorder %s23, 0
      %p118 = por %p116, %p117
      %p119 = scmp.ne.s32.totalorder %s111, %s113
      %p120 = scmp.eq.s32.totalorder %s28, 1
      %p121 = por %p119, %p120
      %p122 = scmp.ne.s32.totalorder %s113, %s114
      %p123 = scmp.eq.s32.totalorder %s28, 0
      %p124 = por %p122, %p123
      %p125 = scmp.ne.s32.totalorder %s113, %s114
      %p126 = scmp.eq.s32.totalorder %s29, 1
      %p127 = por %p125, %p126
      %p129 = scmp.ne.s32.totalorder %s114, %s128
      %p130 = scmp.eq.s32.totalorder %s29, 0
      %p131 = por %p129, %p130
      %s133 = sadd.s32 %s132, 1
      %p136 = scmp.eq.s32.totalorder %s23, 1
      %p137 = scmp.ne.s32.totalorder %s132, %s134
      %p138 = scmp.eq.s32.totalorder %s23, 0
      %p139 = por %p137, %p138
      %p140 = scmp.ne.s32.totalorder %s132, %s134
      %p141 = scmp.eq.s32.totalorder %s28, 1
      %p142 = por %p140, %p141
      %p143 = scmp.ne.s32.totalorder %s134, %s135
      %p144 = scmp.eq.s32.totalorder %s28, 0
      %p145 = por %p143, %p144
      %p146 = scmp.ne.s32.totalorder %s134, %s135
      %p147 = scmp.eq.s32.totalorder %s29, 1
      %p148 = por %p146, %p147
      %p150 = scmp.ne.s32.totalorder %s135, %s149
      %p151 = scmp.eq.s32.totalorder %s29, 0
      %p152 = por %p150, %p151
      %s154 = sadd.s32 %s153, 1
      %p157 = scmp.eq.s32.totalorder %s23, 1
      %p158 = scmp.ne.s32.totalorder %s153, %s155
      %p159 = scmp.eq.s32.totalorder %s23, 0
      %p160 = por %p158, %p159
      %p161 = scmp.ne.s32.totalorder %s153, %s155
      %p162 = scmp.eq.s32.totalorder %s28, 1
      %p163 = por %p161, %p162
      %p164 = scmp.ne.s32.totalorder %s155, %s156
      %p165 = scmp.eq.s32.totalorder %s28, 0
      %p166 = por %p164, %p165
      %p167 = scmp.ne.s32.totalorder %s155, %s156
      %p168 = scmp.eq.s32.totalorder %s29, 1
      %p169 = por %p167, %p168
      %p171 = scmp.ne.s32.totalorder %s156, %s170
      %p172 = scmp.eq.s32.totalorder %s29, 0
      %p173 = por %p171, %p172
      %s175 = sadd.s32 %s174, 1
      %p178 = scmp.eq.s32.totalorder %s23, 1
      %p179 = scmp.ne.s32.totalorder %s174, %s176
      %p180 = scmp.eq.s32.totalorder %s23, 0
      %p181 = por %p179, %p180
      %p182 = scmp.ne.s32.totalorder %s174, %s176
      %p183 = scmp.eq.s32.totalorder %s28, 1
      %p184 = por %p182, %p183
      %p185 = scmp.ne.s32.totalorder %s176, %s177
      %p186 = scmp.eq.s32.totalorder %s28, 0
      %p187 = por %p185, %p186
      %p188 = scmp.ne.s32.totalorder %s176, %s177
      %p189 = scmp.eq.s32.totalorder %s29, 1
      %p190 = por %p188, %p189
      %p192 = scmp.ne.s32.totalorder %s177, %s191
      %p193 = scmp.eq.s32.totalorder %s29, 0
      %p194 = por %p192, %p193
      %s196 = sadd.s32 %s195, 1
      %p199 = scmp.eq.s32.totalorder %s23, 1
      %p200 = scmp.ne.s32.totalorder %s195, %s197
      %p201 = scmp.eq.s32.totalorder %s23, 0
      %p202 = por %p200, %p201
      %p203 = scmp.ne.s32.totalorder %s195, %s197
      %p204 = scmp.eq.s32.totalorder %s28, 1
      %p205 = por %p203, %p204
      %p206 = scmp.ne.s32.totalorder %s197, %s198
      %p207 = scmp.eq.s32.totalorder %s28, 0
      %p208 = por %p206, %p207
      %p209 = scmp.ne.s32.totalorder %s197, %s198
      %p210 = scmp.eq.s32.totalorder %s29, 1
      %p211 = por %p209, %p210
      %p213 = scmp.ne.s32.totalorder %s198, %s212
      %p214 = scmp.eq.s32.totalorder %s29, 0
      %p215 = por %p213, %p214
      %s217 = sadd.s32 %s216, 1
      %p220 = scmp.eq.s32.totalorder %s23, 1
      %p221 = scmp.ne.s32.totalorder %s216, %s218
      %p222 = scmp.eq.s32.totalorder %s23, 0
      %p223 = por %p221, %p222
      %p224 = scmp.ne.s32.totalorder %s216, %s218
      %p225 = scmp.eq.s32.totalorder %s28, 1
      %p226 = por %p224, %p225
      %p227 = scmp.ne.s32.totalorder %s218, %s219
      %p228 = scmp.eq.s32.totalorder %s28, 0
      %p229 = por %p227, %p228
      %p230 = scmp.ne.s32.totalorder %s218, %s219
      %p231 = scmp.eq.s32.totalorder %s29, 1
      %p232 = por %p230, %p231
      %p234 = scmp.ne.s32.totalorder %s219, %s233
      %p235 = scmp.eq.s32.totalorder %s29, 0
      %p236 = por %p234, %p235
      %s238 = sadd.s32 %s237, 1
      %p241 = scmp.eq.s32.totalorder %s23, 1
      %p242 = scmp.ne.s32.totalorder %s237, %s239
      %p243 = scmp.eq.s32.totalorder %s23, 0
      %p244 = por %p242, %p243
      %p245 = scmp.ne.s32.totalorder %s237, %s239
      %p246 = scmp.eq.s32.totalorder %s28, 1
      %p247 = por %p245, %p246
      %p248 = scmp.ne.s32.totalorder %s239, %s240
      %p249 = scmp.eq.s32.totalorder %s28, 0
      %p250 = por %p248, %p249
      %p251 = scmp.ne.s32.totalorder %s239, %s240
      %p252 = scmp.eq.s32.totalorder %s29, 1
      %p253 = por %p251, %p252
      %p255 = scmp.ne.s32.totalorder %s240, %s254
      %p256 = scmp.eq.s32.totalorder %s29, 0
      %p257 = por %p255, %p256
      %s259 = sadd.s32 %s258, 1
      %p262 = scmp.eq.s32.totalorder %s23, 1
      %p263 = scmp.ne.s32.totalorder %s258, %s260
      %p264 = scmp.eq.s32.totalorder %s23, 0
      %p265 = por %p263, %p264
      %p266 = scmp.ne.s32.totalorder %s258, %s260
      %p267 = scmp.eq.s32.totalorder %s28, 1
      %p268 = por %p266, %p267
      %p269 = scmp.ne.s32.totalorder %s260, %s261
      %p270 = scmp.eq.s32.totalorder %s28, 0
      %p271 = por %p269, %p270
      %p272 = scmp.ne.s32.totalorder %s260, %s261
      %p273 = scmp.eq.s32.totalorder %s29, 1
      %p274 = por %p272, %p273
      %p276 = scmp.ne.s32.totalorder %s261, %s275
      %p277 = scmp.eq.s32.totalorder %s29, 0
      %p278 = por %p276, %p277
      %s280 = sadd.s32 %s279, 1
      %p283 = scmp.eq.s32.totalorder %s23, 1
      %p284 = scmp.ne.s32.totalorder %s279, %s281
      %p285 = scmp.eq.s32.totalorder %s23, 0
      %p286 = por %p284, %p285
      %p287 = scmp.ne.s32.totalorder %s279, %s281
      %p288 = scmp.eq.s32.totalorder %s28, 1
      %p289 = por %p287, %p288
      %p290 = scmp.ne.s32.totalorder %s281, %s282
      %p291 = scmp.eq.s32.totalorder %s28, 0
      %p292 = por %p290, %p291
      %p293 = scmp.ne.s32.totalorder %s281, %s282
      %p294 = scmp.eq.s32.totalorder %s29, 1
      %p295 = por %p293, %p294
      %p297 = scmp.ne.s32.totalorder %s282, %s296
      %p298 = scmp.eq.s32.totalorder %s29, 0
      %p299 = por %p297, %p298
      %s301 = sadd.s32 %s300, 1
      %p304 = scmp.eq.s32.totalorder %s23, 1
      %p305 = scmp.ne.s32.totalorder %s300, %s302
      %p306 = scmp.eq.s32.totalorder %s23, 0
      %p307 = por %p305, %p306
      %p308 = scmp.ne.s32.totalorder %s300, %s302
      %p309 = scmp.eq.s32.totalorder %s28, 1
      %p310 = por %p308, %p309
      %p311 = scmp.ne.s32.totalorder %s302, %s303
      %p312 = scmp.eq.s32.totalorder %s28, 0
      %p313 = por %p311, %p312
      %p314 = scmp.ne.s32.totalorder %s302, %s303
      %p315 = scmp.eq.s32.totalorder %s29, 1
      %p316 = por %p314, %p315
      %p318 = scmp.ne.s32.totalorder %s303, %s317
      %p319 = scmp.eq.s32.totalorder %s29, 0
      %p320 = por %p318, %p319
      %s322 = sadd.s32 %s321, 1
      %p325 = scmp.eq.s32.totalorder %s23, 1
      %p326 = scmp.ne.s32.totalorder %s321, %s323
      %p327 = scmp.eq.s32.totalorder %s23, 0
      %p328 = por %p326, %p327
      %p329 = scmp.ne.s32.totalorder %s321, %s323
      %p330 = scmp.eq.s32.totalorder %s28, 1
      %p331 = por %p329, %p330
      %p332 = scmp.ne.s32.totalorder %s323, %s324
      %p333 = scmp.eq.s32.totalorder %s28, 0
      %p334 = por %p332, %p333
      %p335 = scmp.ne.s32.totalorder %s323, %s324
      %p336 = scmp.eq.s32.totalorder %s29, 1
      %p337 = por %p335, %p336
      %p339 = scmp.ne.s32.totalorder %s324, %s338
      %p340 = scmp.eq.s32.totalorder %s29, 0
      %p341 = por %p339, %p340
      %s342 = ssub.s32 %s30, %s42
      %s343 = ssub.s32 %s31, %s38
      %s344 = sor.u32 %s342, %s343
      %p345 = scmp.eq.s32.totalorder %s344, 0
      %s347 = sadd.s32 %s346, 1
      %s348 = scalar_select %p345, %s346, %s347
      %p351 = pneg %p345
      %p352 = scmp.eq.s32.totalorder %s23, 1
      %p353 = por %p351, %p352
      %p354 = scmp.ne.s32.totalorder %s346, %s349
      %p355 = scmp.eq.s32.totalorder %s23, 0
      %p356 = por %p354, %p355
      %p357 = scmp.ne.s32.totalorder %s346, %s349
      %p358 = scmp.eq.s32.totalorder %s28, 1
      %p359 = por %p357, %p358
      %p360 = scmp.ne.s32.totalorder %s349, %s350
      %p361 = scmp.eq.s32.totalorder %s28, 0
      %p362 = por %p360, %p361
      %p363 = scmp.ne.s32.totalorder %s349, %s350
      %p364 = scmp.eq.s32.totalorder %s29, 1
      %p365 = por %p363, %p364
      %p367 = scmp.ne.s32.totalorder %s350, %s366
      %p368 = scmp.eq.s32.totalorder %s29, 0
      %p369 = por %p367, %p368
      %p370 = scmp.le.s32.totalorder 1, %s23
      %p371 = scmp.lt.s32.totalorder %s23, 3
      %p372 = pnand %p370, %p371
      %p373 = pneg %p372
      // Predicated region
      $region9: #{tpu_custom_call.1} parent=5 // pred_check
        _
      $region10: #{tpu_custom_call.1} parent=5 // pred_check_branch
        %375 = sbr.rel (%p372) target = $region12
      $region11: #{tpu_custom_call.1} parent=5 // pred_region
        %s376 = ssub.s32 %s23, 1
        // Predicated region
        $region13: #{tpu_custom_call.1} parent=11 // pred_check
          %p377 = pneg %p82
        $region14: #{tpu_custom_call.1} parent=11 // pred_check_branch
          %379 = sbr.rel (%p377) target = $region16
        $region15: #{tpu_custom_call.1} parent=11 // pred_region
          _
        $region16: #{tpu_custom_call.1} parent=11 // pred_fallthru
          _
        // Predicated region
        $region17: #{tpu_custom_call.1} parent=11 // pred_check
          %p380 = pneg %p103
        $region18: #{tpu_custom_call.1} parent=11 // pred_check_branch
          %382 = sbr.rel (%p380) target = $region20
        $region19: #{tpu_custom_call.1} parent=11 // pred_region
          _
        $region20: #{tpu_custom_call.1} parent=11 // pred_fallthru
          _
        // Predicated region
        $region21: #{tpu_custom_call.1} parent=11 // pred_check
          %p383 = pneg %p124
        $region22: #{tpu_custom_call.1} parent=11 // pred_check_branch
          %385 = sbr.rel (%p383) target = $region24
        $region23: #{tpu_custom_call.1} parent=11 // pred_region
          _
        $region24: #{tpu_custom_call.1} parent=11 // pred_fallthru
          _
        // Predicated region
        $region25: #{tpu_custom_call.1} parent=11 // pred_check
          %p386 = pneg %p145
        $region26: #{tpu_custom_call.1} parent=11 // pred_check_branch
          %388 = sbr.rel (%p386) target = $region28
        $region27: #{tpu_custom_call.1} parent=11 // pred_region
          _
        $region28: #{tpu_custom_call.1} parent=11 // pred_fallthru
          _
        // Predicated region
        $region29: #{tpu_custom_call.1} parent=11 // pred_check
          %p389 = pneg %p166
        $region30: #{tpu_custom_call.1} parent=11 // pred_check_branch
          %391 = sbr.rel (%p389) target = $region32
        $region31: #{tpu_custom_call.1} parent=11 // pred_region
          _
        $region32: #{tpu_custom_call.1} parent=11 // pred_fallthru
          _
        // Predicated region
        $region33: #{tpu_custom_call.1} parent=11 // pred_check
          %p392 = pneg %p187
        $region34: #{tpu_custom_call.1} parent=11 // pred_check_branch
          %394 = sbr.rel (%p392) target = $region36
        $region35: #{tpu_custom_call.1} parent=11 // pred_region
          _
        $region36: #{tpu_custom_call.1} parent=11 // pred_fallthru
          _
        // Predicated region
        $region37: #{tpu_custom_call.1} parent=11 // pred_check
          %p395 = pneg %p208
        $region38: #{tpu_custom_call.1} parent=11 // pred_check_branch
          %397 = sbr.rel (%p395) target = $region40
        $region39: #{tpu_custom_call.1} parent=11 // pred_region
          _
        $region40: #{tpu_custom_call.1} parent=11 // pred_fallthru
          _
        // Predicated region
        $region41: #{tpu_custom_call.1} parent=11 // pred_check
          %p398 = pneg %p229
        $region42: #{tpu_custom_call.1} parent=11 // pred_check_branch
          %400 = sbr.rel (%p398) target = $region44
        $region43: #{tpu_custom_call.1} parent=11 // pred_region
          _
        $region44: #{tpu_custom_call.1} parent=11 // pred_fallthru
          _
        // Predicated region
        $region45: #{tpu_custom_call.1} parent=11 // pred_check
          %p401 = pneg %p250
        $region46: #{tpu_custom_call.1} parent=11 // pred_check_branch
          %403 = sbr.rel (%p401) target = $region48
        $region47: #{tpu_custom_call.1} parent=11 // pred_region
          _
        $region48: #{tpu_custom_call.1} parent=11 // pred_fallthru
          _
        // Predicated region
        $region49: #{tpu_custom_call.1} parent=11 // pred_check
          %p404 = pneg %p271
        $region50: #{tpu_custom_call.1} parent=11 // pred_check_branch
          %406 = sbr.rel (%p404) target = $region52
        $region51: #{tpu_custom_call.1} parent=11 // pred_region
          _
        $region52: #{tpu_custom_call.1} parent=11 // pred_fallthru
          _
        // Predicated region
        $region53: #{tpu_custom_call.1} parent=11 // pred_check
          %p407 = pneg %p292
        $region54: #{tpu_custom_call.1} parent=11 // pred_check_branch
          %409 = sbr.rel (%p407) target = $region56
        $region55: #{tpu_custom_call.1} parent=11 // pred_region
          _
        $region56: #{tpu_custom_call.1} parent=11 // pred_fallthru
          _
        // Predicated region
        $region57: #{tpu_custom_call.1} parent=11 // pred_check
          %p410 = pneg %p313
        $region58: #{tpu_custom_call.1} parent=11 // pred_check_branch
          %412 = sbr.rel (%p410) target = $region60
        $region59: #{tpu_custom_call.1} parent=11 // pred_region
          _
        $region60: #{tpu_custom_call.1} parent=11 // pred_fallthru
          _
        // Predicated region
        $region61: #{tpu_custom_call.1} parent=11 // pred_check
          %p413 = pneg %p334
        $region62: #{tpu_custom_call.1} parent=11 // pred_check_branch
          %415 = sbr.rel (%p413) target = $region64
        $region63: #{tpu_custom_call.1} parent=11 // pred_region
          _
        $region64: #{tpu_custom_call.1} parent=11 // pred_fallthru
          _
      $region12: #{tpu_custom_call.1} parent=5 // pred_fallthru
        _
      %p416 = scmp.lt.s32.totalorder %s23, 2
      // Predicated region
      $region65: #{tpu_custom_call.1} parent=5 // pred_check
        %p417 = pneg %p416
      $region66: #{tpu_custom_call.1} parent=5 // pred_check_branch
        %419 = sbr.rel (%p417) target = $region68
      $region67: #{tpu_custom_call.1} parent=5 // pred_region
        // Predicated region
        $region69: #{tpu_custom_call.1} parent=67 // pred_check
          %p420 = pneg %p55
        $region70: #{tpu_custom_call.1} parent=67 // pred_check_branch
          %422 = sbr.rel (%p420) target = $region72
        $region71: #{tpu_custom_call.1} parent=67 // pred_region
          %p423 = scmp.lt.s32.totalorder %s30, 1
          %s424 = scalar_select %p423, %s30, 1
          %s425 = smul.addr %s424, 8
          %s426 = scalar_lea.vmem %s0, %s425
        $region72: #{tpu_custom_call.1} parent=67 // pred_fallthru
          _
      $region68: #{tpu_custom_call.1} parent=5 // pred_fallthru
        _
      %p427 = scmp.le.s32.totalorder 1, %s23
      %p428 = scmp.lt.s32.totalorder %s23, 3
      %p429 = pnand %p427, %p428
      %p430 = pneg %p429
      // Predicated region
      $region73: #{tpu_custom_call.1} parent=5 // pred_check
        _
      $region74: #{tpu_custom_call.1} parent=5 // pred_check_branch
        %432 = sbr.rel (%p429) target = $region76
      $region75: #{tpu_custom_call.1} parent=5 // pred_region
        %s433 = ssub.s32 %s23, 1
        %p434 = scmp.lt.s32.totalorder %s32, 1
        %s435 = scalar_select %p434, %s32, 1
        %s436 = smul.addr %s435, 8
        %s437 = scalar_lea.vmem %s0, %s436
        %p438 = pneg %p61
        %p439 = pneg %p58
        %p440 = pneg %p82
        %p441 = pneg %p79
        %p442 = pneg %p103
        %p443 = pneg %p100
        %p444 = pneg %p124
        %p445 = pneg %p121
        %p446 = pneg %p145
        %p447 = pneg %p142
        %p448 = pneg %p166
        %p449 = pneg %p163
        %p450 = pneg %p187
        %p451 = pneg %p184
        %p452 = pneg %p208
        %p453 = pneg %p205
        %p454 = pneg %p229
        %p455 = pneg %p226
        %p456 = pneg %p250
        %p457 = pneg %p247
        %p458 = pneg %p271
        %p459 = pneg %p268
        %p460 = pneg %p292
        %p461 = pneg %p289
        %p462 = pneg %p313
        %p463 = pneg %p310
        %p464 = pneg %p334
        %p465 = pneg %p331
        %p466 = pneg %p362
        %p467 = pneg %p359
        %s468 = sand.u32 %s349, 1
        %s469 = scalar_lea.sflag [#allocation5], %s468
        %s470 = sand.u32 %s349, 1
        %s471 = smul.addr %s470, 8
        %s472 = scalar_lea.vmem [#allocation4], %s471
        %p473 = scmp.lt.s32.totalorder %s32, 1
        %s474 = scalar_select %p473, %s32, 1
        %s475 = smul.addr %s474, 8
        %s476 = scalar_lea.vmem %s0, %s475
        %p478 = scmp.eq.s32.totalorder %s33, 0
        // Predicated region
        $region77: #{tpu_custom_call.1} parent=75 // pred_check
          %p479 = pneg %p478
        $region78: #{tpu_custom_call.1} parent=75 // pred_check_branch
          %481 = sbr.rel (%p479) target = $region80
        $region79: #{tpu_custom_call.1} parent=75 // pred_region
          %v482 = vld [vmem:[%s2] sm:$0xf]
          %v483 = vld [vmem:[%s2 + $0x4] sm:$0xf]
          %v484 = vld [vmem:[%s2 + $0x8] sm:$0xf]
          %v485 = vld [vmem:[%s2 + $0xc] sm:$0xf]
          %v486 = vld [vmem:[%s2 + $0x10] sm:$0xf]
          %v487 = vld [vmem:[%s2 + $0x14] sm:$0xf]
          %v488 = vld [vmem:[%s2 + $0x18] sm:$0xf]
          %v489 = vld [vmem:[%s2 + $0x1c] sm:$0xf]
          %v490 = vld [vmem:[%s2 + $0x20] sm:$0xf]
          %v491 = vld [vmem:[%s2 + $0x24] sm:$0xf]
          %v492 = vld [vmem:[%s2 + $0x28] sm:$0xf]
          %v493 = vld [vmem:[%s2 + $0x2c] sm:$0xf]
          %v494 = vld [vmem:[%s2 + $0x30] sm:$0xf]
          %v495 = vld [vmem:[%s2 + $0x34] sm:$0xf]
          %v496 = vld [vmem:[%s2 + $0x38] sm:$0xf]
          %v497 = vld [vmem:[%s2 + $0x3c] sm:$0xf]
          %v498 = vld [vmem:[%s2 + $0x40] sm:$0xf]
          %v499 = vld [vmem:[%s2 + $0x44] sm:$0xf]
          %v500 = vld [vmem:[%s2 + $0x48] sm:$0xf]
          %v501 = vld [vmem:[%s2 + $0x4c] sm:$0xf]
          %v502 = vld [vmem:[%s2 + $0x50] sm:$0xf]
          %v503 = vld [vmem:[%s2 + $0x54] sm:$0xf]
          %v504 = vld [vmem:[%s2 + $0x58] sm:$0xf]
          %v505 = vld [vmem:[%s2 + $0x5c] sm:$0xf]
          %v506 = vld [vmem:[%s2 + $0x60] sm:$0xf]
          %v507 = vld [vmem:[%s2 + $0x64] sm:$0xf]
          %v508 = vld [vmem:[%s2 + $0x68] sm:$0xf]
          %v509 = vld [vmem:[%s2 + $0x6c] sm:$0xf]
          %v510 = vld [vmem:[%s2 + $0x70] sm:$0xf]
          %v511 = vld [vmem:[%s2 + $0x74] sm:$0xf]
          %v512 = vld [vmem:[%s2 + $0x78] sm:$0xf]
          %v513 = vld [vmem:[%s2 + $0x7c] sm:$0xf]
          %v514 = vld [vmem:[%s3] sm:$0xff]
          %v515 = vld [vmem:[%s3 + $0x8] sm:$0xff]
          %v516 = vld [vmem:[%s3 + $0x10] sm:$0xff]
          %v517 = vld [vmem:[%s3 + $0x18] sm:$0xff]
          %v518 = vld [vmem:[%s476] sm:$0xff]
          %v519 = vpack.c.bf16 %v518, %v518
          %v524 = vunpack.c.l.b16 %v514
          %v525 = vunpack.c.h.b16 %v514
          %v526 = vunpack.c.l.b16 %v515
          %v527 = vunpack.c.h.b16 %v515
          %v528 = vunpack.c.l.b16 %v516
          %v529 = vunpack.c.h.b16 %v516
          %v530 = vunpack.c.l.b16 %v517
          %v531 = vunpack.c.h.b16 %v517
          %v532 = vpack.c.b16 %v526, %v524
          %v533 = vpack.c.b16 %v527, %v525
          %v534 = vpack.c.b16 %v530, %v528
          %v535 = vpack.c.b16 %v531, %v529
          %vm540 = vcmask 261120
          %v542 = vsel %vm540, %v519, 0
          %544 = vmatprep.subr.bf16.mxu0 %v533
          %545 = vmatpush1.bf16.msra.mxu0 %v532
          %546 = vmatprep.subr.bf16.mxu0 %v535
          %547 = vmatpush1.bf16.msra.mxu0 %v534
          %548 = vmatprep.subr.bf16.mxu0 0
          %549 = vmatpush1.bf16.msra.mxu0 0
          %550 = vmatprep.subr.bf16.mxu0 0
          %551 = vmatpush1.bf16.msra.mxu0 0
          %552 = vmatprep.subr.bf16.mxu0 0
          %553 = vmatpush1.bf16.msra.mxu0 0
          %554 = vmatprep.subr.bf16.mxu0 0
          %555 = vmatpush1.bf16.msra.mxu0 0
          %556 = vmatprep.subr.bf16.mxu0 0
          %557 = vmatpush1.bf16.msra.mxu0 0
          %558 = vmatprep.subr.bf16.mxu0 0
          %559 = vmatpush1.bf16.msra.mxu0 0
          %560 = vmatprep.subr.bf16.mxu0 0
          %561 = vmatpush1.bf16.msra.mxu0 0
          %562 = vmatprep.subr.bf16.mxu0 0
          %563 = vmatpush1.bf16.msra.mxu0 0
          %564 = vmatprep.subr.bf16.mxu0 0
          %565 = vmatpush1.bf16.msra.mxu0 0
          %566 = vmatprep.subr.bf16.mxu0 0
          %567 = vmatpush1.bf16.msra.mxu0 0
          %568 = vmatprep.subr.bf16.mxu0 0
          %569 = vmatpush1.bf16.msra.mxu0 0
          %570 = vmatprep.subr.bf16.mxu0 0
          %571 = vmatpush1.bf16.msra.mxu0 0
          %572 = vmatprep.subr.bf16.mxu0 0
          %573 = vmatpush1.bf16.msra.mxu0 0
          %574 = vmatprep.subr.bf16.mxu0 0
          %575 = vmatpush1.bf16.msra.mxu0 0
          %576 = vmatprep.mubr.bf16.mxu0 0
          %577 = vmatmul.mubr.bf16.gmra.mrb[0].mxu0 %v542
          %v578 = vpop.f32.mrb[0].mxu0
          %v579 = vadd.f32 0.0, %v578
          %v580 = vpop.f32.mrb[0].mxu0
          %v581 = vadd.f32 0.0, %v580
          %v582 = vpop.f32.mrb[0].mxu0
          %v583 = vpop.f32.mrb[0].mxu0
          %584 = vdwg.mxu0
          %v585 = vpack.c.bf16 %v579, %v579
          %v586 = vpack.c.bf16 %v581, %v581
          %v589 = vunpack.c.l.b16 %v585
          %v590 = vunpack.c.l.b16 %v586
          %v591 = vpack.c.b16 %v590, %v589
          %593 = vst [vmem:[#allocation3] sm:$0xff] %v591
          %v626 = vunpack.c.l.b16 %v482
          %v627 = vunpack.c.l.b16 %v483
          %v628 = vunpack.c.l.b16 %v484
          %v629 = vunpack.c.l.b16 %v485
          %v630 = vunpack.c.l.b16 %v486
          %v631 = vunpack.c.l.b16 %v487
          %v632 = vunpack.c.l.b16 %v488
          %v633 = vunpack.c.l.b16 %v489
          %v634 = vunpack.c.l.b16 %v490
          %v635 = vunpack.c.l.b16 %v491
          %v636 = vunpack.c.l.b16 %v492
          %v637 = vunpack.c.l.b16 %v493
          %v638 = vunpack.c.l.b16 %v494
          %v639 = vunpack.c.l.b16 %v495
          %v640 = vunpack.c.l.b16 %v496
          %v641 = vunpack.c.l.b16 %v497
          %v642 = vunpack.c.l.b16 %v498
          %v643 = vunpack.c.l.b16 %v499
          %v644 = vunpack.c.l.b16 %v500
          %v645 = vunpack.c.l.b16 %v501
          %v646 = vunpack.c.l.b16 %v502
          %v647 = vunpack.c.l.b16 %v503
          %v648 = vunpack.c.l.b16 %v504
          %v649 = vunpack.c.l.b16 %v505
          %v650 = vunpack.c.l.b16 %v506
          %v651 = vunpack.c.l.b16 %v507
          %v652 = vunpack.c.l.b16 %v508
          %v653 = vunpack.c.l.b16 %v509
          %v654 = vunpack.c.l.b16 %v510
          %v655 = vunpack.c.l.b16 %v511
          %v656 = vunpack.c.l.b16 %v512
          %v657 = vunpack.c.l.b16 %v513
          %v658 = vpack.c.b16 %v627, %v626
          %v659 = vpack.c.b16 %v629, %v628
          %v660 = vpack.c.b16 %v631, %v630
          %v661 = vpack.c.b16 %v633, %v632
          %v662 = vpack.c.b16 %v635, %v634
          %v663 = vpack.c.b16 %v637, %v636
          %v664 = vpack.c.b16 %v639, %v638
          %v665 = vpack.c.b16 %v641, %v640
          %v666 = vpack.c.b16 %v643, %v642
          %v667 = vpack.c.b16 %v645, %v644
          %v668 = vpack.c.b16 %v647, %v646
          %v669 = vpack.c.b16 %v649, %v648
          %v670 = vpack.c.b16 %v651, %v650
          %v671 = vpack.c.b16 %v653, %v652
          %v672 = vpack.c.b16 %v655, %v654
          %v673 = vpack.c.b16 %v657, %v656
          %v675 = vsel %vm540, %v658, 0
          %v678 = vsel %vm540, %v659, 0
          %v681 = vsel %vm540, %v660, 0
          %v684 = vsel %vm540, %v661, 0
          %v687 = vsel %vm540, %v662, 0
          %v690 = vsel %vm540, %v663, 0
          %v693 = vsel %vm540, %v664, 0
          %v696 = vsel %vm540, %v665, 0
          %v699 = vsel %vm540, %v666, 0
          %v702 = vsel %vm540, %v667, 0
          %v705 = vsel %vm540, %v668, 0
          %v708 = vsel %vm540, %v669, 0
          %v711 = vsel %vm540, %v670, 0
          %v714 = vsel %vm540, %v671, 0
          %v717 = vsel %vm540, %v672, 0
          %v720 = vsel %vm540, %v673, 0
          %722 = vmatprep.subr.bf16.mxu0 0
          %723 = vmatpush1.bf16.xpose.msra.mxu0 %v542
          %724 = vmatprep.subr.bf16.mxu0 0
          %725 = vmatpush1.bf16.xpose.msra.mxu0 0
          %726 = vmatprep.subr.bf16.mxu0 0
          %727 = vmatpush1.bf16.xpose.msra.mxu0 0
          %728 = vmatprep.subr.bf16.mxu0 0
          %729 = vmatpush1.bf16.xpose.msra.mxu0 0
          %730 = vmatprep.subr.bf16.mxu0 0
          %731 = vmatpush1.bf16.xpose.msra.mxu0 0
          %732 = vmatprep.subr.bf16.mxu0 0
          %733 = vmatpush1.bf16.xpose.msra.mxu0 0
          %734 = vmatprep.subr.bf16.mxu0 0
          %735 = vmatpush1.bf16.xpose.msra.mxu0 0
          %736 = vmatprep.subr.bf16.mxu0 0
          %737 = vmatpush1.bf16.xpose.msra.mxu0 0
          %738 = vmatprep.subr.bf16.mxu0 0
          %739 = vmatpush1.bf16.xpose.msra.mxu0 0
          %740 = vmatprep.subr.bf16.mxu0 0
          %741 = vmatpush1.bf16.xpose.msra.mxu0 0
          %742 = vmatprep.subr.bf16.mxu0 0
          %743 = vmatpush1.bf16.xpose.msra.mxu0 0
          %744 = vmatprep.subr.bf16.mxu0 0
          %745 = vmatpush1.bf16.xpose.msra.mxu0 0
          %746 = vmatprep.subr.bf16.mxu0 0
          %747 = vmatpush1.bf16.xpose.msra.mxu0 0
          %748 = vmatprep.subr.bf16.mxu0 0
          %749 = vmatpush1.bf16.xpose.msra.mxu0 0
          %750 = vmatprep.subr.bf16.mxu0 0
          %751 = vmatpush1.bf16.xpose.msra.mxu0 0
          %752 = vmatprep.subr.bf16.mxu0 0
          %753 = vmatpush1.bf16.xpose.msra.mxu0 0
          %754 = vmatprep.mubr.bf16.mxu0 0
          %755 = vmatmul.mubr.bf16.gmra.mrb[0].mxu0 %v675
          %v756 = vpop.f32.mrb[0].mxu0
          %v757 = vadd.f32 0.0, %v756
          %v758 = vpop.f32.mrb[0].mxu0
          %v759 = vpop.f32.mrb[0].mxu0
          %v760 = vadd.f32 0.0, %v759
          %v761 = vpop.f32.mrb[0].mxu0
          %762 = vmatprep.mubr.bf16.mxu0 0
          %763 = vmatmul.mubr.bf16.gmra.mrb[0].mxu0 %v678
          %v764 = vpop.f32.mrb[0].mxu0
          %v765 = vadd.f32 0.0, %v764
          %v766 = vpop.f32.mrb[0].mxu0
          %v767 = vpop.f32.mrb[0].mxu0
          %v768 = vadd.f32 0.0, %v767
          %v769 = vpop.f32.mrb[0].mxu0
          %770 = vmatprep.mubr.bf16.mxu0 0
          %771 = vmatmul.mubr.bf16.gmra.mrb[0].mxu0 %v681
          %v772 = vpop.f32.mrb[0].mxu0
          %v773 = vadd.f32 0.0, %v772
          %v774 = vpop.f32.mrb[0].mxu0
          %v775 = vpop.f32.mrb[0].mxu0
          %v776 = vadd.f32 0.0, %v775
          %v777 = vpop.f32.mrb[0].mxu0
          %778 = vmatprep.mubr.bf16.mxu0 0
          %779 = vmatmul.mubr.bf16.gmra.mrb[0].mxu0 %v684
          %v780 = vpop.f32.mrb[0].mxu0
          %v781 = vadd.f32 0.0, %v780
          %v782 = vpop.f32.mrb[0].mxu0
          %v783 = vpop.f32.mrb[0].mxu0
          %v784 = vadd.f32 0.0, %v783
          %v785 = vpop.f32.mrb[0].mxu0
          %786 = vmatprep.mubr.bf16.mxu0 0
          %787 = vmatmul.mubr.bf16.gmra.mrb[0].mxu0 %v687
          %v788 = vpop.f32.mrb[0].mxu0
          %v789 = vadd.f32 0.0, %v788
          %v790 = vpop.f32.mrb[0].mxu0
          %v791 = vpop.f32.mrb[0].mxu0
          %v792 = vadd.f32 0.0, %v791
          %v793 = vpop.f32.mrb[0].mxu0
          %794 = vmatprep.mubr.bf16.mxu0 0
          %795 = vmatmul.mubr.bf16.gmra.mrb[0].mxu0 %v690
          %v796 = vpop.f32.mrb[0].mxu0
          %v797 = vadd.f32 0.0, %v796
          %v798 = vpop.f32.mrb[0].mxu0
          %v799 = vpop.f32.mrb[0].mxu0
          %v800 = vadd.f32 0.0, %v799
          %v801 = vpop.f32.mrb[0].mxu0
          %802 = vmatprep.mubr.bf16.mxu0 0
          %803 = vmatmul.mubr.bf16.gmra.mrb[0].mxu0 %v693
          %v804 = vpop.f32.mrb[0].mxu0
          %v805 = vadd.f32 0.0, %v804
          %v806 = vpop.f32.mrb[0].mxu0
          %v807 = vpop.f32.mrb[0].mxu0
          %v808 = vadd.f32 0.0, %v807
          %v809 = vpop.f32.mrb[0].mxu0
          %810 = vmatprep.mubr.bf16.mxu0 0
          %811 = vmatmul.mubr.bf16.gmra.mrb[0].mxu0 %v696
          %v812 = vpop.f32.mrb[0].mxu0
          %v813 = vadd.f32 0.0, %v812
          %v814 = vpop.f32.mrb[0].mxu0
          %v815 = vpop.f32.mrb[0].mxu0
          %v816 = vadd.f32 0.0, %v815
          %v817 = vpop.f32.mrb[0].mxu0
          %818 = vmatprep.mubr.bf16.mxu0 0
          %819 = vmatmul.mubr.bf16.gmra.mrb[0].mxu0 %v699
          %v820 = vpop.f32.mrb[0].mxu0
          %v821 = vadd.f32 0.0, %v820
          %v822 = vpop.f32.mrb[0].mxu0
          %v823 = vpop.f32.mrb[0].mxu0
          %v824 = vadd.f32 0.0, %v823
          %v825 = vpop.f32.mrb[0].mxu0
          %826 = vmatprep.mubr.bf16.mxu0 0
          %827 = vmatmul.mubr.bf16.gmra.mrb[0].mxu0 %v702
          %v828 = vpop.f32.mrb[0].mxu0
          %v829 = vadd.f32 0.0, %v828
          %v830 = vpop.f32.mrb[0].mxu0
          %v831 = vpop.f32.mrb[0].mxu0
          %v832 = vadd.f32 0.0, %v831
          %v833 = vpop.f32.mrb[0].mxu0
          %834 = vmatprep.mubr.bf16.mxu0 0
          %835 = vmatmul.mubr.bf16.gmra.mrb[0].mxu0 %v705
          %v836 = vpop.f32.mrb[0].mxu0
          %v837 = vadd.f32 0.0, %v836
          %v838 = vpop.f32.mrb[0].mxu0
          %v839 = vpop.f32.mrb[0].mxu0
          %v840 = vadd.f32 0.0, %v839
          %v841 = vpop.f32.mrb[0].mxu0
          %842 = vmatprep.mubr.bf16.mxu0 0
          %843 = vmatmul.mubr.bf16.gmra.mrb[0].mxu0 %v708
          %v844 = vpop.f32.mrb[0].mxu0
          %v845 = vadd.f32 0.0, %v844
          %v846 = vpop.f32.mrb[0].mxu0
          %v847 = vpop.f32.mrb[0].mxu0
          %v848 = vadd.f32 0.0, %v847
          %v849 = vpop.f32.mrb[0].mxu0
          %850 = vmatprep.mubr.bf16.mxu0 0
          %851 = vmatmul.mubr.bf16.gmra.mrb[0].mxu0 %v711
          %v852 = vpop.f32.mrb[0].mxu0
          %v853 = vadd.f32 0.0, %v852
          %v854 = vpop.f32.mrb[0].mxu0
          %v855 = vpop.f32.mrb[0].mxu0
          %v856 = vadd.f32 0.0, %v855
          %v857 = vpop.f32.mrb[0].mxu0
          %858 = vmatprep.mubr.bf16.mxu0 0
          %859 = vmatmul.mubr.bf16.gmra.mrb[0].mxu0 %v714
          %v860 = vpop.f32.mrb[0].mxu0
          %v861 = vadd.f32 0.0, %v860
          %v862 = vpop.f32.mrb[0].mxu0
          %v863 = vpop.f32.mrb[0].mxu0
          %v864 = vadd.f32 0.0, %v863
          %v865 = vpop.f32.mrb[0].mxu0
          %866 = vmatprep.mubr.bf16.mxu0 0
          %867 = vmatmul.mubr.bf16.gmra.mrb[0].mxu0 %v717
          %v868 = vpop.f32.mrb[0].mxu0
          %v869 = vadd.f32 0.0, %v868
          %v870 = vpop.f32.mrb[0].mxu0
          %v871 = vpop.f32.mrb[0].mxu0
          %v872 = vadd.f32 0.0, %v871
          %v873 = vpop.f32.mrb[0].mxu0
          %874 = vmatprep.mubr.bf16.mxu0 0
          %875 = vmatmul.mubr.bf16.gmra.mrb[0].mxu0 %v720
          %v876 = vpop.f32.mrb[0].mxu0
          %v877 = vadd.f32 0.0, %v876
          %v878 = vpop.f32.mrb[0].mxu0
          %v879 = vpop.f32.mrb[0].mxu0
          %v880 = vadd.f32 0.0, %v879
          %v881 = vpop.f32.mrb[0].mxu0
          %882 = vdwg.mxu0
          %v883 = vpack.c.bf16 %v760, %v757
          %v884 = vpack.c.bf16 %v768, %v765
          %v885 = vpack.c.bf16 %v776, %v773
          %v886 = vpack.c.bf16 %v784, %v781
          %v887 = vpack.c.bf16 %v792, %v789
          %v888 = vpack.c.bf16 %v800, %v797
          %v889 = vpack.c.bf16 %v808, %v805
          %v890 = vpack.c.bf16 %v816, %v813
          %v891 = vpack.c.bf16 %v824, %v821
          %v892 = vpack.c.bf16 %v832, %v829
          %v893 = vpack.c.bf16 %v840, %v837
          %v894 = vpack.c.bf16 %v848, %v845
          %v895 = vpack.c.bf16 %v856, %v853
          %v896 = vpack.c.bf16 %v864, %v861
          %v897 = vpack.c.bf16 %v872, %v869
          %v898 = vpack.c.bf16 %v880, %v877
          %vm899 = vcmask 64512
          %900 = vst.msk [vmem:[#allocation2] sm:$0xff] %vm899, %v883
          %901 = vst.msk [vmem:[#allocation2 + $0x8] sm:$0xff] %vm899, %v884
          %902 = vst.msk [vmem:[#allocation2 + $0x10] sm:$0xff] %vm899, %v885
          %903 = vst.msk [vmem:[#allocation2 + $0x18] sm:$0xff] %vm899, %v886
          %904 = vst.msk [vmem:[#allocation2 + $0x20] sm:$0xff] %vm899, %v887
          %905 = vst.msk [vmem:[#allocation2 + $0x28] sm:$0xff] %vm899, %v888
          %906 = vst.msk [vmem:[#allocation2 + $0x30] sm:$0xff] %vm899, %v889
          %907 = vst.msk [vmem:[#allocation2 + $0x38] sm:$0xff] %vm899, %v890
          %908 = vst.msk [vmem:[#allocation2 + $0x40] sm:$0xff] %vm899, %v891
          %909 = vst.msk [vmem:[#allocation2 + $0x48] sm:$0xff] %vm899, %v892
          %910 = vst.msk [vmem:[#allocation2 + $0x50] sm:$0xff] %vm899, %v893
          %911 = vst.msk [vmem:[#allocation2 + $0x58] sm:$0xff] %vm899, %v894
          %912 = vst.msk [vmem:[#allocation2 + $0x60] sm:$0xff] %vm899, %v895
          %913 = vst.msk [vmem:[#allocation2 + $0x68] sm:$0xff] %vm899, %v896
          %914 = vst.msk [vmem:[#allocation2 + $0x70] sm:$0xff] %vm899, %v897
          %915 = vst.msk [vmem:[#allocation2 + $0x78] sm:$0xff] %vm899, %v898
        $region80: #{tpu_custom_call.1} parent=75 // pred_fallthru
          _
        %s916 = smul.u32 %s33, 8
        %s917 = scalar_lea.vmem %s476, %s916
        %v918 = vld [vmem:[%s917] sm:$0xff]
        %v919 = vld [vmem:[%s5] sm:$0x1]
        %v920 = vld [vmem:[%s6] sm:$0x1]
        %v921 = vld [vmem:[%s7] sm:$0x1]
        %v922 = vld [vmem:[%s9] sm:$0x1]
        %v923 = vld [vmem:[%s11] sm:$0x1]
        %v924 = vld [vmem:[%s12] sm:$0x1]
        %v925 = vld [vmem:[%s13] sm:$0x1]
        %v926 = vpack.c.bf16 %v918, %v918
        %v927 = vld [vmem:[%s1] sm:$0xff]
        %v928 = vld [vmem:[%s1 + $0x8] sm:$0xff]
        %v929 = vld [vmem:[%s1 + $0x10] sm:$0xff]
        %v930 = vld [vmem:[%s1 + $0x18] sm:$0xff]
        %v935 = vunpack.c.l.b16 %v927
        %v936 = vunpack.c.h.b16 %v927
        %v937 = vunpack.c.l.b16 %v928
        %v938 = vunpack.c.h.b16 %v928
        %v939 = vunpack.c.l.b16 %v929
        %v940 = vunpack.c.h.b16 %v929
        %v941 = vunpack.c.l.b16 %v930
        %v942 = vunpack.c.h.b16 %v930
        %v943 = vpack.c.b16 %v937, %v935
        %v944 = vpack.c.b16 %v938, %v936
        %v945 = vpack.c.b16 %v941, %v939
        %v946 = vpack.c.b16 %v942, %v940
        %vm951 = vcmask 261120
        %v953 = vsel %vm951, %v926, 0
        %955 = vmatprep.subr.bf16.mxu0 %v944
        %956 = vmatpush1.bf16.msra.mxu0 %v943
        %957 = vmatprep.subr.bf16.mxu0 %v946
        %958 = vmatpush1.bf16.msra.mxu0 %v945
        %959 = vmatprep.subr.bf16.mxu0 0
        %960 = vmatpush1.bf16.msra.mxu0 0
        %961 = vmatprep.subr.bf16.mxu0 0
        %962 = vmatpush1.bf16.msra.mxu0 0
        %963 = vmatprep.subr.bf16.mxu0 0
        %964 = vmatpush1.bf16.msra.mxu0 0
        %965 = vmatprep.subr.bf16.mxu0 0
        %966 = vmatpush1.bf16.msra.mxu0 0
        %967 = vmatprep.subr.bf16.mxu0 0
        %968 = vmatpush1.bf16.msra.mxu0 0
        %969 = vmatprep.subr.bf16.mxu0 0
        %970 = vmatpush1.bf16.msra.mxu0 0
        %971 = vmatprep.subr.bf16.mxu0 0
        %972 = vmatpush1.bf16.msra.mxu0 0
        %973 = vmatprep.subr.bf16.mxu0 0
        %974 = vmatpush1.bf16.msra.mxu0 0
        %975 = vmatprep.subr.bf16.mxu0 0
        %976 = vmatpush1.bf16.msra.mxu0 0
        %977 = vmatprep.subr.bf16.mxu0 0
        %978 = vmatpush1.bf16.msra.mxu0 0
        %979 = vmatprep.subr.bf16.mxu0 0
        %980 = vmatpush1.bf16.msra.mxu0 0
        %981 = vmatprep.subr.bf16.mxu0 0
        %982 = vmatpush1.bf16.msra.mxu0 0
        %983 = vmatprep.subr.bf16.mxu0 0
        %984 = vmatpush1.bf16.msra.mxu0 0
        %985 = vmatprep.subr.bf16.mxu0 0
        %986 = vmatpush1.bf16.msra.mxu0 0
        %987 = vmatprep.mubr.bf16.mxu0 0
        %988 = vmatmul.mubr.bf16.gmra.mrb[0].mxu0 %v953
        %v989 = vpop.f32.mrb[0].mxu0
        %v990 = vadd.f32 0.0, %v989
        %v991 = vpop.f32.mrb[0].mxu0
        %v992 = vadd.f32 0.0, %v991
        %v993 = vpop.f32.mrb[0].mxu0
        %v994 = vpop.f32.mrb[0].mxu0
        %995 = vdwg.mxu0
        %v996 = vpack.c.bf16 %v990, %v990
        %v997 = vpack.c.bf16 %v992, %v992
        %v998 = vld [vmem:[#allocation2] sm:$0xff]
        %v999 = vld [vmem:[#allocation2 + $0x8] sm:$0xff]
        %v1000 = vld [vmem:[#allocation3] sm:$0xf]
        %v1002 = vsel %vm951, %v996, 0
        %1004 = vmatprep.subr.bf16.mxu0 0
        %1005 = vmatpush1.bf16.msra.mxu0 %v998
        %1006 = vmatprep.subr.bf16.mxu0 0
        %1007 = vmatpush1.bf16.msra.mxu0 %v999
        %1008 = vmatprep.subr.bf16.mxu0 0
        %1009 = vmatpush1.bf16.msra.mxu0 0
        %1010 = vmatprep.subr.bf16.mxu0 0
        %1011 = vmatpush1.bf16.msra.mxu0 0
        %1012 = vmatprep.subr.bf16.mxu0 0
        %1013 = vmatpush1.bf16.msra.mxu0 0
        %1014 = vmatprep.subr.bf16.mxu0 0
        %1015 = vmatpush1.bf16.msra.mxu0 0
        %1016 = vmatprep.subr.bf16.mxu0 0
        %1017 = vmatpush1.bf16.msra.mxu0 0
        %1018 = vmatprep.subr.bf16.mxu0 0
        %1019 = vmatpush1.bf16.msra.mxu0 0
        %1020 = vmatprep.subr.bf16.mxu0 0
        %1021 = vmatpush1.bf16.msra.mxu0 0
        %1022 = vmatprep.subr.bf16.mxu0 0
        %1023 = vmatpush1.bf16.msra.mxu0 0
        %1024 = vmatprep.subr.bf16.mxu0 0
        %1025 = vmatpush1.bf16.msra.mxu0 0
        %1026 = vmatprep.subr.bf16.mxu0 0
        %1027 = vmatpush1.bf16.msra.mxu0 0
        %1028 = vmatprep.subr.bf16.mxu0 0
        %1029 = vmatpush1.bf16.msra.mxu0 0
        %1030 = vmatprep.subr.bf16.mxu0 0
        %1031 = vmatpush1.bf16.msra.mxu0 0
        %1032 = vmatprep.subr.bf16.mxu0 0
        %1033 = vmatpush1.bf16.msra.mxu0 0
        %1034 = vmatprep.subr.bf16.mxu0 0
        %1035 = vmatpush1.bf16.msra.mxu0 0
        %1036 = vmatprep.mubr.bf16.mxu0 0
        %1037 = vmatmul.mubr.bf16.gmra.mrb[0].mxu0 %v1002
        %v1038 = vpop.f32.mrb[0].mxu0
        %v1039 = vadd.f32 0.0, %v1038
        %v1040 = vpop.f32.mrb[0].mxu0
        %v1041 = vpop.f32.mrb[0].mxu0
        %v1042 = vpop.f32.mrb[0].mxu0
        %1043 = vdwg.mxu0
        %vm1044 = vcmask 64512
        %v1045 = vsel %vm1044, %v1039, -inf
        %1046 = vmax.xlane.f32.xlu0 %v1045
        %v1047 = vpop.xlane.xlu0 %1046
        %v1048 = vsub.f32 %v1039, %v1047
        %v1049 = vmul.f32 %v1048, 1.442695
        %v1050 = vpow.pop %v1049
        %v1051 = vsel %vm1044, %v1050, 0.0
        %1052 = vadd.xlane.f32.xlu0 %v1051
        %v1053 = vpop.xlane.xlu0 %1052
        %v1054 = vrcp.pop %v1053
        %v1055 = vmul.f32 %v1050, %v1054
        %v1056 = vpack.c.bf16 %v1055, %v1055
        %v1058 = vsel %vm1044, %v1056, 0
        %vm1060 = vcmask 1043456
        %v1062 = vsel %vm1060, %v1000, 0
        %1064 = vmatprep.subr.bf16.mxu0 0
        %1065 = vmatpush1.bf16.msra.mxu0 %v1062
        %1066 = vmatprep.subr.bf16.mxu0 0
        %1067 = vmatpush1.bf16.msra.mxu0 0
        %1068 = vmatprep.subr.bf16.mxu0 0
        %1069 = vmatpush1.bf16.msra.mxu0 0
        %1070 = vmatprep.subr.bf16.mxu0 0
        %1071 = vmatpush1.bf16.msra.mxu0 0
        %1072 = vmatprep.subr.bf16.mxu0 0
        %1073 = vmatpush1.bf16.msra.mxu0 0
        %1074 = vmatprep.subr.bf16.mxu0 0
        %1075 = vmatpush1.bf16.msra.mxu0 0
        %1076 = vmatprep.subr.bf16.mxu0 0
        %1077 = vmatpush1.bf16.msra.mxu0 0
        %1078 = vmatprep.subr.bf16.mxu0 0
        %1079 = vmatpush1.bf16.msra.mxu0 0
        %1080 = vmatprep.subr.bf16.mxu0 0
        %1081 = vmatpush1.bf16.msra.mxu0 0
        %1082 = vmatprep.subr.bf16.mxu0 0
        %1083 = vmatpush1.bf16.msra.mxu0 0
        %1084 = vmatprep.subr.bf16.mxu0 0
        %1085 = vmatpush1.bf16.msra.mxu0 0
        %1086 = vmatprep.subr.bf16.mxu0 0
        %1087 = vmatpush1.bf16.msra.mxu0 0
        %1088 = vmatprep.subr.bf16.mxu0 0
        %1089 = vmatpush1.bf16.msra.mxu0 0
        %1090 = vmatprep.subr.bf16.mxu0 0
        %1091 = vmatpush1.bf16.msra.mxu0 0
        %1092 = vmatprep.subr.bf16.mxu0 0
        %1093 = vmatpush1.bf16.msra.mxu0 0
        %1094 = vmatprep.subr.bf16.mxu0 0
        %1095 = vmatpush1.bf16.msra.mxu0 0
        %1096 = vmatprep.mubr.bf16.mxu0 0
        %1097 = vmatmul.mubr.bf16.gmra.mrb[0].mxu0 %v1058
        %v1098 = vpop.f32.mrb[0].mxu0
        %v1099 = vadd.f32 0.0, %v1098
        %v1100 = vpop.f32.mrb[0].mxu0
        %v1101 = vpop.f32.mrb[0].mxu0
        %v1102 = vpop.f32.mrb[0].mxu0
        %1103 = vdwg.mxu0
        %v1104 = vpack.c.bf16 %v1099, %v1099
        %v1105 = vld [vmem:[%s4] sm:$0xf]
        %v1106 = vld [vmem:[%s4 + $0x4] sm:$0xf]
        %v1107 = vld [vmem:[%s4 + $0x8] sm:$0xf]
        %v1108 = vld [vmem:[%s4 + $0xc] sm:$0xf]
        %v1109 = vld [vmem:[#allocation2 + $0x10] sm:$0xff]
        %v1110 = vld [vmem:[#allocation2 + $0x18] sm:$0xff]
        %1112 = vrot.lane.b32.xlu0 %v996, 96
        %v1113 = vpop.permute.xlu0 %1112
        %v1115 = vsel %vm951, %v1113, 0
        %1117 = vmatprep.subr.bf16.mxu0 0
        %1118 = vmatpush1.bf16.msra.mxu0 %v1109
        %1119 = vmatprep.subr.bf16.mxu0 0
        %1120 = vmatpush1.bf16.msra.mxu0 %v1110
        %1121 = vmatprep.subr.bf16.mxu0 0
        %1122 = vmatpush1.bf16.msra.mxu0 0
        %1123 = vmatprep.subr.bf16.mxu0 0
        %1124 = vmatpush1.bf16.msra.mxu0 0
        %1125 = vmatprep.subr.bf16.mxu0 0
        %1126 = vmatpush1.bf16.msra.mxu0 0
        %1127 = vmatprep.subr.bf16.mxu0 0
        %1128 = vmatpush1.bf16.msra.mxu0 0
        %1129 = vmatprep.subr.bf16.mxu0 0
        %1130 = vmatpush1.bf16.msra.mxu0 0
        %1131 = vmatprep.subr.bf16.mxu0 0
        %1132 = vmatpush1.bf16.msra.mxu0 0
        %1133 = vmatprep.subr.bf16.mxu0 0
        %1134 = vmatpush1.bf16.msra.mxu0 0
        %1135 = vmatprep.subr.bf16.mxu0 0
        %1136 = vmatpush1.bf16.msra.mxu0 0
        %1137 = vmatprep.subr.bf16.mxu0 0
        %1138 = vmatpush1.bf16.msra.mxu0 0
        %1139 = vmatprep.subr.bf16.mxu0 0
        %1140 = vmatpush1.bf16.msra.mxu0 0
        %1141 = vmatprep.subr.bf16.mxu0 0
        %1142 = vmatpush1.bf16.msra.mxu0 0
        %1143 = vmatprep.subr.bf16.mxu0 0
        %1144 = vmatpush1.bf16.msra.mxu0 0
        %1145 = vmatprep.subr.bf16.mxu0 0
        %1146 = vmatpush1.bf16.msra.mxu0 0
        %1147 = vmatprep.subr.bf16.mxu0 0
        %1148 = vmatpush1.bf16.msra.mxu0 0
        %1149 = vmatprep.mubr.bf16.mxu0 0
        %1150 = vmatmul.mubr.bf16.gmra.mrb[0].mxu0 %v1115
        %v1151 = vpop.f32.mrb[0].mxu0
        %v1152 = vadd.f32 0.0, %v1151
        %v1153 = vpop.f32.mrb[0].mxu0
        %v1154 = vpop.f32.mrb[0].mxu0
        %v1155 = vpop.f32.mrb[0].mxu0
        %1156 = vdwg.mxu0
        %v1157 = vsel %vm1044, %v1152, -inf
        %1158 = vmax.xlane.f32.xlu0 %v1157
        %v1159 = vpop.xlane.xlu0 %1158
        %v1160 = vsub.f32 %v1152, %v1159
        %v1161 = vmul.f32 %v1160, 1.442695
        %v1162 = vpow.pop %v1161
        %v1163 = vsel %vm1044, %v1162, 0.0
        %1164 = vadd.xlane.f32.xlu0 %v1163
        %v1165 = vpop.xlane.xlu0 %1164
        %v1166 = vrcp.pop %v1165
        %v1167 = vmul.f32 %v1162, %v1166
        %v1168 = vpack.c.bf16 %v1167, %v1167
        %v1170 = vunpack.c.l.b16 %v1000
        %v1171 = vpack.c.b16 %v1170, %v1170
        %1172 = vrot.lane.b32.xlu0 %v1171, 96
        %v1173 = vpop.permute.xlu0 %1172
        %v1175 = vsel %vm1044, %v1168, 0
        %v1178 = vsel %vm1060, %v1173, 0
        %1180 = vmatprep.subr.bf16.mxu0 0
        %1181 = vmatpush1.bf16.msra.mxu0 %v1178
        %1182 = vmatprep.subr.bf16.mxu0 0
        %1183 = vmatpush1.bf16.msra.mxu0 0
        %1184 = vmatprep.subr.bf16.mxu0 0
        %1185 = vmatpush1.bf16.msra.mxu0 0
        %1186 = vmatprep.subr.bf16.mxu0 0
        %1187 = vmatpush1.bf16.msra.mxu0 0
        %1188 = vmatprep.subr.bf16.mxu0 0
        %1189 = vmatpush1.bf16.msra.mxu0 0
        %1190 = vmatprep.subr.bf16.mxu0 0
        %1191 = vmatpush1.bf16.msra.mxu0 0
        %1192 = vmatprep.subr.bf16.mxu0 0
        %1193 = vmatpush1.bf16.msra.mxu0 0
        %1194 = vmatprep.subr.bf16.mxu0 0
        %1195 = vmatpush1.bf16.msra.mxu0 0
        %1196 = vmatprep.subr.bf16.mxu0 0
        %1197 = vmatpush1.bf16.msra.mxu0 0
        %1198 = vmatprep.subr.bf16.mxu0 0
        %1199 = vmatpush1.bf16.msra.mxu0 0
        %1200 = vmatprep.subr.bf16.mxu0 0
        %1201 = vmatpush1.bf16.msra.mxu0 0
        %1202 = vmatprep.subr.bf16.mxu0 0
        %1203 = vmatpush1.bf16.msra.mxu0 0
        %1204 = vmatprep.subr.bf16.mxu0 0
        %1205 = vmatpush1.bf16.msra.mxu0 0
        %1206 = vmatprep.subr.bf16.mxu0 0
        %1207 = vmatpush1.bf16.msra.mxu0 0
        %1208 = vmatprep.subr.bf16.mxu0 0
        %1209 = vmatpush1.bf16.msra.mxu0 0
        %1210 = vmatprep.subr.bf16.mxu0 0
        %1211 = vmatpush1.bf16.msra.mxu0 0
        %1212 = vmatprep.mubr.bf16.mxu0 0
        %1213 = vmatmul.mubr.bf16.gmra.mrb[0].mxu0 %v1175
        %v1214 = vpop.f32.mrb[0].mxu0
        %v1215 = vadd.f32 0.0, %v1214
        %v1216 = vpop.f32.mrb[0].mxu0
        %v1217 = vpop.f32.mrb[0].mxu0
        %v1218 = vpop.f32.mrb[0].mxu0
        %1219 = vdwg.mxu0
        %v1220 = vpack.c.bf16 %v1215, %v1215
        %v1221 = vld [vmem:[%s4 + $0x10] sm:$0xf]
        %v1222 = vld [vmem:[%s4 + $0x14] sm:$0xf]
        %v1223 = vld [vmem:[%s4 + $0x18] sm:$0xf]
        %v1224 = vld [vmem:[%s4 + $0x1c] sm:$0xf]
        %v1229 = vunpack.c.l.b16 %v1221
        %v1230 = vunpack.c.l.b16 %v1222
        %v1231 = vunpack.c.l.b16 %v1223
        %v1232 = vunpack.c.l.b16 %v1224
        %v1233 = vpack.c.b16 %v1230, %v1229
        %v1234 = vpack.c.b16 %v1232, %v1231
        %v1238 = vsel %vm951, %v1220, 0
        %1240 = vmatprep.subr.bf16.mxu0 0
        %1241 = vmatpush1.bf16.msra.mxu0 %v1233
        %1242 = vmatprep.subr.bf16.mxu0 0
        %1243 = vmatpush1.bf16.msra.mxu0 %v1234
        %1244 = vmatprep.subr.bf16.mxu0 0
        %1245 = vmatpush1.bf16.msra.mxu0 0
        %1246 = vmatprep.subr.bf16.mxu0 0
        %1247 = vmatpush1.bf16.msra.mxu0 0
        %1248 = vmatprep.subr.bf16.mxu0 0
        %1249 = vmatpush1.bf16.msra.mxu0 0
        %1250 = vmatprep.subr.bf16.mxu0 0
        %1251 = vmatpush1.bf16.msra.mxu0 0
        %1252 = vmatprep.subr.bf16.mxu0 0
        %1253 = vmatpush1.bf16.msra.mxu0 0
        %1254 = vmatprep.subr.bf16.mxu0 0
        %1255 = vmatpush1.bf16.msra.mxu0 0
        %1256 = vmatprep.subr.bf16.mxu0 0
        %1257 = vmatpush1.bf16.msra.mxu0 0
        %1258 = vmatprep.subr.bf16.mxu0 0
        %1259 = vmatpush1.bf16.msra.mxu0 0
        %1260 = vmatprep.subr.bf16.mxu0 0
        %1261 = vmatpush1.bf16.msra.mxu0 0
        %1262 = vmatprep.subr.bf16.mxu0 0
        %1263 = vmatpush1.bf16.msra.mxu0 0
        %1264 = vmatprep.subr.bf16.mxu0 0
        %1265 = vmatpush1.bf16.msra.mxu0 0
        %1266 = vmatprep.subr.bf16.mxu0 0
        %1267 = vmatpush1.bf16.msra.mxu0 0
        %1268 = vmatprep.subr.bf16.mxu0 0
        %1269 = vmatpush1.bf16.msra.mxu0 0
        %1270 = vmatprep.subr.bf16.mxu0 0
        %1271 = vmatpush1.bf16.msra.mxu0 0
        %1272 = vmatprep.mubr.bf16.mxu0 0
        %1273 = vmatmul.mubr.bf16.gmra.mrb[0].mxu0 %v1238
        %v1274 = vpop.f32.mrb[0].mxu0
        %v1275 = vadd.f32 0.0, %v1274
        %v1276 = vpop.f32.mrb[0].mxu0
        %v1277 = vpop.f32.mrb[0].mxu0
        %v1278 = vpop.f32.mrb[0].mxu0
        %1279 = vdwg.mxu0
        %v1284 = vunpack.c.l.b16 %v1105
        %v1285 = vunpack.c.l.b16 %v1106
        %v1286 = vunpack.c.l.b16 %v1107
        %v1287 = vunpack.c.l.b16 %v1108
        %v1288 = vpack.c.b16 %v1285, %v1284
        %v1289 = vpack.c.b16 %v1287, %v1286
        %v1293 = vsel %vm951, %v1104, 0
        %1295 = vmatprep.subr.bf16.mxu0 0
        %1296 = vmatpush1.bf16.msra.mxu0 %v1288
        %1297 = vmatprep.subr.bf16.mxu0 0
        %1298 = vmatpush1.bf16.msra.mxu0 %v1289
        %1299 = vmatprep.subr.bf16.mxu0 0
        %1300 = vmatpush1.bf16.msra.mxu0 0
        %1301 = vmatprep.subr.bf16.mxu0 0
        %1302 = vmatpush1.bf16.msra.mxu0 0
        %1303 = vmatprep.subr.bf16.mxu0 0
        %1304 = vmatpush1.bf16.msra.mxu0 0
        %1305 = vmatprep.subr.bf16.mxu0 0
        %1306 = vmatpush1.bf16.msra.mxu0 0
        %1307 = vmatprep.subr.bf16.mxu0 0
        %1308 = vmatpush1.bf16.msra.mxu0 0
        %1309 = vmatprep.subr.bf16.mxu0 0
        %1310 = vmatpush1.bf16.msra.mxu0 0
        %1311 = vmatprep.subr.bf16.mxu0 0
        %1312 = vmatpush1.bf16.msra.mxu0 0
        %1313 = vmatprep.subr.bf16.mxu0 0
        %1314 = vmatpush1.bf16.msra.mxu0 0
        %1315 = vmatprep.subr.bf16.mxu0 0
        %1316 = vmatpush1.bf16.msra.mxu0 0
        %1317 = vmatprep.subr.bf16.mxu0 0
        %1318 = vmatpush1.bf16.msra.mxu0 0
        %1319 = vmatprep.subr.bf16.mxu0 0
        %1320 = vmatpush1.bf16.msra.mxu0 0
        %1321 = vmatprep.subr.bf16.mxu0 0
        %1322 = vmatpush1.bf16.msra.mxu0 0
        %1323 = vmatprep.subr.bf16.mxu0 0
        %1324 = vmatpush1.bf16.msra.mxu0 0
        %1325 = vmatprep.subr.bf16.mxu0 0
        %1326 = vmatpush1.bf16.msra.mxu0 0
        %1327 = vmatprep.mubr.bf16.mxu0 0
        %1328 = vmatmul.mubr.bf16.gmra.mrb[0].mxu0 %v1293
        %v1329 = vpop.f32.mrb[0].mxu0
        %v1330 = vadd.f32 %v1275, %v1329
        %v1331 = vpop.f32.mrb[0].mxu0
        %v1332 = vpop.f32.mrb[0].mxu0
        %v1333 = vpop.f32.mrb[0].mxu0
        %1334 = vdwg.mxu0
        %v1335 = vld [vmem:[#allocation2 + $0x20] sm:$0xff]
        %v1336 = vld [vmem:[#allocation2 + $0x28] sm:$0xff]
        %1337 = vrot.lane.b32.xlu0 %v996, 64
        %v1338 = vpop.permute.xlu0 %1337
        %v1340 = vsel %vm951, %v1338, 0
        %1342 = vmatprep.subr.bf16.mxu0 0
        %1343 = vmatpush1.bf16.msra.mxu0 %v1335
        %1344 = vmatprep.subr.bf16.mxu0 0
        %1345 = vmatpush1.bf16.msra.mxu0 %v1336
        %1346 = vmatprep.subr.bf16.mxu0 0
        %1347 = vmatpush1.bf16.msra.mxu0 0
        %1348 = vmatprep.subr.bf16.mxu0 0
        %1349 = vmatpush1.bf16.msra.mxu0 0
        %1350 = vmatprep.subr.bf16.mxu0 0
        %1351 = vmatpush1.bf16.msra.mxu0 0
        %1352 = vmatprep.subr.bf16.mxu0 0
        %1353 = vmatpush1.bf16.msra.mxu0 0
        %1354 = vmatprep.subr.bf16.mxu0 0
        %1355 = vmatpush1.bf16.msra.mxu0 0
        %1356 = vmatprep.subr.bf16.mxu0 0
        %1357 = vmatpush1.bf16.msra.mxu0 0
        %1358 = vmatprep.subr.bf16.mxu0 0
        %1359 = vmatpush1.bf16.msra.mxu0 0
        %1360 = vmatprep.subr.bf16.mxu0 0
        %1361 = vmatpush1.bf16.msra.mxu0 0
        %1362 = vmatprep.subr.bf16.mxu0 0
        %1363 = vmatpush1.bf16.msra.mxu0 0
        %1364 = vmatprep.subr.bf16.mxu0 0
        %1365 = vmatpush1.bf16.msra.mxu0 0
        %1366 = vmatprep.subr.bf16.mxu0 0
        %1367 = vmatpush1.bf16.msra.mxu0 0
        %1368 = vmatprep.subr.bf16.mxu0 0
        %1369 = vmatpush1.bf16.msra.mxu0 0
        %1370 = vmatprep.subr.bf16.mxu0 0
        %1371 = vmatpush1.bf16.msra.mxu0 0
        %1372 = vmatprep.subr.bf16.mxu0 0
        %1373 = vmatpush1.bf16.msra.mxu0 0
        %1374 = vmatprep.mubr.bf16.mxu0 0
        %1375 = vmatmul.mubr.bf16.gmra.mrb[0].mxu0 %v1340
        %v1376 = vpop.f32.mrb[0].mxu0
        %v1377 = vadd.f32 0.0, %v1376
        %v1378 = vpop.f32.mrb[0].mxu0
        %v1379 = vpop.f32.mrb[0].mxu0
        %v1380 = vpop.f32.mrb[0].mxu0
        %1381 = vdwg.mxu0
        %v1382 = vsel %vm1044, %v1377, -inf
        %1383 = vmax.xlane.f32.xlu0 %v1382
        %v1384 = vpop.xlane.xlu0 %1383
        %v1385 = vsub.f32 %v1377, %v1384
        %v1386 = vmul.f32 %v1385, 1.442695
        %v1387 = vpow.pop %v1386
        %v1388 = vsel %vm1044, %v1387, 0.0
        %1389 = vadd.xlane.f32.xlu0 %v1388
        %v1390 = vpop.xlane.xlu0 %1389
        %v1391 = vrcp.pop %v1390
        %v1392 = vmul.f32 %v1387, %v1391
        %v1393 = vpack.c.bf16 %v1392, %v1392
        %1394 = vrot.lane.b32.xlu0 %v1171, 64
        %v1395 = vpop.permute.xlu0 %1394
        %v1397 = vsel %vm1044, %v1393, 0
        %v1400 = vsel %vm1060, %v1395, 0
        %1402 = vmatprep.subr.bf16.mxu0 0
        %1403 = vmatpush1.bf16.msra.mxu0 %v1400
        %1404 = vmatprep.subr.bf16.mxu0 0
        %1405 = vmatpush1.bf16.msra.mxu0 0
        %1406 = vmatprep.subr.bf16.mxu0 0
        %1407 = vmatpush1.bf16.msra.mxu0 0
        %1408 = vmatprep.subr.bf16.mxu0 0
        %1409 = vmatpush1.bf16.msra.mxu0 0
        %1410 = vmatprep.subr.bf16.mxu0 0
        %1411 = vmatpush1.bf16.msra.mxu0 0
        %1412 = vmatprep.subr.bf16.mxu0 0
        %1413 = vmatpush1.bf16.msra.mxu0 0
        %1414 = vmatprep.subr.bf16.mxu0 0
        %1415 = vmatpush1.bf16.msra.mxu0 0
        %1416 = vmatprep.subr.bf16.mxu0 0
        %1417 = vmatpush1.bf16.msra.mxu0 0
        %1418 = vmatprep.subr.bf16.mxu0 0
        %1419 = vmatpush1.bf16.msra.mxu0 0
        %1420 = vmatprep.subr.bf16.mxu0 0
        %1421 = vmatpush1.bf16.msra.mxu0 0
        %1422 = vmatprep.subr.bf16.mxu0 0
        %1423 = vmatpush1.bf16.msra.mxu0 0
        %1424 = vmatprep.subr.bf16.mxu0 0
        %1425 = vmatpush1.bf16.msra.mxu0 0
        %1426 = vmatprep.subr.bf16.mxu0 0
        %1427 = vmatpush1.bf16.msra.mxu0 0
        %1428 = vmatprep.subr.bf16.mxu0 0
        %1429 = vmatpush1.bf16.msra.mxu0 0
        %1430 = vmatprep.subr.bf16.mxu0 0
        %1431 = vmatpush1.bf16.msra.mxu0 0
        %1432 = vmatprep.subr.bf16.mxu0 0
        %1433 = vmatpush1.bf16.msra.mxu0 0
        %1434 = vmatprep.mubr.bf16.mxu0 0
        %1435 = vmatmul.mubr.bf16.gmra.mrb[0].mxu0 %v1397
        %v1436 = vpop.f32.mrb[0].mxu0
        %v1437 = vadd.f32 0.0, %v1436
        %v1438 = vpop.f32.mrb[0].mxu0
        %v1439 = vpop.f32.mrb[0].mxu0
        %v1440 = vpop.f32.mrb[0].mxu0
        %1441 = vdwg.mxu0
        %v1442 = vpack.c.bf16 %v1437, %v1437
        %v1443 = vld [vmem:[%s4 + $0x20] sm:$0xf]
        %v1444 = vld [vmem:[%s4 + $0x24] sm:$0xf]
        %v1445 = vld [vmem:[%s4 + $0x28] sm:$0xf]
        %v1446 = vld [vmem:[%s4 + $0x2c] sm:$0xf]
        %v1451 = vunpack.c.l.b16 %v1443
        %v1452 = vunpack.c.l.b16 %v1444
        %v1453 = vunpack.c.l.b16 %v1445
        %v1454 = vunpack.c.l.b16 %v1446
        %v1455 = vpack.c.b16 %v1452, %v1451
        %v1456 = vpack.c.b16 %v1454, %v1453
        %v1460 = vsel %vm951, %v1442, 0
        %1462 = vmatprep.subr.bf16.mxu0 0
        %1463 = vmatpush1.bf16.msra.mxu0 %v1455
        %1464 = vmatprep.subr.bf16.mxu0 0
        %1465 = vmatpush1.bf16.msra.mxu0 %v1456
        %1466 = vmatprep.subr.bf16.mxu0 0
        %1467 = vmatpush1.bf16.msra.mxu0 0
        %1468 = vmatprep.subr.bf16.mxu0 0
        %1469 = vmatpush1.bf16.msra.mxu0 0
        %1470 = vmatprep.subr.bf16.mxu0 0
        %1471 = vmatpush1.bf16.msra.mxu0 0
        %1472 = vmatprep.subr.bf16.mxu0 0
        %1473 = vmatpush1.bf16.msra.mxu0 0
        %1474 = vmatprep.subr.bf16.mxu0 0
        %1475 = vmatpush1.bf16.msra.mxu0 0
        %1476 = vmatprep.subr.bf16.mxu0 0
        %1477 = vmatpush1.bf16.msra.mxu0 0
        %1478 = vmatprep.subr.bf16.mxu0 0
        %1479 = vmatpush1.bf16.msra.mxu0 0
        %1480 = vmatprep.subr.bf16.mxu0 0
        %1481 = vmatpush1.bf16.msra.mxu0 0
        %1482 = vmatprep.subr.bf16.mxu0 0
        %1483 = vmatpush1.bf16.msra.mxu0 0
        %1484 = vmatprep.subr.bf16.mxu0 0
        %1485 = vmatpush1.bf16.msra.mxu0 0
        %1486 = vmatprep.subr.bf16.mxu0 0
        %1487 = vmatpush1.bf16.msra.mxu0 0
        %1488 = vmatprep.subr.bf16.mxu0 0
        %1489 = vmatpush1.bf16.msra.mxu0 0
        %1490 = vmatprep.subr.bf16.mxu0 0
        %1491 = vmatpush1.bf16.msra.mxu0 0
        %1492 = vmatprep.subr.bf16.mxu0 0
        %1493 = vmatpush1.bf16.msra.mxu0 0
        %1494 = vmatprep.mubr.bf16.mxu0 0
        %1495 = vmatmul.mubr.bf16.gmra.mrb[0].mxu0 %v1460
        %v1496 = vpop.f32.mrb[0].mxu0
        %v1497 = vadd.f32 0.0, %v1496
        %v1498 = vpop.f32.mrb[0].mxu0
        %v1499 = vpop.f32.mrb[0].mxu0
        %v1500 = vpop.f32.mrb[0].mxu0
        %1501 = vdwg.mxu0
        %v1502 = vadd.f32 %v1330, %v1497
        %v1503 = vld [vmem:[#allocation2 + $0x30] sm:$0xff]
        %v1504 = vld [vmem:[#allocation2 + $0x38] sm:$0xff]
        %1505 = vrot.lane.b32.xlu0 %v996, 32
        %v1506 = vpop.permute.xlu0 %1505
        %v1508 = vsel %vm951, %v1506, 0
        %1510 = vmatprep.subr.bf16.mxu0 0
        %1511 = vmatpush1.bf16.msra.mxu0 %v1503
        %1512 = vmatprep.subr.bf16.mxu0 0
        %1513 = vmatpush1.bf16.msra.mxu0 %v1504
        %1514 = vmatprep.subr.bf16.mxu0 0
        %1515 = vmatpush1.bf16.msra.mxu0 0
        %1516 = vmatprep.subr.bf16.mxu0 0
        %1517 = vmatpush1.bf16.msra.mxu0 0
        %1518 = vmatprep.subr.bf16.mxu0 0
        %1519 = vmatpush1.bf16.msra.mxu0 0
        %1520 = vmatprep.subr.bf16.mxu0 0
        %1521 = vmatpush1.bf16.msra.mxu0 0
        %1522 = vmatprep.subr.bf16.mxu0 0
        %1523 = vmatpush1.bf16.msra.mxu0 0
        %1524 = vmatprep.subr.bf16.mxu0 0
        %1525 = vmatpush1.bf16.msra.mxu0 0
        %1526 = vmatprep.subr.bf16.mxu0 0
        %1527 = vmatpush1.bf16.msra.mxu0 0
        %1528 = vmatprep.subr.bf16.mxu0 0
        %1529 = vmatpush1.bf16.msra.mxu0 0
        %1530 = vmatprep.subr.bf16.mxu0 0
        %1531 = vmatpush1.bf16.msra.mxu0 0
        %1532 = vmatprep.subr.bf16.mxu0 0
        %1533 = vmatpush1.bf16.msra.mxu0 0
        %1534 = vmatprep.subr.bf16.mxu0 0
        %1535 = vmatpush1.bf16.msra.mxu0 0
        %1536 = vmatprep.subr.bf16.mxu0 0
        %1537 = vmatpush1.bf16.msra.mxu0 0
        %1538 = vmatprep.subr.bf16.mxu0 0
        %1539 = vmatpush1.bf16.msra.mxu0 0
        %1540 = vmatprep.subr.bf16.mxu0 0
        %1541 = vmatpush1.bf16.msra.mxu0 0
        %1542 = vmatprep.mubr.bf16.mxu0 0
        %1543 = vmatmul.mubr.bf16.gmra.mrb[0].mxu0 %v1508
        %v1544 = vpop.f32.mrb[0].mxu0
        %v1545 = vadd.f32 0.0, %v1544
        %v1546 = vpop.f32.mrb[0].mxu0
        %v1547 = vpop.f32.mrb[0].mxu0
        %v1548 = vpop.f32.mrb[0].mxu0
        %1549 = vdwg.mxu0
        %v1550 = vsel %vm1044, %v1545, -inf
        %1551 = vmax.xlane.f32.xlu0 %v1550
        %v1552 = vpop.xlane.xlu0 %1551
        %v1553 = vsub.f32 %v1545, %v1552
        %v1554 = vmul.f32 %v1553, 1.442695
        %v1555 = vpow.pop %v1554
        %v1556 = vsel %vm1044, %v1555, 0.0
        %1557 = vadd.xlane.f32.xlu0 %v1556
        %v1558 = vpop.xlane.xlu0 %1557
        %v1559 = vrcp.pop %v1558
        %v1560 = vmul.f32 %v1555, %v1559
        %v1561 = vpack.c.bf16 %v1560, %v1560
        %1562 = vrot.lane.b32.xlu0 %v1171, 32
        %v1563 = vpop.permute.xlu0 %1562
        %v1565 = vsel %vm1044, %v1561, 0
        %v1568 = vsel %vm1060, %v1563, 0
        %1570 = vmatprep.subr.bf16.mxu0 0
        %1571 = vmatpush1.bf16.msra.mxu0 %v1568
        %1572 = vmatprep.subr.bf16.mxu0 0
        %1573 = vmatpush1.bf16.msra.mxu0 0
        %1574 = vmatprep.subr.bf16.mxu0 0
        %1575 = vmatpush1.bf16.msra.mxu0 0
        %1576 = vmatprep.subr.bf16.mxu0 0
        %1577 = vmatpush1.bf16.msra.mxu0 0
        %1578 = vmatprep.subr.bf16.mxu0 0
        %1579 = vmatpush1.bf16.msra.mxu0 0
        %1580 = vmatprep.subr.bf16.mxu0 0
        %1581 = vmatpush1.bf16.msra.mxu0 0
        %1582 = vmatprep.subr.bf16.mxu0 0
        %1583 = vmatpush1.bf16.msra.mxu0 0
        %1584 = vmatprep.subr.bf16.mxu0 0
        %1585 = vmatpush1.bf16.msra.mxu0 0
        %1586 = vmatprep.subr.bf16.mxu0 0
        %1587 = vmatpush1.bf16.msra.mxu0 0
        %1588 = vmatprep.subr.bf16.mxu0 0
        %1589 = vmatpush1.bf16.msra.mxu0 0
        %1590 = vmatprep.subr.bf16.mxu0 0
        %1591 = vmatpush1.bf16.msra.mxu0 0
        %1592 = vmatprep.subr.bf16.mxu0 0
        %1593 = vmatpush1.bf16.msra.mxu0 0
        %1594 = vmatprep.subr.bf16.mxu0 0
        %1595 = vmatpush1.bf16.msra.mxu0 0
        %1596 = vmatprep.subr.bf16.mxu0 0
        %1597 = vmatpush1.bf16.msra.mxu0 0
        %1598 = vmatprep.subr.bf16.mxu0 0
        %1599 = vmatpush1.bf16.msra.mxu0 0
        %1600 = vmatprep.subr.bf16.mxu0 0
        %1601 = vmatpush1.bf16.msra.mxu0 0
        %1602 = vmatprep.mubr.bf16.mxu0 0
        %1603 = vmatmul.mubr.bf16.gmra.mrb[0].mxu0 %v1565
        %v1604 = vpop.f32.mrb[0].mxu0
        %v1605 = vadd.f32 0.0, %v1604
        %v1606 = vpop.f32.mrb[0].mxu0
        %v1607 = vpop.f32.mrb[0].mxu0
        %v1608 = vpop.f32.mrb[0].mxu0
        %1609 = vdwg.mxu0
        %v1610 = vpack.c.bf16 %v1605, %v1605
        %v1611 = vld [vmem:[%s4 + $0x30] sm:$0xf]
        %v1612 = vld [vmem:[%s4 + $0x34] sm:$0xf]
        %v1613 = vld [vmem:[%s4 + $0x38] sm:$0xf]
        %v1614 = vld [vmem:[%s4 + $0x3c] sm:$0xf]
        %v1619 = vunpack.c.l.b16 %v1611
        %v1620 = vunpack.c.l.b16 %v1612
        %v1621 = vunpack.c.l.b16 %v1613
        %v1622 = vunpack.c.l.b16 %v1614
        %v1623 = vpack.c.b16 %v1620, %v1619
        %v1624 = vpack.c.b16 %v1622, %v1621
        %v1628 = vsel %vm951, %v1610, 0
        %1630 = vmatprep.subr.bf16.mxu0 0
        %1631 = vmatpush1.bf16.msra.mxu0 %v1623
        %1632 = vmatprep.subr.bf16.mxu0 0
        %1633 = vmatpush1.bf16.msra.mxu0 %v1624
        %1634 = vmatprep.subr.bf16.mxu0 0
        %1635 = vmatpush1.bf16.msra.mxu0 0
        %1636 = vmatprep.subr.bf16.mxu0 0
        %1637 = vmatpush1.bf16.msra.mxu0 0
        %1638 = vmatprep.subr.bf16.mxu0 0
        %1639 = vmatpush1.bf16.msra.mxu0 0
        %1640 = vmatprep.subr.bf16.mxu0 0
        %1641 = vmatpush1.bf16.msra.mxu0 0
        %1642 = vmatprep.subr.bf16.mxu0 0
        %1643 = vmatpush1.bf16.msra.mxu0 0
        %1644 = vmatprep.subr.bf16.mxu0 0
        %1645 = vmatpush1.bf16.msra.mxu0 0
        %1646 = vmatprep.subr.bf16.mxu0 0
        %1647 = vmatpush1.bf16.msra.mxu0 0
        %1648 = vmatprep.subr.bf16.mxu0 0
        %1649 = vmatpush1.bf16.msra.mxu0 0
        %1650 = vmatprep.subr.bf16.mxu0 0
        %1651 = vmatpush1.bf16.msra.mxu0 0
        %1652 = vmatprep.subr.bf16.mxu0 0
        %1653 = vmatpush1.bf16.msra.mxu0 0
        %1654 = vmatprep.subr.bf16.mxu0 0
        %1655 = vmatpush1.bf16.msra.mxu0 0
        %1656 = vmatprep.subr.bf16.mxu0 0
        %1657 = vmatpush1.bf16.msra.mxu0 0
        %1658 = vmatprep.subr.bf16.mxu0 0
        %1659 = vmatpush1.bf16.msra.mxu0 0
        %1660 = vmatprep.subr.bf16.mxu0 0
        %1661 = vmatpush1.bf16.msra.mxu0 0
        %1662 = vmatprep.mubr.bf16.mxu0 0
        %1663 = vmatmul.mubr.bf16.gmra.mrb[0].mxu0 %v1628
        %v1664 = vpop.f32.mrb[0].mxu0
        %v1665 = vadd.f32 0.0, %v1664
        %v1666 = vpop.f32.mrb[0].mxu0
        %v1667 = vpop.f32.mrb[0].mxu0
        %v1668 = vpop.f32.mrb[0].mxu0
        %1669 = vdwg.mxu0
        %v1670 = vadd.f32 %v1502, %v1665
        %v1671 = vld [vmem:[#allocation2 + $0x40] sm:$0xff]
        %v1672 = vld [vmem:[#allocation2 + $0x48] sm:$0xff]
        %v1673 = vld [vmem:[#allocation3 + $0x4] sm:$0xf]
        %v1675 = vsel %vm951, %v997, 0
        %1677 = vmatprep.subr.bf16.mxu0 0
        %1678 = vmatpush1.bf16.msra.mxu0 %v1671
        %1679 = vmatprep.subr.bf16.mxu0 0
        %1680 = vmatpush1.bf16.msra.mxu0 %v1672
        %1681 = vmatprep.subr.bf16.mxu0 0
        %1682 = vmatpush1.bf16.msra.mxu0 0
        %1683 = vmatprep.subr.bf16.mxu0 0
        %1684 = vmatpush1.bf16.msra.mxu0 0
        %1685 = vmatprep.subr.bf16.mxu0 0
        %1686 = vmatpush1.bf16.msra.mxu0 0
        %1687 = vmatprep.subr.bf16.mxu0 0
        %1688 = vmatpush1.bf16.msra.mxu0 0
        %1689 = vmatprep.subr.bf16.mxu0 0
        %1690 = vmatpush1.bf16.msra.mxu0 0
        %1691 = vmatprep.subr.bf16.mxu0 0
        %1692 = vmatpush1.bf16.msra.mxu0 0
        %1693 = vmatprep.subr.bf16.mxu0 0
        %1694 = vmatpush1.bf16.msra.mxu0 0
        %1695 = vmatprep.subr.bf16.mxu0 0
        %1696 = vmatpush1.bf16.msra.mxu0 0
        %1697 = vmatprep.subr.bf16.mxu0 0
        %1698 = vmatpush1.bf16.msra.mxu0 0
        %1699 = vmatprep.subr.bf16.mxu0 0
        %1700 = vmatpush1.bf16.msra.mxu0 0
        %1701 = vmatprep.subr.bf16.mxu0 0
        %1702 = vmatpush1.bf16.msra.mxu0 0
        %1703 = vmatprep.subr.bf16.mxu0 0
        %1704 = vmatpush1.bf16.msra.mxu0 0
        %1705 = vmatprep.subr.bf16.mxu0 0
        %1706 = vmatpush1.bf16.msra.mxu0 0
        %1707 = vmatprep.subr.bf16.mxu0 0
        %1708 = vmatpush1.bf16.msra.mxu0 0
        %1709 = vmatprep.mubr.bf16.mxu0 0
        %1710 = vmatmul.mubr.bf16.gmra.mrb[0].mxu0 %v1675
        %v1711 = vpop.f32.mrb[0].mxu0
        %v1712 = vadd.f32 0.0, %v1711
        %v1713 = vpop.f32.mrb[0].mxu0
        %v1714 = vpop.f32.mrb[0].mxu0
        %v1715 = vpop.f32.mrb[0].mxu0
        %1716 = vdwg.mxu0
        %v1717 = vsel %vm1044, %v1712, -inf
        %1718 = vmax.xlane.f32.xlu0 %v1717
        %v1719 = vpop.xlane.xlu0 %1718
        %v1720 = vsub.f32 %v1712, %v1719
        %v1721 = vmul.f32 %v1720, 1.442695
        %v1722 = vpow.pop %v1721
        %v1723 = vsel %vm1044, %v1722, 0.0
        %1724 = vadd.xlane.f32.xlu0 %v1723
        %v1725 = vpop.xlane.xlu0 %1724
        %v1726 = vrcp.pop %v1725
        %v1727 = vmul.f32 %v1722, %v1726
        %v1728 = vpack.c.bf16 %v1727, %v1727
        %v1730 = vsel %vm1044, %v1728, 0
        %v1733 = vsel %vm1060, %v1673, 0
        %1735 = vmatprep.subr.bf16.mxu0 0
        %1736 = vmatpush1.bf16.msra.mxu0 %v1733
        %1737 = vmatprep.subr.bf16.mxu0 0
        %1738 = vmatpush1.bf16.msra.mxu0 0
        %1739 = vmatprep.subr.bf16.mxu0 0
        %1740 = vmatpush1.bf16.msra.mxu0 0
        %1741 = vmatprep.subr.bf16.mxu0 0
        %1742 = vmatpush1.bf16.msra.mxu0 0
        %1743 = vmatprep.subr.bf16.mxu0 0
        %1744 = vmatpush1.bf16.msra.mxu0 0
        %1745 = vmatprep.subr.bf16.mxu0 0
        %1746 = vmatpush1.bf16.msra.mxu0 0
        %1747 = vmatprep.subr.bf16.mxu0 0
        %1748 = vmatpush1.bf16.msra.mxu0 0
        %1749 = vmatprep.subr.bf16.mxu0 0
        %1750 = vmatpush1.bf16.msra.mxu0 0
        %1751 = vmatprep.subr.bf16.mxu0 0
        %1752 = vmatpush1.bf16.msra.mxu0 0
        %1753 = vmatprep.subr.bf16.mxu0 0
        %1754 = vmatpush1.bf16.msra.mxu0 0
        %1755 = vmatprep.subr.bf16.mxu0 0
        %1756 = vmatpush1.bf16.msra.mxu0 0
        %1757 = vmatprep.subr.bf16.mxu0 0
        %1758 = vmatpush1.bf16.msra.mxu0 0
        %1759 = vmatprep.subr.bf16.mxu0 0
        %1760 = vmatpush1.bf16.msra.mxu0 0
        %1761 = vmatprep.subr.bf16.mxu0 0
        %1762 = vmatpush1.bf16.msra.mxu0 0
        %1763 = vmatprep.subr.bf16.mxu0 0
        %1764 = vmatpush1.bf16.msra.mxu0 0
        %1765 = vmatprep.subr.bf16.mxu0 0
        %1766 = vmatpush1.bf16.msra.mxu0 0
        %1767 = vmatprep.mubr.bf16.mxu0 0
        %1768 = vmatmul.mubr.bf16.gmra.mrb[0].mxu0 %v1730
        %v1769 = vpop.f32.mrb[0].mxu0
        %v1770 = vadd.f32 0.0, %v1769
        %v1771 = vpop.f32.mrb[0].mxu0
        %v1772 = vpop.f32.mrb[0].mxu0
        %v1773 = vpop.f32.mrb[0].mxu0
        %1774 = vdwg.mxu0
        %v1775 = vpack.c.bf16 %v1770, %v1770
        %v1776 = vld [vmem:[%s4 + $0x40] sm:$0xf]
        %v1777 = vld [vmem:[%s4 + $0x44] sm:$0xf]
        %v1778 = vld [vmem:[%s4 + $0x48] sm:$0xf]
        %v1779 = vld [vmem:[%s4 + $0x4c] sm:$0xf]
        %v1784 = vunpack.c.l.b16 %v1776
        %v1785 = vunpack.c.l.b16 %v1777
        %v1786 = vunpack.c.l.b16 %v1778
        %v1787 = vunpack.c.l.b16 %v1779
        %v1788 = vpack.c.b16 %v1785, %v1784
        %v1789 = vpack.c.b16 %v1787, %v1786
        %v1793 = vsel %vm951, %v1775, 0
        %1795 = vmatprep.subr.bf16.mxu0 0
        %1796 = vmatpush1.bf16.msra.mxu0 %v1788
        %1797 = vmatprep.subr.bf16.mxu0 0
        %1798 = vmatpush1.bf16.msra.mxu0 %v1789
        %1799 = vmatprep.subr.bf16.mxu0 0
        %1800 = vmatpush1.bf16.msra.mxu0 0
        %1801 = vmatprep.subr.bf16.mxu0 0
        %1802 = vmatpush1.bf16.msra.mxu0 0
        %1803 = vmatprep.subr.bf16.mxu0 0
        %1804 = vmatpush1.bf16.msra.mxu0 0
        %1805 = vmatprep.subr.bf16.mxu0 0
        %1806 = vmatpush1.bf16.msra.mxu0 0
        %1807 = vmatprep.subr.bf16.mxu0 0
        %1808 = vmatpush1.bf16.msra.mxu0 0
        %1809 = vmatprep.subr.bf16.mxu0 0
        %1810 = vmatpush1.bf16.msra.mxu0 0
        %1811 = vmatprep.subr.bf16.mxu0 0
        %1812 = vmatpush1.bf16.msra.mxu0 0
        %1813 = vmatprep.subr.bf16.mxu0 0
        %1814 = vmatpush1.bf16.msra.mxu0 0
        %1815 = vmatprep.subr.bf16.mxu0 0
        %1816 = vmatpush1.bf16.msra.mxu0 0
        %1817 = vmatprep.subr.bf16.mxu0 0
        %1818 = vmatpush1.bf16.msra.mxu0 0
        %1819 = vmatprep.subr.bf16.mxu0 0
        %1820 = vmatpush1.bf16.msra.mxu0 0
        %1821 = vmatprep.subr.bf16.mxu0 0
        %1822 = vmatpush1.bf16.msra.mxu0 0
        %1823 = vmatprep.subr.bf16.mxu0 0
        %1824 = vmatpush1.bf16.msra.mxu0 0
        %1825 = vmatprep.subr.bf16.mxu0 0
        %1826 = vmatpush1.bf16.msra.mxu0 0
        %1827 = vmatprep.mubr.bf16.mxu0 0
        %1828 = vmatmul.mubr.bf16.gmra.mrb[0].mxu0 %v1793
        %v1829 = vpop.f32.mrb[0].mxu0
        %v1830 = vadd.f32 0.0, %v1829
        %v1831 = vpop.f32.mrb[0].mxu0
        %v1832 = vpop.f32.mrb[0].mxu0
        %v1833 = vpop.f32.mrb[0].mxu0
        %1834 = vdwg.mxu0
        %v1835 = vadd.f32 %v1670, %v1830
        %v1836 = vld [vmem:[#allocation2 + $0x50] sm:$0xff]
        %v1837 = vld [vmem:[#allocation2 + $0x58] sm:$0xff]
        %1839 = vrot.lane.b32.xlu0 %v997, 96
        %v1840 = vpop.permute.xlu0 %1839
        %v1842 = vsel %vm951, %v1840, 0
        %1844 = vmatprep.subr.bf16.mxu0 0
        %1845 = vmatpush1.bf16.msra.mxu0 %v1836
        %1846 = vmatprep.subr.bf16.mxu0 0
        %1847 = vmatpush1.bf16.msra.mxu0 %v1837
        %1848 = vmatprep.subr.bf16.mxu0 0
        %1849 = vmatpush1.bf16.msra.mxu0 0
        %1850 = vmatprep.subr.bf16.mxu0 0
        %1851 = vmatpush1.bf16.msra.mxu0 0
        %1852 = vmatprep.subr.bf16.mxu0 0
        %1853 = vmatpush1.bf16.msra.mxu0 0
        %1854 = vmatprep.subr.bf16.mxu0 0
        %1855 = vmatpush1.bf16.msra.mxu0 0
        %1856 = vmatprep.subr.bf16.mxu0 0
        %1857 = vmatpush1.bf16.msra.mxu0 0
        %1858 = vmatprep.subr.bf16.mxu0 0
        %1859 = vmatpush1.bf16.msra.mxu0 0
        %1860 = vmatprep.subr.bf16.mxu0 0
        %1861 = vmatpush1.bf16.msra.mxu0 0
        %1862 = vmatprep.subr.bf16.mxu0 0
        %1863 = vmatpush1.bf16.msra.mxu0 0
        %1864 = vmatprep.subr.bf16.mxu0 0
        %1865 = vmatpush1.bf16.msra.mxu0 0
        %1866 = vmatprep.subr.bf16.mxu0 0
        %1867 = vmatpush1.bf16.msra.mxu0 0
        %1868 = vmatprep.subr.bf16.mxu0 0
        %1869 = vmatpush1.bf16.msra.mxu0 0
        %1870 = vmatprep.subr.bf16.mxu0 0
        %1871 = vmatpush1.bf16.msra.mxu0 0
        %1872 = vmatprep.subr.bf16.mxu0 0
        %1873 = vmatpush1.bf16.msra.mxu0 0
        %1874 = vmatprep.subr.bf16.mxu0 0
        %1875 = vmatpush1.bf16.msra.mxu0 0
        %1876 = vmatprep.mubr.bf16.mxu0 0
        %1877 = vmatmul.mubr.bf16.gmra.mrb[0].mxu0 %v1842
        %v1878 = vpop.f32.mrb[0].mxu0
        %v1879 = vadd.f32 0.0, %v1878
        %v1880 = vpop.f32.mrb[0].mxu0
        %v1881 = vpop.f32.mrb[0].mxu0
        %v1882 = vpop.f32.mrb[0].mxu0
        %1883 = vdwg.mxu0
        %v1884 = vsel %vm1044, %v1879, -inf
        %1885 = vmax.xlane.f32.xlu0 %v1884
        %v1886 = vpop.xlane.xlu0 %1885
        %v1887 = vsub.f32 %v1879, %v1886
        %v1888 = vmul.f32 %v1887, 1.442695
        %v1889 = vpow.pop %v1888
        %v1890 = vsel %vm1044, %v1889, 0.0
        %1891 = vadd.xlane.f32.xlu0 %v1890
        %v1892 = vpop.xlane.xlu0 %1891
        %v1893 = vrcp.pop %v1892
        %v1894 = vmul.f32 %v1889, %v1893
        %v1895 = vpack.c.bf16 %v1894, %v1894
        %v1897 = vunpack.c.l.b16 %v1673
        %v1898 = vpack.c.b16 %v1897, %v1897
        %1899 = vrot.lane.b32.xlu0 %v1898, 96
        %v1900 = vpop.permute.xlu0 %1899
        %v1902 = vsel %vm1044, %v1895, 0
        %v1905 = vsel %vm1060, %v1900, 0
        %1907 = vmatprep.subr.bf16.mxu0 0
        %1908 = vmatpush1.bf16.msra.mxu0 %v1905
        %1909 = vmatprep.subr.bf16.mxu0 0
        %1910 = vmatpush1.bf16.msra.mxu0 0
        %1911 = vmatprep.subr.bf16.mxu0 0
        %1912 = vmatpush1.bf16.msra.mxu0 0
        %1913 = vmatprep.subr.bf16.mxu0 0
        %1914 = vmatpush1.bf16.msra.mxu0 0
        %1915 = vmatprep.subr.bf16.mxu0 0
        %1916 = vmatpush1.bf16.msra.mxu0 0
        %1917 = vmatprep.subr.bf16.mxu0 0
        %1918 = vmatpush1.bf16.msra.mxu0 0
        %1919 = vmatprep.subr.bf16.mxu0 0
        %1920 = vmatpush1.bf16.msra.mxu0 0
        %1921 = vmatprep.subr.bf16.mxu0 0
        %1922 = vmatpush1.bf16.msra.mxu0 0
        %1923 = vmatprep.subr.bf16.mxu0 0
        %1924 = vmatpush1.bf16.msra.mxu0 0
        %1925 = vmatprep.subr.bf16.mxu0 0
        %1926 = vmatpush1.bf16.msra.mxu0 0
        %1927 = vmatprep.subr.bf16.mxu0 0
        %1928 = vmatpush1.bf16.msra.mxu0 0
        %1929 = vmatprep.subr.bf16.mxu0 0
        %1930 = vmatpush1.bf16.msra.mxu0 0
        %1931 = vmatprep.subr.bf16.mxu0 0
        %1932 = vmatpush1.bf16.msra.mxu0 0
        %1933 = vmatprep.subr.bf16.mxu0 0
        %1934 = vmatpush1.bf16.msra.mxu0 0
        %1935 = vmatprep.subr.bf16.mxu0 0
        %1936 = vmatpush1.bf16.msra.mxu0 0
        %1937 = vmatprep.subr.bf16.mxu0 0
        %1938 = vmatpush1.bf16.msra.mxu0 0
        %1939 = vmatprep.mubr.bf16.mxu0 0
        %1940 = vmatmul.mubr.bf16.gmra.mrb[0].mxu0 %v1902
        %v1941 = vpop.f32.mrb[0].mxu0
        %v1942 = vadd.f32 0.0, %v1941
        %v1943 = vpop.f32.mrb[0].mxu0
        %v1944 = vpop.f32.mrb[0].mxu0
        %v1945 = vpop.f32.mrb[0].mxu0
        %1946 = vdwg.mxu0
        %v1947 = vpack.c.bf16 %v1942, %v1942
        %v1948 = vld [vmem:[%s4 + $0x50] sm:$0xf]
        %v1949 = vld [vmem:[%s4 + $0x54] sm:$0xf]
        %v1950 = vld [vmem:[%s4 + $0x58] sm:$0xf]
        %v1951 = vld [vmem:[%s4 + $0x5c] sm:$0xf]
        %v1956 = vunpack.c.l.b16 %v1948
        %v1957 = vunpack.c.l.b16 %v1949
        %v1958 = vunpack.c.l.b16 %v1950
        %v1959 = vunpack.c.l.b16 %v1951
        %v1960 = vpack.c.b16 %v1957, %v1956
        %v1961 = vpack.c.b16 %v1959, %v1958
        %v1965 = vsel %vm951, %v1947, 0
        %1967 = vmatprep.subr.bf16.mxu0 0
        %1968 = vmatpush1.bf16.msra.mxu0 %v1960
        %1969 = vmatprep.subr.bf16.mxu0 0
        %1970 = vmatpush1.bf16.msra.mxu0 %v1961
        %1971 = vmatprep.subr.bf16.mxu0 0
        %1972 = vmatpush1.bf16.msra.mxu0 0
        %1973 = vmatprep.subr.bf16.mxu0 0
        %1974 = vmatpush1.bf16.msra.mxu0 0
        %1975 = vmatprep.subr.bf16.mxu0 0
        %1976 = vmatpush1.bf16.msra.mxu0 0
        %1977 = vmatprep.subr.bf16.mxu0 0
        %1978 = vmatpush1.bf16.msra.mxu0 0
        %1979 = vmatprep.subr.bf16.mxu0 0
        %1980 = vmatpush1.bf16.msra.mxu0 0
        %1981 = vmatprep.subr.bf16.mxu0 0
        %1982 = vmatpush1.bf16.msra.mxu0 0
        %1983 = vmatprep.subr.bf16.mxu0 0
        %1984 = vmatpush1.bf16.msra.mxu0 0
        %1985 = vmatprep.subr.bf16.mxu0 0
        %1986 = vmatpush1.bf16.msra.mxu0 0
        %1987 = vmatprep.subr.bf16.mxu0 0
        %1988 = vmatpush1.bf16.msra.mxu0 0
        %1989 = vmatprep.subr.bf16.mxu0 0
        %1990 = vmatpush1.bf16.msra.mxu0 0
        %1991 = vmatprep.subr.bf16.mxu0 0
        %1992 = vmatpush1.bf16.msra.mxu0 0
        %1993 = vmatprep.subr.bf16.mxu0 0
        %1994 = vmatpush1.bf16.msra.mxu0 0
        %1995 = vmatprep.subr.bf16.mxu0 0
        %1996 = vmatpush1.bf16.msra.mxu0 0
        %1997 = vmatprep.subr.bf16.mxu0 0
        %1998 = vmatpush1.bf16.msra.mxu0 0
        %1999 = vmatprep.mubr.bf16.mxu0 0
        %2000 = vmatmul.mubr.bf16.gmra.mrb[0].mxu0 %v1965
        %v2001 = vpop.f32.mrb[0].mxu0
        %v2002 = vadd.f32 0.0, %v2001
        %v2003 = vpop.f32.mrb[0].mxu0
        %v2004 = vpop.f32.mrb[0].mxu0
        %v2005 = vpop.f32.mrb[0].mxu0
        %2006 = vdwg.mxu0
        %v2007 = vadd.f32 %v1835, %v2002
        %v2008 = vld [vmem:[#allocation2 + $0x60] sm:$0xff]
        %v2009 = vld [vmem:[#allocation2 + $0x68] sm:$0xff]
        %2010 = vrot.lane.b32.xlu0 %v997, 64
        %v2011 = vpop.permute.xlu0 %2010
        %v2013 = vsel %vm951, %v2011, 0
        %2015 = vmatprep.subr.bf16.mxu0 0
        %2016 = vmatpush1.bf16.msra.mxu0 %v2008
        %2017 = vmatprep.subr.bf16.mxu0 0
        %2018 = vmatpush1.bf16.msra.mxu0 %v2009
        %2019 = vmatprep.subr.bf16.mxu0 0
        %2020 = vmatpush1.bf16.msra.mxu0 0
        %2021 = vmatprep.subr.bf16.mxu0 0
        %2022 = vmatpush1.bf16.msra.mxu0 0
        %2023 = vmatprep.subr.bf16.mxu0 0
        %2024 = vmatpush1.bf16.msra.mxu0 0
        %2025 = vmatprep.subr.bf16.mxu0 0
        %2026 = vmatpush1.bf16.msra.mxu0 0
        %2027 = vmatprep.subr.bf16.mxu0 0
        %2028 = vmatpush1.bf16.msra.mxu0 0
        %2029 = vmatprep.subr.bf16.mxu0 0
        %2030 = vmatpush1.bf16.msra.mxu0 0
        %2031 = vmatprep.subr.bf16.mxu0 0
        %2032 = vmatpush1.bf16.msra.mxu0 0
        %2033 = vmatprep.subr.bf16.mxu0 0
        %2034 = vmatpush1.bf16.msra.mxu0 0
        %2035 = vmatprep.subr.bf16.mxu0 0
        %2036 = vmatpush1.bf16.msra.mxu0 0
        %2037 = vmatprep.subr.bf16.mxu0 0
        %2038 = vmatpush1.bf16.msra.mxu0 0
        %2039 = vmatprep.subr.bf16.mxu0 0
        %2040 = vmatpush1.bf16.msra.mxu0 0
        %2041 = vmatprep.subr.bf16.mxu0 0
        %2042 = vmatpush1.bf16.msra.mxu0 0
        %2043 = vmatprep.subr.bf16.mxu0 0
        %2044 = vmatpush1.bf16.msra.mxu0 0
        %2045 = vmatprep.subr.bf16.mxu0 0
        %2046 = vmatpush1.bf16.msra.mxu0 0
        %2047 = vmatprep.mubr.bf16.mxu0 0
        %2048 = vmatmul.mubr.bf16.gmra.mrb[0].mxu0 %v2013
        %v2049 = vpop.f32.mrb[0].mxu0
        %v2050 = vadd.f32 0.0, %v2049
        %v2051 = vpop.f32.mrb[0].mxu0
        %v2052 = vpop.f32.mrb[0].mxu0
        %v2053 = vpop.f32.mrb[0].mxu0
        %2054 = vdwg.mxu0
        %v2055 = vsel %vm1044, %v2050, -inf
        %2056 = vmax.xlane.f32.xlu0 %v2055
        %v2057 = vpop.xlane.xlu0 %2056
        %v2058 = vsub.f32 %v2050, %v2057
        %v2059 = vmul.f32 %v2058, 1.442695
        %v2060 = vpow.pop %v2059
        %v2061 = vsel %vm1044, %v2060, 0.0
        %2062 = vadd.xlane.f32.xlu0 %v2061
        %v2063 = vpop.xlane.xlu0 %2062
        %v2064 = vrcp.pop %v2063
        %v2065 = vmul.f32 %v2060, %v2064
        %v2066 = vpack.c.bf16 %v2065, %v2065
        %2067 = vrot.lane.b32.xlu0 %v1898, 64
        %v2068 = vpop.permute.xlu0 %2067
        %v2070 = vsel %vm1044, %v2066, 0
        %v2073 = vsel %vm1060, %v2068, 0
        %2075 = vmatprep.subr.bf16.mxu0 0
        %2076 = vmatpush1.bf16.msra.mxu0 %v2073
        %2077 = vmatprep.subr.bf16.mxu0 0
        %2078 = vmatpush1.bf16.msra.mxu0 0
        %2079 = vmatprep.subr.bf16.mxu0 0
        %2080 = vmatpush1.bf16.msra.mxu0 0
        %2081 = vmatprep.subr.bf16.mxu0 0
        %2082 = vmatpush1.bf16.msra.mxu0 0
        %2083 = vmatprep.subr.bf16.mxu0 0
        %2084 = vmatpush1.bf16.msra.mxu0 0
        %2085 = vmatprep.subr.bf16.mxu0 0
        %2086 = vmatpush1.bf16.msra.mxu0 0
        %2087 = vmatprep.subr.bf16.mxu0 0
        %2088 = vmatpush1.bf16.msra.mxu0 0
        %2089 = vmatprep.subr.bf16.mxu0 0
        %2090 = vmatpush1.bf16.msra.mxu0 0
        %2091 = vmatprep.subr.bf16.mxu0 0
        %2092 = vmatpush1.bf16.msra.mxu0 0
        %2093 = vmatprep.subr.bf16.mxu0 0
        %2094 = vmatpush1.bf16.msra.mxu0 0
        %2095 = vmatprep.subr.bf16.mxu0 0
        %2096 = vmatpush1.bf16.msra.mxu0 0
        %2097 = vmatprep.subr.bf16.mxu0 0
        %2098 = vmatpush1.bf16.msra.mxu0 0
        %2099 = vmatprep.subr.bf16.mxu0 0
        %2100 = vmatpush1.bf16.msra.mxu0 0
        %2101 = vmatprep.subr.bf16.mxu0 0
        %2102 = vmatpush1.bf16.msra.mxu0 0
        %2103 = vmatprep.subr.bf16.mxu0 0
        %2104 = vmatpush1.bf16.msra.mxu0 0
        %2105 = vmatprep.subr.bf16.mxu0 0
        %2106 = vmatpush1.bf16.msra.mxu0 0
        %2107 = vmatprep.mubr.bf16.mxu0 0
        %2108 = vmatmul.mubr.bf16.gmra.mrb[0].mxu0 %v2070
        %v2109 = vpop.f32.mrb[0].mxu0
        %v2110 = vadd.f32 0.0, %v2109
        %v2111 = vpop.f32.mrb[0].mxu0
        %v2112 = vpop.f32.mrb[0].mxu0
        %v2113 = vpop.f32.mrb[0].mxu0
        %2114 = vdwg.mxu0
        %v2115 = vpack.c.bf16 %v2110, %v2110
        %v2116 = vld [vmem:[%s4 + $0x60] sm:$0xf]
        %v2117 = vld [vmem:[%s4 + $0x64] sm:$0xf]
        %v2118 = vld [vmem:[%s4 + $0x68] sm:$0xf]
        %v2119 = vld [vmem:[%s4 + $0x6c] sm:$0xf]
        %v2124 = vunpack.c.l.b16 %v2116
        %v2125 = vunpack.c.l.b16 %v2117
        %v2126 = vunpack.c.l.b16 %v2118
        %v2127 = vunpack.c.l.b16 %v2119
        %v2128 = vpack.c.b16 %v2125, %v2124
        %v2129 = vpack.c.b16 %v2127, %v2126
        %v2133 = vsel %vm951, %v2115, 0
        %2135 = vmatprep.subr.bf16.mxu0 0
        %2136 = vmatpush1.bf16.msra.mxu0 %v2128
        %2137 = vmatprep.subr.bf16.mxu0 0
        %2138 = vmatpush1.bf16.msra.mxu0 %v2129
        %2139 = vmatprep.subr.bf16.mxu0 0
        %2140 = vmatpush1.bf16.msra.mxu0 0
        %2141 = vmatprep.subr.bf16.mxu0 0
        %2142 = vmatpush1.bf16.msra.mxu0 0
        %2143 = vmatprep.subr.bf16.mxu0 0
        %2144 = vmatpush1.bf16.msra.mxu0 0
        %2145 = vmatprep.subr.bf16.mxu0 0
        %2146 = vmatpush1.bf16.msra.mxu0 0
        %2147 = vmatprep.subr.bf16.mxu0 0
        %2148 = vmatpush1.bf16.msra.mxu0 0
        %2149 = vmatprep.subr.bf16.mxu0 0
        %2150 = vmatpush1.bf16.msra.mxu0 0
        %2151 = vmatprep.subr.bf16.mxu0 0
        %2152 = vmatpush1.bf16.msra.mxu0 0
        %2153 = vmatprep.subr.bf16.mxu0 0
        %2154 = vmatpush1.bf16.msra.mxu0 0
        %2155 = vmatprep.subr.bf16.mxu0 0
        %2156 = vmatpush1.bf16.msra.mxu0 0
        %2157 = vmatprep.subr.bf16.mxu0 0
        %2158 = vmatpush1.bf16.msra.mxu0 0
        %2159 = vmatprep.subr.bf16.mxu0 0
        %2160 = vmatpush1.bf16.msra.mxu0 0
        %2161 = vmatprep.subr.bf16.mxu0 0
        %2162 = vmatpush1.bf16.msra.mxu0 0
        %2163 = vmatprep.subr.bf16.mxu0 0
        %2164 = vmatpush1.bf16.msra.mxu0 0
        %2165 = vmatprep.subr.bf16.mxu0 0
        %2166 = vmatpush1.bf16.msra.mxu0 0
        %2167 = vmatprep.mubr.bf16.mxu0 0
        %2168 = vmatmul.mubr.bf16.gmra.mrb[0].mxu0 %v2133
        %v2169 = vpop.f32.mrb[0].mxu0
        %v2170 = vadd.f32 0.0, %v2169
        %v2171 = vpop.f32.mrb[0].mxu0
        %v2172 = vpop.f32.mrb[0].mxu0
        %v2173 = vpop.f32.mrb[0].mxu0
        %2174 = vdwg.mxu0
        %v2175 = vadd.f32 %v2007, %v2170
        %v2176 = vld [vmem:[#allocation2 + $0x70] sm:$0xff]
        %v2177 = vld [vmem:[#allocation2 + $0x78] sm:$0xff]
        %2178 = vrot.lane.b32.xlu0 %v997, 32
        %v2179 = vpop.permute.xlu0 %2178
        %v2181 = vsel %vm951, %v2179, 0
        %2183 = vmatprep.subr.bf16.mxu0 0
        %2184 = vmatpush1.bf16.msra.mxu0 %v2176
        %2185 = vmatprep.subr.bf16.mxu0 0
        %2186 = vmatpush1.bf16.msra.mxu0 %v2177
        %2187 = vmatprep.subr.bf16.mxu0 0
        %2188 = vmatpush1.bf16.msra.mxu0 0
        %2189 = vmatprep.subr.bf16.mxu0 0
        %2190 = vmatpush1.bf16.msra.mxu0 0
        %2191 = vmatprep.subr.bf16.mxu0 0
        %2192 = vmatpush1.bf16.msra.mxu0 0
        %2193 = vmatprep.subr.bf16.mxu0 0
        %2194 = vmatpush1.bf16.msra.mxu0 0
        %2195 = vmatprep.subr.bf16.mxu0 0
        %2196 = vmatpush1.bf16.msra.mxu0 0
        %2197 = vmatprep.subr.bf16.mxu0 0
        %2198 = vmatpush1.bf16.msra.mxu0 0
        %2199 = vmatprep.subr.bf16.mxu0 0
        %2200 = vmatpush1.bf16.msra.mxu0 0
        %2201 = vmatprep.subr.bf16.mxu0 0
        %2202 = vmatpush1.bf16.msra.mxu0 0
        %2203 = vmatprep.subr.bf16.mxu0 0
        %2204 = vmatpush1.bf16.msra.mxu0 0
        %2205 = vmatprep.subr.bf16.mxu0 0
        %2206 = vmatpush1.bf16.msra.mxu0 0
        %2207 = vmatprep.subr.bf16.mxu0 0
        %2208 = vmatpush1.bf16.msra.mxu0 0
        %2209 = vmatprep.subr.bf16.mxu0 0
        %2210 = vmatpush1.bf16.msra.mxu0 0
        %2211 = vmatprep.subr.bf16.mxu0 0
        %2212 = vmatpush1.bf16.msra.mxu0 0
        %2213 = vmatprep.subr.bf16.mxu0 0
        %2214 = vmatpush1.bf16.msra.mxu0 0
        %2215 = vmatprep.mubr.bf16.mxu0 0
        %2216 = vmatmul.mubr.bf16.gmra.mrb[0].mxu0 %v2181
        %v2217 = vpop.f32.mrb[0].mxu0
        %v2218 = vadd.f32 0.0, %v2217
        %v2219 = vpop.f32.mrb[0].mxu0
        %v2220 = vpop.f32.mrb[0].mxu0
        %v2221 = vpop.f32.mrb[0].mxu0
        %2222 = vdwg.mxu0
        %v2223 = vsel %vm1044, %v2218, -inf
        %2224 = vmax.xlane.f32.xlu0 %v2223
        %v2225 = vpop.xlane.xlu0 %2224
        %v2226 = vsub.f32 %v2218, %v2225
        %v2227 = vmul.f32 %v2226, 1.442695
        %v2228 = vpow.pop %v2227
        %v2229 = vsel %vm1044, %v2228, 0.0
        %2230 = vadd.xlane.f32.xlu0 %v2229
        %v2231 = vpop.xlane.xlu0 %2230
        %v2232 = vrcp.pop %v2231
        %v2233 = vmul.f32 %v2228, %v2232
        %v2234 = vpack.c.bf16 %v2233, %v2233
        %2235 = vrot.lane.b32.xlu0 %v1898, 32
        %v2236 = vpop.permute.xlu0 %2235
        %v2238 = vsel %vm1044, %v2234, 0
        %v2241 = vsel %vm1060, %v2236, 0
        %2243 = vmatprep.subr.bf16.mxu0 0
        %2244 = vmatpush1.bf16.msra.mxu0 %v2241
        %2245 = vmatprep.subr.bf16.mxu0 0
        %2246 = vmatpush1.bf16.msra.mxu0 0
        %2247 = vmatprep.subr.bf16.mxu0 0
        %2248 = vmatpush1.bf16.msra.mxu0 0
        %2249 = vmatprep.subr.bf16.mxu0 0
        %2250 = vmatpush1.bf16.msra.mxu0 0
        %2251 = vmatprep.subr.bf16.mxu0 0
        %2252 = vmatpush1.bf16.msra.mxu0 0
        %2253 = vmatprep.subr.bf16.mxu0 0
        %2254 = vmatpush1.bf16.msra.mxu0 0
        %2255 = vmatprep.subr.bf16.mxu0 0
        %2256 = vmatpush1.bf16.msra.mxu0 0
        %2257 = vmatprep.subr.bf16.mxu0 0
        %2258 = vmatpush1.bf16.msra.mxu0 0
        %2259 = vmatprep.subr.bf16.mxu0 0
        %2260 = vmatpush1.bf16.msra.mxu0 0
        %2261 = vmatprep.subr.bf16.mxu0 0
        %2262 = vmatpush1.bf16.msra.mxu0 0
        %2263 = vmatprep.subr.bf16.mxu0 0
        %2264 = vmatpush1.bf16.msra.mxu0 0
        %2265 = vmatprep.subr.bf16.mxu0 0
        %2266 = vmatpush1.bf16.msra.mxu0 0
        %2267 = vmatprep.subr.bf16.mxu0 0
        %2268 = vmatpush1.bf16.msra.mxu0 0
        %2269 = vmatprep.subr.bf16.mxu0 0
        %2270 = vmatpush1.bf16.msra.mxu0 0
        %2271 = vmatprep.subr.bf16.mxu0 0
        %2272 = vmatpush1.bf16.msra.mxu0 0
        %2273 = vmatprep.subr.bf16.mxu0 0
        %2274 = vmatpush1.bf16.msra.mxu0 0
        %2275 = vmatprep.mubr.bf16.mxu0 0
        %2276 = vmatmul.mubr.bf16.gmra.mrb[0].mxu0 %v2238
        %v2277 = vpop.f32.mrb[0].mxu0
        %v2278 = vadd.f32 0.0, %v2277
        %v2279 = vpop.f32.mrb[0].mxu0
        %v2280 = vpop.f32.mrb[0].mxu0
        %v2281 = vpop.f32.mrb[0].mxu0
        %2282 = vdwg.mxu0
        %v2283 = vpack.c.bf16 %v2278, %v2278
        %v2284 = vld [vmem:[%s4 + $0x70] sm:$0xf]
        %v2285 = vld [vmem:[%s4 + $0x74] sm:$0xf]
        %v2286 = vld [vmem:[%s4 + $0x78] sm:$0xf]
        %v2287 = vld [vmem:[%s4 + $0x7c] sm:$0xf]
        %v2292 = vunpack.c.l.b16 %v2284
        %v2293 = vunpack.c.l.b16 %v2285
        %v2294 = vunpack.c.l.b16 %v2286
        %v2295 = vunpack.c.l.b16 %v2287
        %v2296 = vpack.c.b16 %v2293, %v2292
        %v2297 = vpack.c.b16 %v2295, %v2294
        %v2301 = vsel %vm951, %v2283, 0
        %2303 = vmatprep.subr.bf16.mxu0 0
        %2304 = vmatpush1.bf16.msra.mxu0 %v2296
        %2305 = vmatprep.subr.bf16.mxu0 0
        %2306 = vmatpush1.bf16.msra.mxu0 %v2297
        %2307 = vmatprep.subr.bf16.mxu0 0
        %2308 = vmatpush1.bf16.msra.mxu0 0
        %2309 = vmatprep.subr.bf16.mxu0 0
        %2310 = vmatpush1.bf16.msra.mxu0 0
        %2311 = vmatprep.subr.bf16.mxu0 0
        %2312 = vmatpush1.bf16.msra.mxu0 0
        %2313 = vmatprep.subr.bf16.mxu0 0
        %2314 = vmatpush1.bf16.msra.mxu0 0
        %2315 = vmatprep.subr.bf16.mxu0 0
        %2316 = vmatpush1.bf16.msra.mxu0 0
        %2317 = vmatprep.subr.bf16.mxu0 0
        %2318 = vmatpush1.bf16.msra.mxu0 0
        %2319 = vmatprep.subr.bf16.mxu0 0
        %2320 = vmatpush1.bf16.msra.mxu0 0
        %2321 = vmatprep.subr.bf16.mxu0 0
        %2322 = vmatpush1.bf16.msra.mxu0 0
        %2323 = vmatprep.subr.bf16.mxu0 0
        %2324 = vmatpush1.bf16.msra.mxu0 0
        %2325 = vmatprep.subr.bf16.mxu0 0
        %2326 = vmatpush1.bf16.msra.mxu0 0
        %2327 = vmatprep.subr.bf16.mxu0 0
        %2328 = vmatpush1.bf16.msra.mxu0 0
        %2329 = vmatprep.subr.bf16.mxu0 0
        %2330 = vmatpush1.bf16.msra.mxu0 0
        %2331 = vmatprep.subr.bf16.mxu0 0
        %2332 = vmatpush1.bf16.msra.mxu0 0
        %2333 = vmatprep.subr.bf16.mxu0 0
        %2334 = vmatpush1.bf16.msra.mxu0 0
        %2335 = vmatprep.mubr.bf16.mxu0 0
        %2336 = vmatmul.mubr.bf16.gmra.mrb[0].mxu0 %v2301
        %v2337 = vpop.f32.mrb[0].mxu0
        %v2338 = vadd.f32 0.0, %v2337
        %v2339 = vpop.f32.mrb[0].mxu0
        %v2340 = vpop.f32.mrb[0].mxu0
        %v2341 = vpop.f32.mrb[0].mxu0
        %2342 = vdwg.mxu0
        %v2343 = vadd.f32 %v2175, %v2338
        %v2345 = vlaneseq
        %v2346 = vshrl.u32 %v2345, 7
        %v2347 = vsub.s32 0, %v2346
        %v2348 = vrot.slane %v919, %v2347
        %v2350 = vadd.f32 %v2343, %v2348
        %v2351 = vadd.f32 %v2350, %v918
        %v2352 = vsel %vm951, %v2351, 0.0
        %2353 = vadd.xlane.f32.xlu0 %v2352
        %v2354 = vpop.xlane.xlu0 %2353
        %v2355 = vrcp.pop 32.0
        %v2356 = vmul.f32 %v2354, %v2355
        %v2357 = vsub.f32 %v2351, %v2356
        %v2358 = vmul.f32 %v2357, %v2357
        %v2359 = vsel %vm951, %v2358, 0.0
        %2360 = vadd.xlane.f32.xlu0 %v2359
        %v2361 = vpop.xlane.xlu0 %2360
        %v2362 = vmul.f32 %v2361, %v2355
        %v2363 = vadd.f32 %v2362, 1e-05
        %v2364 = vrsqrt.pop %v2363
        %v2365 = vmul.f32 %v2357, %v2364
        %v2367 = vlaneseq
        %v2368 = vshrl.u32 %v2367, 7
        %v2369 = vsub.s32 0, %v2368
        %v2370 = vrot.slane %v920, %v2369
        %v2372 = vmul.f32 %v2365, %v2370
        %v2374 = vlaneseq
        %v2375 = vshrl.u32 %v2374, 7
        %v2376 = vsub.s32 0, %v2375
        %v2377 = vrot.slane %v921, %v2376
        %v2379 = vadd.f32 %v2372, %v2377
        %v2380 = vpack.c.bf16 %v2379, %v2379
        %v2381 = vld [vmem:[%s8] sm:$0xf]
        %v2382 = vld [vmem:[%s8 + $0x4] sm:$0xf]
        %v2383 = vld [vmem:[%s8 + $0x8] sm:$0xf]
        %v2384 = vld [vmem:[%s8 + $0xc] sm:$0xf]
        %v2386 = vlaneseq
        %v2387 = vshrl.u32 %v2386, 7
        %v2388 = vsub.s32 0, %v2387
        %v2389 = vrot.slane %v922, %v2388
        %v2395 = vunpack.c.l.b16 %v2381
        %v2396 = vunpack.c.l.b16 %v2382
        %v2397 = vunpack.c.l.b16 %v2383
        %v2398 = vunpack.c.l.b16 %v2384
        %v2399 = vpack.c.b16 %v2396, %v2395
        %v2400 = vpack.c.b16 %v2398, %v2397
        %v2404 = vsel %vm951, %v2380, 0
        %2406 = vmatprep.subr.bf16.mxu0 0
        %2407 = vmatpush1.bf16.msra.mxu0 %v2399
        %2408 = vmatprep.subr.bf16.mxu0 0
        %2409 = vmatpush1.bf16.msra.mxu0 %v2400
        %2410 = vmatprep.subr.bf16.mxu0 0
        %2411 = vmatpush1.bf16.msra.mxu0 0
        %2412 = vmatprep.subr.bf16.mxu0 0
        %2413 = vmatpush1.bf16.msra.mxu0 0
        %2414 = vmatprep.subr.bf16.mxu0 0
        %2415 = vmatpush1.bf16.msra.mxu0 0
        %2416 = vmatprep.subr.bf16.mxu0 0
        %2417 = vmatpush1.bf16.msra.mxu0 0
        %2418 = vmatprep.subr.bf16.mxu0 0
        %2419 = vmatpush1.bf16.msra.mxu0 0
        %2420 = vmatprep.subr.bf16.mxu0 0
        %2421 = vmatpush1.bf16.msra.mxu0 0
        %2422 = vmatprep.subr.bf16.mxu0 0
        %2423 = vmatpush1.bf16.msra.mxu0 0
        %2424 = vmatprep.subr.bf16.mxu0 0
        %2425 = vmatpush1.bf16.msra.mxu0 0
        %2426 = vmatprep.subr.bf16.mxu0 0
        %2427 = vmatpush1.bf16.msra.mxu0 0
        %2428 = vmatprep.subr.bf16.mxu0 0
        %2429 = vmatpush1.bf16.msra.mxu0 0
        %2430 = vmatprep.subr.bf16.mxu0 0
        %2431 = vmatpush1.bf16.msra.mxu0 0
        %2432 = vmatprep.subr.bf16.mxu0 0
        %2433 = vmatpush1.bf16.msra.mxu0 0
        %2434 = vmatprep.subr.bf16.mxu0 0
        %2435 = vmatpush1.bf16.msra.mxu0 0
        %2436 = vmatprep.subr.bf16.mxu0 0
        %2437 = vmatpush1.bf16.msra.mxu0 0
        %2438 = vmatprep.mubr.bf16.mxu0 0
        %2439 = vmatmul.mubr.bf16.gmra.mrb[0].mxu0 %v2404
        %v2440 = vpop.f32.mrb[0].mxu0
        %v2441 = vadd.f32 %v2389, %v2440
        %v2442 = vpop.f32.mrb[0].mxu0
        %v2443 = vpop.f32.mrb[0].mxu0
        %v2444 = vpop.f32.mrb[0].mxu0
        %2445 = vdwg.mxu0
        %v2446 = vmax.f32 %v2441, 0.0
        %v2447 = vpack.c.bf16 %v2446, %v2446
        %v2448 = vld [vmem:[%s10] sm:$0xf]
        %v2449 = vld [vmem:[%s10 + $0x4] sm:$0xf]
        %v2450 = vld [vmem:[%s10 + $0x8] sm:$0xf]
        %v2451 = vld [vmem:[%s10 + $0xc] sm:$0xf]
        %v2452 = vld [vmem:[%s10 + $0x10] sm:$0xf]
        %v2453 = vld [vmem:[%s10 + $0x14] sm:$0xf]
        %v2454 = vld [vmem:[%s10 + $0x18] sm:$0xf]
        %v2455 = vld [vmem:[%s10 + $0x1c] sm:$0xf]
        %v2456 = vld [vmem:[%s10 + $0x20] sm:$0xf]
        %v2457 = vld [vmem:[%s10 + $0x24] sm:$0xf]
        %v2458 = vld [vmem:[%s10 + $0x28] sm:$0xf]
        %v2459 = vld [vmem:[%s10 + $0x2c] sm:$0xf]
        %v2460 = vld [vmem:[%s10 + $0x30] sm:$0xf]
        %v2461 = vld [vmem:[%s10 + $0x34] sm:$0xf]
        %v2462 = vld [vmem:[%s10 + $0x38] sm:$0xf]
        %v2463 = vld [vmem:[%s10 + $0x3c] sm:$0xf]
        %v2465 = vlaneseq
        %v2466 = vshrl.u32 %v2465, 7
        %v2467 = vsub.s32 0, %v2466
        %v2468 = vrot.slane %v923, %v2467
        %v2486 = vunpack.c.l.b16 %v2448
        %v2487 = vunpack.c.l.b16 %v2449
        %v2488 = vunpack.c.l.b16 %v2450
        %v2489 = vunpack.c.l.b16 %v2451
        %v2490 = vunpack.c.l.b16 %v2452
        %v2491 = vunpack.c.l.b16 %v2453
        %v2492 = vunpack.c.l.b16 %v2454
        %v2493 = vunpack.c.l.b16 %v2455
        %v2494 = vunpack.c.l.b16 %v2456
        %v2495 = vunpack.c.l.b16 %v2457
        %v2496 = vunpack.c.l.b16 %v2458
        %v2497 = vunpack.c.l.b16 %v2459
        %v2498 = vunpack.c.l.b16 %v2460
        %v2499 = vunpack.c.l.b16 %v2461
        %v2500 = vunpack.c.l.b16 %v2462
        %v2501 = vunpack.c.l.b16 %v2463
        %v2502 = vpack.c.b16 %v2487, %v2486
        %v2503 = vpack.c.b16 %v2489, %v2488
        %v2504 = vpack.c.b16 %v2491, %v2490
        %v2505 = vpack.c.b16 %v2493, %v2492
        %v2506 = vpack.c.b16 %v2495, %v2494
        %v2507 = vpack.c.b16 %v2497, %v2496
        %v2508 = vpack.c.b16 %v2499, %v2498
        %v2509 = vpack.c.b16 %v2501, %v2500
        %2518 = vmatprep.subr.bf16.mxu0 0
        %2519 = vmatpush1.bf16.msra.mxu0 %v2502
        %2520 = vmatprep.subr.bf16.mxu0 0
        %2521 = vmatpush1.bf16.msra.mxu0 %v2503
        %2522 = vmatprep.subr.bf16.mxu0 0
        %2523 = vmatpush1.bf16.msra.mxu0 %v2504
        %2524 = vmatprep.subr.bf16.mxu0 0
        %2525 = vmatpush1.bf16.msra.mxu0 %v2505
        %2526 = vmatprep.subr.bf16.mxu0 0
        %2527 = vmatpush1.bf16.msra.mxu0 %v2506
        %2528 = vmatprep.subr.bf16.mxu0 0
        %2529 = vmatpush1.bf16.msra.mxu0 %v2507
        %2530 = vmatprep.subr.bf16.mxu0 0
        %2531 = vmatpush1.bf16.msra.mxu0 %v2508
        %2532 = vmatprep.subr.bf16.mxu0 0
        %2533 = vmatpush1.bf16.msra.mxu0 %v2509
        %2534 = vmatprep.subr.bf16.mxu0 0
        %2535 = vmatpush1.bf16.msra.mxu0 0
        %2536 = vmatprep.subr.bf16.mxu0 0
        %2537 = vmatpush1.bf16.msra.mxu0 0
        %2538 = vmatprep.subr.bf16.mxu0 0
        %2539 = vmatpush1.bf16.msra.mxu0 0
        %2540 = vmatprep.subr.bf16.mxu0 0
        %2541 = vmatpush1.bf16.msra.mxu0 0
        %2542 = vmatprep.subr.bf16.mxu0 0
        %2543 = vmatpush1.bf16.msra.mxu0 0
        %2544 = vmatprep.subr.bf16.mxu0 0
        %2545 = vmatpush1.bf16.msra.mxu0 0
        %2546 = vmatprep.subr.bf16.mxu0 0
        %2547 = vmatpush1.bf16.msra.mxu0 0
        %2548 = vmatprep.subr.bf16.mxu0 0
        %2549 = vmatpush1.bf16.msra.mxu0 0
        %2550 = vmatprep.mubr.bf16.mxu0 0
        %2551 = vmatmul.mubr.bf16.gmra.mrb[0].mxu0 %v2447
        %v2552 = vpop.f32.mrb[0].mxu0
        %v2553 = vadd.f32 %v2468, %v2552
        %v2554 = vpop.f32.mrb[0].mxu0
        %v2555 = vpop.f32.mrb[0].mxu0
        %v2556 = vpop.f32.mrb[0].mxu0
        %2557 = vdwg.mxu0
        %v2558 = vadd.f32 %v2553, %v2379
        %v2559 = vsel %vm951, %v2558, 0.0
        %2560 = vadd.xlane.f32.xlu0 %v2559
        %v2561 = vpop.xlane.xlu0 %2560
        %v2562 = vmul.f32 %v2561, %v2355
        %v2563 = vsub.f32 %v2558, %v2562
        %v2564 = vmul.f32 %v2563, %v2563
        %v2565 = vsel %vm951, %v2564, 0.0
        %2566 = vadd.xlane.f32.xlu0 %v2565
        %v2567 = vpop.xlane.xlu0 %2566
        %v2568 = vmul.f32 %v2567, %v2355
        %v2569 = vadd.f32 %v2568, 1e-05
        %v2570 = vrsqrt.pop %v2569
        %v2571 = vmul.f32 %v2563, %v2570
        %v2573 = vlaneseq
        %v2574 = vshrl.u32 %v2573, 7
        %v2575 = vsub.s32 0, %v2574
        %v2576 = vrot.slane %v924, %v2575
        %v2578 = vmul.f32 %v2571, %v2576
        %v2580 = vlaneseq
        %v2581 = vshrl.u32 %v2580, 7
        %v2582 = vsub.s32 0, %v2581
        %v2583 = vrot.slane %v925, %v2582
        %v2585 = vadd.f32 %v2578, %v2583
        %2586 = vst.msk [vmem:[%s472] sm:$0xff] %vm951, %v2585
        %s2587 = sand.u32 %s349, 1
        %s2588 = scalar_lea.sflag [#allocation5], %s2587
        %s2589 = sand.u32 %s349, 1
        %s2590 = smul.addr %s2589, 8
        %s2591 = scalar_lea.vmem [#allocation4], %s2590
        // Predicated region
        $region81: #{tpu_custom_call.1} parent=75 // pred_check
          %p2592 = pneg %p359
        $region82: #{tpu_custom_call.1} parent=75 // pred_check_branch
          %2594 = sbr.rel (%p2592) target = $region84
        $region83: #{tpu_custom_call.1} parent=75 // pred_region
          %s2596 = ssub.s32 128, 128
          %2597 = vsyncadd %s2588, %s2596
          %s2598 = sadd.s32 %s33, %s32
          %s2599 = smul.addr %s2598, 128
          %s2600 = scalar_lea.hbm %s14, %s2599
          %s2602 = sshll.u32 %s2591, 4
          %s2603 = int_to_ptr.vmem [resolvable:$true] %s2602
          %2605 = dma.vmem_to_hbm [thread:$0]  %s2603, 128, %s2600, %s2588
        $region84: #{tpu_custom_call.1} parent=75 // pred_fallthru
          _
      $region76: #{tpu_custom_call.1} parent=5 // pred_fallthru
        _
      %p2606 = scmp.le.s32.totalorder 2, %s23
      // Predicated region
      $region85: #{tpu_custom_call.1} parent=5 // pred_check
        %p2607 = pneg %p2606
      $region86: #{tpu_custom_call.1} parent=5 // pred_check_branch
        %2609 = sbr.rel (%p2607) target = $region88
      $region87: #{tpu_custom_call.1} parent=5 // pred_region
        %s2610 = ssub.s32 %s23, 2
        // Predicated region
        $region89: #{tpu_custom_call.1} parent=87 // pred_check
          %p2611 = pneg %p365
        $region90: #{tpu_custom_call.1} parent=87 // pred_check_branch
          %2613 = sbr.rel (%p2611) target = $region92
        $region91: #{tpu_custom_call.1} parent=87 // pred_region
          %s2614 = sand.u32 %s350, 1
          %s2615 = scalar_lea.sflag [#allocation5], %s2614
          %s2616 = sand.u32 %s350, 1
          %s2617 = smul.addr %s2616, 8
          %s2618 = scalar_lea.vmem [#allocation4], %s2617
          %2619 = dma.done %s2615, 128
        $region92: #{tpu_custom_call.1} parent=87 // pred_fallthru
          _
      $region88: #{tpu_custom_call.1} parent=5 // pred_fallthru
        _
    $region6: #{tpu_custom_call.1} parent=1 // loop_footer
      %s27 = sadd.s32 1, %s23
    $region7: #{tpu_custom_call.1} parent=1 // loop_footer_branch
      %22 = sbr.rel target = $region3
    $region8: #{tpu_custom_call.1} parent=1 // loop_exit
      _
    %2620 = vsyncpa [#allocation5], 1
    %s2621 = scalar_lea.sflag [#allocation5], 1
    %2622 = vsyncpa %s2621, 1

</llo_original>
